<compile_context>
chip_gen: v7x
topology: tpu7x:2x2x1
jax: 0.10.0
libtpu: 0.0.40
codegen_flags: <defaults>
</compile_context>

<pallas_src>
import numpy as np
import jax
import jax.numpy as jnp
from jax import lax
from jax.experimental import pallas as pl
from jax.experimental.pallas import tpu as pltpu

# ----------------------------- config -------------------------------------
B, C, H, W = 2, 4, 16, 16
HW = H * W                     # 256
BHW = B * HW                   # 512 lanes (4 full lane tiles)
HIDDEN = 32

T_STEPS = 100                  # diffusion T
EXPECTED_TIMESTEPS = 10        # DDIM steps
BETA_1 = 1e-4
BETA_T = 2e-2
ALPHA_GAP = 1e-3
ALPHA_1 = 1.0 - BETA_1
ALPHA_T = 1.0 - BETA_T
ETA = 0.0                      # default eta -> no sigma noise


def _make_ddim_timesteps():
    # DDIMSampler.Method.uniform
    c = T_STEPS // EXPECTED_TIMESTEPS
    ts = np.asarray(list(range(0, T_STEPS, c)))
    prev = np.concatenate([[0], ts[:-1]])
    return np.flip(ts).copy(), np.flip(prev).copy()


FLIP_TS, FLIP_PREV_TS = _make_ddim_timesteps()
N_STEPS = len(FLIP_TS)


def _time_embedding_np(t, dim):
    half = dim // 2
    freqs = np.exp(-np.log(10000.0) * np.arange(half, dtype=np.float64) / half)
    args = float(t) * freqs
    return np.concatenate([np.sin(args), np.cos(args)]).astype(np.float32)


# Precomputed (N_STEPS, HIDDEN) time-embedding table (timesteps are static).
TEMB_TABLE = np.stack([_time_embedding_np(int(t), HIDDEN) for t in FLIP_TS], axis=0)


# ----------------------------- fused kernel --------------------------------
def _fused_ddim_kernel(x_ref, w1_ref, bias_ref, w2_ref, b2_ref,
                       a_ref, bc_ref, o_ref):
    # Everything is resident in VMEM; the whole DDIM loop runs in one
    # kernel invocation with x_t as the fori_loop carry.
    w1 = w1_ref[...]          # (HIDDEN, C)
    w2 = w2_ref[...]          # (C, HIDDEN)
    b2 = b2_ref[...]          # (C, 1)

    def step_fn(i, x):        # x: (C, B*HW)
        # Synthetic epsilon model (stand-in for self.model): per-pixel MLP
        # over channels + additive time embedding.
        h = jnp.dot(w1, x, preferred_element_type=jnp.float32)   # (HIDDEN, B*HW)
        h = jnp.tanh(h + bias_ref[i])                            # bias: (HIDDEN, 1)
        e = jnp.dot(w2, h, preferred_element_type=jnp.float32) + b2   # (C, B*HW)
        # Folded DDIM update (eta == 0):  x_new = A[i] * x + Bc[i] * e
        return a_ref[i] * x + bc_ref[i] * e

    x_0 = lax.fori_loop(0, N_STEPS, step_fn, x_ref[...], unroll=True)
    o_ref[...] = jnp.clip(x_0, -1.0, 1.0)                        # final torch.clip


# ----------------------------- wrapper --------------------------------------
@jax.jit
def structure_ddim_sample(x_T, struct, params):
    """Forward pass of StructureDDIMSampler (initial_state=None, eta=0 path)."""
    w1, b1, w2, b2 = params

    # ---- te.map_ranges: per-batch min/max normalization of struct ---------
    s = struct.astype(jnp.float32)
    mn = jnp.min(s, axis=(1, 2, 3), keepdims=True)
    mx = jnp.max(s, axis=(1, 2, 3), keepdims=True)
    norm = (s - mn) / (mx - mn + 1e-12) * ALPHA_GAP               # exact divide
    start = (ALPHA_1 - ALPHA_GAP) + norm                          # (B,C,H,W)
    stop = (ALPHA_T - ALPHA_GAP) + norm

    # ---- per-element linspace alphas -> inclusive cumprod alpha_bar -------
    frac = jnp.arange(T_STEPS, dtype=jnp.float32) / float(T_STEPS - 1)   # (T,)
    alphas = start[None] + (stop - start)[None] * frac[:, None, None, None, None]
    alpha_bar = jnp.cumprod(alphas, axis=0)                       # (T,B,C,H,W)
    a_t = alpha_bar[jnp.asarray(FLIP_TS, dtype=jnp.int32)]        # (N_STEPS,B,C,H,W)
    a_p = alpha_bar[jnp.asarray(FLIP_PREV_TS, dtype=jnp.int32)]

    # ---- folded per-step DDIM coefficients:  x_new = A*x + Bc*e -----------
    coef_a = jnp.sqrt(a_p / a_t)
    coef_b = jnp.sqrt(1.0 - a_p) - coef_a * jnp.sqrt(1.0 - a_t)

    def to_kernel_layout(v):  # (N_STEPS,B,C,H,W) -> (N_STEPS, C, B*HW)
        return jnp.transpose(v, (0, 2, 1, 3, 4)).reshape(N_STEPS, C, BHW)

    a_tab = to_kernel_layout(coef_a)
    bc_tab = to_kernel_layout(coef_b)

    # NCHW -> lane-dense (C, B*H*W) working layout (cheap XLA transpose).
    x0 = jnp.transpose(x_T.astype(jnp.float32), (1, 0, 2, 3)).reshape(C, BHW)

    # Dense (non-block-diagonal) epsilon-model weights.
    w1m = w1.T.astype(jnp.float32)                                # (HIDDEN, C)
    w2m = w2.T.astype(jnp.float32)                                # (C, HIDDEN)
    bias_tab = (jnp.asarray(TEMB_TABLE) + b1.reshape(1, HIDDEN)
                ).reshape(N_STEPS, HIDDEN, 1)
    b2m = b2.reshape(C, 1)

    out = pl.pallas_call(
        _fused_ddim_kernel,
        out_shape=jax.ShapeDtypeStruct((C, BHW), jnp.float32),
        grid=(1,),
        in_specs=[
            pl.BlockSpec((C, BHW), lambda i: (0, 0)),             # x_T
            pl.BlockSpec((HIDDEN, C), lambda i: (0, 0)),          # w1
            pl.BlockSpec((N_STEPS, HIDDEN, 1), lambda i: (0, 0, 0)),  # per-step bias
            pl.BlockSpec((C, HIDDEN), lambda i: (0, 0)),          # w2
            pl.BlockSpec((C, 1), lambda i: (0, 0)),               # b2
            pl.BlockSpec((N_STEPS, C, BHW), lambda i: (0, 0, 0)),  # A coeffs
            pl.BlockSpec((N_STEPS, C, BHW), lambda i: (0, 0, 0)),  # Bc coeffs
        ],
        out_specs=pl.BlockSpec((C, BHW), lambda i: (0, 0)),
        compiler_params=pltpu.CompilerParams(
            dimension_semantics=("arbitrary",)),
    )(x0, w1m, bias_tab, w2m, b2m, a_tab, bc_tab)

    # Back to NCHW.
    return jnp.transpose(out.reshape(C, B, H, W), (1, 0, 2, 3))


def init_params(key):
    k1, k2 = jax.random.split(key)
    w1 = jax.random.normal(k1, (C, HIDDEN), jnp.float32) * 0.2
    b1 = jnp.zeros((1, HIDDEN), jnp.float32)
    w2 = jax.random.normal(k2, (HIDDEN, C), jnp.float32) * 0.2
    b2 = jnp.zeros((1, C), jnp.float32)
    return (w1, b1, w2, b2)


if __name__ == "__main__":
    key = jax.random.PRNGKey(0)
    k_x, k_s, k_p = jax.random.split(key, 3)
    x_T = jax.random.normal(k_x, (B, C, H, W), jnp.float32)
    struct = jax.random.uniform(k_s, (B, C, H, W), jnp.float32)
    params = init_params(k_p)

    x_0 = structure_ddim_sample(x_T, struct, params)
    jax.block_until_ready(x_0)

    assert x_0.shape == (B, C, H, W)
    assert bool(jnp.all(jnp.isfinite(x_0)))
    assert bool(jnp.all(x_0 <= 1.0)) and bool(jnp.all(x_0 >= -1.0))
    print("KERNEL_OK")
</pallas_src>

<mosaic_0001>
module attributes {stable_mosaic.version = 11 : i64} {
  func.func @_fused_ddim_kernel(%arg0: i32, %arg1: memref<4x512xf32, #tpu.memory_space<vmem>>, %arg2: memref<32x4xf32, #tpu.memory_space<vmem>>, %arg3: memref<10x32x1xf32, #tpu.memory_space<vmem>>, %arg4: memref<4x32xf32, #tpu.memory_space<vmem>>, %arg5: memref<4x1xf32, #tpu.memory_space<vmem>>, %arg6: memref<10x4x512xf32, #tpu.memory_space<vmem>>, %arg7: memref<10x4x512xf32, #tpu.memory_space<vmem>>, %arg8: memref<4x512xf32, #tpu.memory_space<vmem>>) attributes {dimension_semantics = [#tpu.dimension_semantics<arbitrary>], iteration_bounds = array<i64: 1>, scalar_prefetch = 0 : i64, scratch_operands = 0 : i64, tpu.core_type = #tpu.core_type<tc>, window_params = [{pipeline_mode = #tpu.pipeline_mode<synchronous>, transform_indices = @transform_0, window_bounds = array<i64: 4, 512>}, {pipeline_mode = #tpu.pipeline_mode<synchronous>, transform_indices = @transform_1, window_bounds = array<i64: 32, 4>}, {pipeline_mode = #tpu.pipeline_mode<synchronous>, transform_indices = @transform_2, window_bounds = array<i64: 10, 32, 1>}, {pipeline_mode = #tpu.pipeline_mode<synchronous>, transform_indices = @transform_3, window_bounds = array<i64: 4, 32>}, {pipeline_mode = #tpu.pipeline_mode<synchronous>, transform_indices = @transform_4, window_bounds = array<i64: 4, 1>}, {pipeline_mode = #tpu.pipeline_mode<synchronous>, transform_indices = @transform_5, window_bounds = array<i64: 10, 4, 512>}, {pipeline_mode = #tpu.pipeline_mode<synchronous>, transform_indices = @transform_6, window_bounds = array<i64: 10, 4, 512>}, {pipeline_mode = #tpu.pipeline_mode<synchronous>, transform_indices = @transform_7, window_bounds = array<i64: 4, 512>}]} {
    %c0 = arith.constant 0 : index
    %c0_0 = arith.constant 0 : index
    %0 = vector.load %arg2[%c0, %c0_0] : memref<32x4xf32, #tpu.memory_space<vmem>>, vector<32x4xf32>
    %c0_1 = arith.constant 0 : index
    %c0_2 = arith.constant 0 : index
    %1 = vector.load %arg4[%c0_1, %c0_2] : memref<4x32xf32, #tpu.memory_space<vmem>>, vector<4x32xf32>
    %c0_3 = arith.constant 0 : index
    %c0_4 = arith.constant 0 : index
    %2 = vector.load %arg5[%c0_3, %c0_4] : memref<4x1xf32, #tpu.memory_space<vmem>>, vector<4x1xf32>
    %c0_5 = arith.constant 0 : index
    %c0_6 = arith.constant 0 : index
    %3 = vector.load %arg1[%c0_5, %c0_6] : memref<4x512xf32, #tpu.memory_space<vmem>>, vector<4x512xf32>
    %c0_i32 = arith.constant 0 : i32
    %cst = arith.constant dense<0.000000e+00> : vector<32x512xf32>
    %4 = tpu.matmul %0, %3, %cst {dimension_numbers = #tpu.dot_dimension_numbers<[1], [0], [0], [1], [0, 0, 1, 1], [], []>} : vector<32x4xf32>, vector<4x512xf32>, vector<32x512xf32> -> vector<32x512xf32>
    %5 = arith.index_cast %c0_i32 : i32 to index
    %c0_7 = arith.constant 0 : index
    %c0_8 = arith.constant 0 : index
    %6 = vector.load %arg3[%5, %c0_7, %c0_8] : memref<10x32x1xf32, #tpu.memory_space<vmem>>, vector<1x32x1xf32>
    %7 = vector.shape_cast %6 : vector<1x32x1xf32> to vector<32x1xf32>
    %8 = vector.broadcast %7 : vector<32x1xf32> to vector<32x512xf32>
    %9 = arith.addf %4, %8 : vector<32x512xf32>
    %10 = math.tanh %9 : vector<32x512xf32>
    %cst_9 = arith.constant dense<0.000000e+00> : vector<4x512xf32>
    %11 = tpu.matmul %1, %10, %cst_9 {dimension_numbers = #tpu.dot_dimension_numbers<[1], [0], [0], [1], [0, 0, 1, 1], [], []>} : vector<4x32xf32>, vector<32x512xf32>, vector<4x512xf32> -> vector<4x512xf32>
    %12 = vector.broadcast %2 : vector<4x1xf32> to vector<4x512xf32>
    %13 = arith.addf %11, %12 : vector<4x512xf32>
    %14 = arith.index_cast %c0_i32 : i32 to index
    %c0_10 = arith.constant 0 : index
    %c0_11 = arith.constant 0 : index
    %15 = vector.load %arg6[%14, %c0_10, %c0_11] : memref<10x4x512xf32, #tpu.memory_space<vmem>>, vector<1x4x512xf32>
    %16 = vector.shape_cast %15 : vector<1x4x512xf32> to vector<4x512xf32>
    %17 = arith.mulf %16, %3 : vector<4x512xf32>
    %18 = arith.index_cast %c0_i32 : i32 to index
    %c0_12 = arith.constant 0 : index
    %c0_13 = arith.constant 0 : index
    %19 = vector.load %arg7[%18, %c0_12, %c0_13] : memref<10x4x512xf32, #tpu.memory_space<vmem>>, vector<1x4x512xf32>
    %20 = vector.shape_cast %19 : vector<1x4x512xf32> to vector<4x512xf32>
    %21 = arith.mulf %20, %13 : vector<4x512xf32>
    %22 = arith.addf %17, %21 : vector<4x512xf32>
    %c1_i32 = arith.constant 1 : i32
    %cst_14 = arith.constant dense<0.000000e+00> : vector<32x512xf32>
    %23 = tpu.matmul %0, %22, %cst_14 {dimension_numbers = #tpu.dot_dimension_numbers<[1], [0], [0], [1], [0, 0, 1, 1], [], []>} : vector<32x4xf32>, vector<4x512xf32>, vector<32x512xf32> -> vector<32x512xf32>
    %24 = arith.index_cast %c1_i32 : i32 to index
    %c0_15 = arith.constant 0 : index
    %c0_16 = arith.constant 0 : index
    %25 = vector.load %arg3[%24, %c0_15, %c0_16] : memref<10x32x1xf32, #tpu.memory_space<vmem>>, vector<1x32x1xf32>
    %26 = vector.shape_cast %25 : vector<1x32x1xf32> to vector<32x1xf32>
    %27 = vector.broadcast %26 : vector<32x1xf32> to vector<32x512xf32>
    %28 = arith.addf %23, %27 : vector<32x512xf32>
    %29 = math.tanh %28 : vector<32x512xf32>
    %cst_17 = arith.constant dense<0.000000e+00> : vector<4x512xf32>
    %30 = tpu.matmul %1, %29, %cst_17 {dimension_numbers = #tpu.dot_dimension_numbers<[1], [0], [0], [1], [0, 0, 1, 1], [], []>} : vector<4x32xf32>, vector<32x512xf32>, vector<4x512xf32> -> vector<4x512xf32>
    %31 = vector.broadcast %2 : vector<4x1xf32> to vector<4x512xf32>
    %32 = arith.addf %30, %31 : vector<4x512xf32>
    %33 = arith.index_cast %c1_i32 : i32 to index
    %c0_18 = arith.constant 0 : index
    %c0_19 = arith.constant 0 : index
    %34 = vector.load %arg6[%33, %c0_18, %c0_19] : memref<10x4x512xf32, #tpu.memory_space<vmem>>, vector<1x4x512xf32>
    %35 = vector.shape_cast %34 : vector<1x4x512xf32> to vector<4x512xf32>
    %36 = arith.mulf %35, %22 : vector<4x512xf32>
    %37 = arith.index_cast %c1_i32 : i32 to index
    %c0_20 = arith.constant 0 : index
    %c0_21 = arith.constant 0 : index
    %38 = vector.load %arg7[%37, %c0_20, %c0_21] : memref<10x4x512xf32, #tpu.memory_space<vmem>>, vector<1x4x512xf32>
    %39 = vector.shape_cast %38 : vector<1x4x512xf32> to vector<4x512xf32>
    %40 = arith.mulf %39, %32 : vector<4x512xf32>
    %41 = arith.addf %36, %40 : vector<4x512xf32>
    %c2_i32 = arith.constant 2 : i32
    %cst_22 = arith.constant dense<0.000000e+00> : vector<32x512xf32>
    %42 = tpu.matmul %0, %41, %cst_22 {dimension_numbers = #tpu.dot_dimension_numbers<[1], [0], [0], [1], [0, 0, 1, 1], [], []>} : vector<32x4xf32>, vector<4x512xf32>, vector<32x512xf32> -> vector<32x512xf32>
    %43 = arith.index_cast %c2_i32 : i32 to index
    %c0_23 = arith.constant 0 : index
    %c0_24 = arith.constant 0 : index
    %44 = vector.load %arg3[%43, %c0_23, %c0_24] : memref<10x32x1xf32, #tpu.memory_space<vmem>>, vector<1x32x1xf32>
    %45 = vector.shape_cast %44 : vector<1x32x1xf32> to vector<32x1xf32>
    %46 = vector.broadcast %45 : vector<32x1xf32> to vector<32x512xf32>
    %47 = arith.addf %42, %46 : vector<32x512xf32>
    %48 = math.tanh %47 : vector<32x512xf32>
    %cst_25 = arith.constant dense<0.000000e+00> : vector<4x512xf32>
    %49 = tpu.matmul %1, %48, %cst_25 {dimension_numbers = #tpu.dot_dimension_numbers<[1], [0], [0], [1], [0, 0, 1, 1], [], []>} : vector<4x32xf32>, vector<32x512xf32>, vector<4x512xf32> -> vector<4x512xf32>
    %50 = vector.broadcast %2 : vector<4x1xf32> to vector<4x512xf32>
    %51 = arith.addf %49, %50 : vector<4x512xf32>
    %52 = arith.index_cast %c2_i32 : i32 to index
    %c0_26 = arith.constant 0 : index
    %c0_27 = arith.constant 0 : index
    %53 = vector.load %arg6[%52, %c0_26, %c0_27] : memref<10x4x512xf32, #tpu.memory_space<vmem>>, vector<1x4x512xf32>
    %54 = vector.shape_cast %53 : vector<1x4x512xf32> to vector<4x512xf32>
    %55 = arith.mulf %54, %41 : vector<4x512xf32>
    %56 = arith.index_cast %c2_i32 : i32 to index
    %c0_28 = arith.constant 0 : index
    %c0_29 = arith.constant 0 : index
    %57 = vector.load %arg7[%56, %c0_28, %c0_29] : memref<10x4x512xf32, #tpu.memory_space<vmem>>, vector<1x4x512xf32>
    %58 = vector.shape_cast %57 : vector<1x4x512xf32> to vector<4x512xf32>
    %59 = arith.mulf %58, %51 : vector<4x512xf32>
    %60 = arith.addf %55, %59 : vector<4x512xf32>
    %c3_i32 = arith.constant 3 : i32
    %cst_30 = arith.constant dense<0.000000e+00> : vector<32x512xf32>
    %61 = tpu.matmul %0, %60, %cst_30 {dimension_numbers = #tpu.dot_dimension_numbers<[1], [0], [0], [1], [0, 0, 1, 1], [], []>} : vector<32x4xf32>, vector<4x512xf32>, vector<32x512xf32> -> vector<32x512xf32>
    %62 = arith.index_cast %c3_i32 : i32 to index
    %c0_31 = arith.constant 0 : index
    %c0_32 = arith.constant 0 : index
    %63 = vector.load %arg3[%62, %c0_31, %c0_32] : memref<10x32x1xf32, #tpu.memory_space<vmem>>, vector<1x32x1xf32>
    %64 = vector.shape_cast %63 : vector<1x32x1xf32> to vector<32x1xf32>
    %65 = vector.broadcast %64 : vector<32x1xf32> to vector<32x512xf32>
    %66 = arith.addf %61, %65 : vector<32x512xf32>
    %67 = math.tanh %66 : vector<32x512xf32>
    %cst_33 = arith.constant dense<0.000000e+00> : vector<4x512xf32>
    %68 = tpu.matmul %1, %67, %cst_33 {dimension_numbers = #tpu.dot_dimension_numbers<[1], [0], [0], [1], [0, 0, 1, 1], [], []>} : vector<4x32xf32>, vector<32x512xf32>, vector<4x512xf32> -> vector<4x512xf32>
    %69 = vector.broadcast %2 : vector<4x1xf32> to vector<4x512xf32>
    %70 = arith.addf %68, %69 : vector<4x512xf32>
    %71 = arith.index_cast %c3_i32 : i32 to index
    %c0_34 = arith.constant 0 : index
    %c0_35 = arith.constant 0 : index
    %72 = vector.load %arg6[%71, %c0_34, %c0_35] : memref<10x4x512xf32, #tpu.memory_space<vmem>>, vector<1x4x512xf32>
    %73 = vector.shape_cast %72 : vector<1x4x512xf32> to vector<4x512xf32>
    %74 = arith.mulf %73, %60 : vector<4x512xf32>
    %75 = arith.index_cast %c3_i32 : i32 to index
    %c0_36 = arith.constant 0 : index
    %c0_37 = arith.constant 0 : index
    %76 = vector.load %arg7[%75, %c0_36, %c0_37] : memref<10x4x512xf32, #tpu.memory_space<vmem>>, vector<1x4x512xf32>
    %77 = vector.shape_cast %76 : vector<1x4x512xf32> to vector<4x512xf32>
    %78 = arith.mulf %77, %70 : vector<4x512xf32>
    %79 = arith.addf %74, %78 : vector<4x512xf32>
    %c4_i32 = arith.constant 4 : i32
    %cst_38 = arith.constant dense<0.000000e+00> : vector<32x512xf32>
    %80 = tpu.matmul %0, %79, %cst_38 {dimension_numbers = #tpu.dot_dimension_numbers<[1], [0], [0], [1], [0, 0, 1, 1], [], []>} : vector<32x4xf32>, vector<4x512xf32>, vector<32x512xf32> -> vector<32x512xf32>
    %81 = arith.index_cast %c4_i32 : i32 to index
    %c0_39 = arith.constant 0 : index
    %c0_40 = arith.constant 0 : index
    %82 = vector.load %arg3[%81, %c0_39, %c0_40] : memref<10x32x1xf32, #tpu.memory_space<vmem>>, vector<1x32x1xf32>
    %83 = vector.shape_cast %82 : vector<1x32x1xf32> to vector<32x1xf32>
    %84 = vector.broadcast %83 : vector<32x1xf32> to vector<32x512xf32>
    %85 = arith.addf %80, %84 : vector<32x512xf32>
    %86 = math.tanh %85 : vector<32x512xf32>
    %cst_41 = arith.constant dense<0.000000e+00> : vector<4x512xf32>
    %87 = tpu.matmul %1, %86, %cst_41 {dimension_numbers = #tpu.dot_dimension_numbers<[1], [0], [0], [1], [0, 0, 1, 1], [], []>} : vector<4x32xf32>, vector<32x512xf32>, vector<4x512xf32> -> vector<4x512xf32>
    %88 = vector.broadcast %2 : vector<4x1xf32> to vector<4x512xf32>
    %89 = arith.addf %87, %88 : vector<4x512xf32>
    %90 = arith.index_cast %c4_i32 : i32 to index
    %c0_42 = arith.constant 0 : index
    %c0_43 = arith.constant 0 : index
    %91 = vector.load %arg6[%90, %c0_42, %c0_43] : memref<10x4x512xf32, #tpu.memory_space<vmem>>, vector<1x4x512xf32>
    %92 = vector.shape_cast %91 : vector<1x4x512xf32> to vector<4x512xf32>
    %93 = arith.mulf %92, %79 : vector<4x512xf32>
    %94 = arith.index_cast %c4_i32 : i32 to index
    %c0_44 = arith.constant 0 : index
    %c0_45 = arith.constant 0 : index
    %95 = vector.load %arg7[%94, %c0_44, %c0_45] : memref<10x4x512xf32, #tpu.memory_space<vmem>>, vector<1x4x512xf32>
    %96 = vector.shape_cast %95 : vector<1x4x512xf32> to vector<4x512xf32>
    %97 = arith.mulf %96, %89 : vector<4x512xf32>
    %98 = arith.addf %93, %97 : vector<4x512xf32>
    %c5_i32 = arith.constant 5 : i32
    %cst_46 = arith.constant dense<0.000000e+00> : vector<32x512xf32>
    %99 = tpu.matmul %0, %98, %cst_46 {dimension_numbers = #tpu.dot_dimension_numbers<[1], [0], [0], [1], [0, 0, 1, 1], [], []>} : vector<32x4xf32>, vector<4x512xf32>, vector<32x512xf32> -> vector<32x512xf32>
    %100 = arith.index_cast %c5_i32 : i32 to index
    %c0_47 = arith.constant 0 : index
    %c0_48 = arith.constant 0 : index
    %101 = vector.load %arg3[%100, %c0_47, %c0_48] : memref<10x32x1xf32, #tpu.memory_space<vmem>>, vector<1x32x1xf32>
    %102 = vector.shape_cast %101 : vector<1x32x1xf32> to vector<32x1xf32>
    %103 = vector.broadcast %102 : vector<32x1xf32> to vector<32x512xf32>
    %104 = arith.addf %99, %103 : vector<32x512xf32>
    %105 = math.tanh %104 : vector<32x512xf32>
    %cst_49 = arith.constant dense<0.000000e+00> : vector<4x512xf32>
    %106 = tpu.matmul %1, %105, %cst_49 {dimension_numbers = #tpu.dot_dimension_numbers<[1], [0], [0], [1], [0, 0, 1, 1], [], []>} : vector<4x32xf32>, vector<32x512xf32>, vector<4x512xf32> -> vector<4x512xf32>
    %107 = vector.broadcast %2 : vector<4x1xf32> to vector<4x512xf32>
    %108 = arith.addf %106, %107 : vector<4x512xf32>
    %109 = arith.index_cast %c5_i32 : i32 to index
    %c0_50 = arith.constant 0 : index
    %c0_51 = arith.constant 0 : index
    %110 = vector.load %arg6[%109, %c0_50, %c0_51] : memref<10x4x512xf32, #tpu.memory_space<vmem>>, vector<1x4x512xf32>
    %111 = vector.shape_cast %110 : vector<1x4x512xf32> to vector<4x512xf32>
    %112 = arith.mulf %111, %98 : vector<4x512xf32>
    %113 = arith.index_cast %c5_i32 : i32 to index
    %c0_52 = arith.constant 0 : index
    %c0_53 = arith.constant 0 : index
    %114 = vector.load %arg7[%113, %c0_52, %c0_53] : memref<10x4x512xf32, #tpu.memory_space<vmem>>, vector<1x4x512xf32>
    %115 = vector.shape_cast %114 : vector<1x4x512xf32> to vector<4x512xf32>
    %116 = arith.mulf %115, %108 : vector<4x512xf32>
    %117 = arith.addf %112, %116 : vector<4x512xf32>
    %c6_i32 = arith.constant 6 : i32
    %cst_54 = arith.constant dense<0.000000e+00> : vector<32x512xf32>
    %118 = tpu.matmul %0, %117, %cst_54 {dimension_numbers = #tpu.dot_dimension_numbers<[1], [0], [0], [1], [0, 0, 1, 1], [], []>} : vector<32x4xf32>, vector<4x512xf32>, vector<32x512xf32> -> vector<32x512xf32>
    %119 = arith.index_cast %c6_i32 : i32 to index
    %c0_55 = arith.constant 0 : index
    %c0_56 = arith.constant 0 : index
    %120 = vector.load %arg3[%119, %c0_55, %c0_56] : memref<10x32x1xf32, #tpu.memory_space<vmem>>, vector<1x32x1xf32>
    %121 = vector.shape_cast %120 : vector<1x32x1xf32> to vector<32x1xf32>
    %122 = vector.broadcast %121 : vector<32x1xf32> to vector<32x512xf32>
    %123 = arith.addf %118, %122 : vector<32x512xf32>
    %124 = math.tanh %123 : vector<32x512xf32>
    %cst_57 = arith.constant dense<0.000000e+00> : vector<4x512xf32>
    %125 = tpu.matmul %1, %124, %cst_57 {dimension_numbers = #tpu.dot_dimension_numbers<[1], [0], [0], [1], [0, 0, 1, 1], [], []>} : vector<4x32xf32>, vector<32x512xf32>, vector<4x512xf32> -> vector<4x512xf32>
    %126 = vector.broadcast %2 : vector<4x1xf32> to vector<4x512xf32>
    %127 = arith.addf %125, %126 : vector<4x512xf32>
    %128 = arith.index_cast %c6_i32 : i32 to index
    %c0_58 = arith.constant 0 : index
    %c0_59 = arith.constant 0 : index
    %129 = vector.load %arg6[%128, %c0_58, %c0_59] : memref<10x4x512xf32, #tpu.memory_space<vmem>>, vector<1x4x512xf32>
    %130 = vector.shape_cast %129 : vector<1x4x512xf32> to vector<4x512xf32>
    %131 = arith.mulf %130, %117 : vector<4x512xf32>
    %132 = arith.index_cast %c6_i32 : i32 to index
    %c0_60 = arith.constant 0 : index
    %c0_61 = arith.constant 0 : index
    %133 = vector.load %arg7[%132, %c0_60, %c0_61] : memref<10x4x512xf32, #tpu.memory_space<vmem>>, vector<1x4x512xf32>
    %134 = vector.shape_cast %133 : vector<1x4x512xf32> to vector<4x512xf32>
    %135 = arith.mulf %134, %127 : vector<4x512xf32>
    %136 = arith.addf %131, %135 : vector<4x512xf32>
    %c7_i32 = arith.constant 7 : i32
    %cst_62 = arith.constant dense<0.000000e+00> : vector<32x512xf32>
    %137 = tpu.matmul %0, %136, %cst_62 {dimension_numbers = #tpu.dot_dimension_numbers<[1], [0], [0], [1], [0, 0, 1, 1], [], []>} : vector<32x4xf32>, vector<4x512xf32>, vector<32x512xf32> -> vector<32x512xf32>
    %138 = arith.index_cast %c7_i32 : i32 to index
    %c0_63 = arith.constant 0 : index
    %c0_64 = arith.constant 0 : index
    %139 = vector.load %arg3[%138, %c0_63, %c0_64] : memref<10x32x1xf32, #tpu.memory_space<vmem>>, vector<1x32x1xf32>
    %140 = vector.shape_cast %139 : vector<1x32x1xf32> to vector<32x1xf32>
    %141 = vector.broadcast %140 : vector<32x1xf32> to vector<32x512xf32>
    %142 = arith.addf %137, %141 : vector<32x512xf32>
    %143 = math.tanh %142 : vector<32x512xf32>
    %cst_65 = arith.constant dense<0.000000e+00> : vector<4x512xf32>
    %144 = tpu.matmul %1, %143, %cst_65 {dimension_numbers = #tpu.dot_dimension_numbers<[1], [0], [0], [1], [0, 0, 1, 1], [], []>} : vector<4x32xf32>, vector<32x512xf32>, vector<4x512xf32> -> vector<4x512xf32>
    %145 = vector.broadcast %2 : vector<4x1xf32> to vector<4x512xf32>
    %146 = arith.addf %144, %145 : vector<4x512xf32>
    %147 = arith.index_cast %c7_i32 : i32 to index
    %c0_66 = arith.constant 0 : index
    %c0_67 = arith.constant 0 : index
    %148 = vector.load %arg6[%147, %c0_66, %c0_67] : memref<10x4x512xf32, #tpu.memory_space<vmem>>, vector<1x4x512xf32>
    %149 = vector.shape_cast %148 : vector<1x4x512xf32> to vector<4x512xf32>
    %150 = arith.mulf %149, %136 : vector<4x512xf32>
    %151 = arith.index_cast %c7_i32 : i32 to index
    %c0_68 = arith.constant 0 : index
    %c0_69 = arith.constant 0 : index
    %152 = vector.load %arg7[%151, %c0_68, %c0_69] : memref<10x4x512xf32, #tpu.memory_space<vmem>>, vector<1x4x512xf32>
    %153 = vector.shape_cast %152 : vector<1x4x512xf32> to vector<4x512xf32>
    %154 = arith.mulf %153, %146 : vector<4x512xf32>
    %155 = arith.addf %150, %154 : vector<4x512xf32>
    %c8_i32 = arith.constant 8 : i32
    %cst_70 = arith.constant dense<0.000000e+00> : vector<32x512xf32>
    %156 = tpu.matmul %0, %155, %cst_70 {dimension_numbers = #tpu.dot_dimension_numbers<[1], [0], [0], [1], [0, 0, 1, 1], [], []>} : vector<32x4xf32>, vector<4x512xf32>, vector<32x512xf32> -> vector<32x512xf32>
    %157 = arith.index_cast %c8_i32 : i32 to index
    %c0_71 = arith.constant 0 : index
    %c0_72 = arith.constant 0 : index
    %158 = vector.load %arg3[%157, %c0_71, %c0_72] : memref<10x32x1xf32, #tpu.memory_space<vmem>>, vector<1x32x1xf32>
    %159 = vector.shape_cast %158 : vector<1x32x1xf32> to vector<32x1xf32>
    %160 = vector.broadcast %159 : vector<32x1xf32> to vector<32x512xf32>
    %161 = arith.addf %156, %160 : vector<32x512xf32>
    %162 = math.tanh %161 : vector<32x512xf32>
    %cst_73 = arith.constant dense<0.000000e+00> : vector<4x512xf32>
    %163 = tpu.matmul %1, %162, %cst_73 {dimension_numbers = #tpu.dot_dimension_numbers<[1], [0], [0], [1], [0, 0, 1, 1], [], []>} : vector<4x32xf32>, vector<32x512xf32>, vector<4x512xf32> -> vector<4x512xf32>
    %164 = vector.broadcast %2 : vector<4x1xf32> to vector<4x512xf32>
    %165 = arith.addf %163, %164 : vector<4x512xf32>
    %166 = arith.index_cast %c8_i32 : i32 to index
    %c0_74 = arith.constant 0 : index
    %c0_75 = arith.constant 0 : index
    %167 = vector.load %arg6[%166, %c0_74, %c0_75] : memref<10x4x512xf32, #tpu.memory_space<vmem>>, vector<1x4x512xf32>
    %168 = vector.shape_cast %167 : vector<1x4x512xf32> to vector<4x512xf32>
    %169 = arith.mulf %168, %155 : vector<4x512xf32>
    %170 = arith.index_cast %c8_i32 : i32 to index
    %c0_76 = arith.constant 0 : index
    %c0_77 = arith.constant 0 : index
    %171 = vector.load %arg7[%170, %c0_76, %c0_77] : memref<10x4x512xf32, #tpu.memory_space<vmem>>, vector<1x4x512xf32>
    %172 = vector.shape_cast %171 : vector<1x4x512xf32> to vector<4x512xf32>
    %173 = arith.mulf %172, %165 : vector<4x512xf32>
    %174 = arith.addf %169, %173 : vector<4x512xf32>
    %c9_i32 = arith.constant 9 : i32
    %cst_78 = arith.constant dense<0.000000e+00> : vector<32x512xf32>
    %175 = tpu.matmul %0, %174, %cst_78 {dimension_numbers = #tpu.dot_dimension_numbers<[1], [0], [0], [1], [0, 0, 1, 1], [], []>} : vector<32x4xf32>, vector<4x512xf32>, vector<32x512xf32> -> vector<32x512xf32>
    %176 = arith.index_cast %c9_i32 : i32 to index
    %c0_79 = arith.constant 0 : index
    %c0_80 = arith.constant 0 : index
    %177 = vector.load %arg3[%176, %c0_79, %c0_80] : memref<10x32x1xf32, #tpu.memory_space<vmem>>, vector<1x32x1xf32>
    %178 = vector.shape_cast %177 : vector<1x32x1xf32> to vector<32x1xf32>
    %179 = vector.broadcast %178 : vector<32x1xf32> to vector<32x512xf32>
    %180 = arith.addf %175, %179 : vector<32x512xf32>
    %181 = math.tanh %180 : vector<32x512xf32>
    %cst_81 = arith.constant dense<0.000000e+00> : vector<4x512xf32>
    %182 = tpu.matmul %1, %181, %cst_81 {dimension_numbers = #tpu.dot_dimension_numbers<[1], [0], [0], [1], [0, 0, 1, 1], [], []>} : vector<4x32xf32>, vector<32x512xf32>, vector<4x512xf32> -> vector<4x512xf32>
    %183 = vector.broadcast %2 : vector<4x1xf32> to vector<4x512xf32>
    %184 = arith.addf %182, %183 : vector<4x512xf32>
    %185 = arith.index_cast %c9_i32 : i32 to index
    %c0_82 = arith.constant 0 : index
    %c0_83 = arith.constant 0 : index
    %186 = vector.load %arg6[%185, %c0_82, %c0_83] : memref<10x4x512xf32, #tpu.memory_space<vmem>>, vector<1x4x512xf32>
    %187 = vector.shape_cast %186 : vector<1x4x512xf32> to vector<4x512xf32>
    %188 = arith.mulf %187, %174 : vector<4x512xf32>
    %189 = arith.index_cast %c9_i32 : i32 to index
    %c0_84 = arith.constant 0 : index
    %c0_85 = arith.constant 0 : index
    %190 = vector.load %arg7[%189, %c0_84, %c0_85] : memref<10x4x512xf32, #tpu.memory_space<vmem>>, vector<1x4x512xf32>
    %191 = vector.shape_cast %190 : vector<1x4x512xf32> to vector<4x512xf32>
    %192 = arith.mulf %191, %184 : vector<4x512xf32>
    %193 = arith.addf %188, %192 : vector<4x512xf32>
    %c10_i32 = arith.constant 10 : i32
    %cst_86 = arith.constant -1.000000e+00 : f32
    %cst_87 = arith.constant 1.000000e+00 : f32
    %194 = vector.broadcast %cst_86 : f32 to vector<4x512xf32>
    %195 = arith.maximumf %194, %193 : vector<4x512xf32>
    %196 = vector.broadcast %cst_87 : f32 to vector<4x512xf32>
    %197 = arith.minimumf %196, %195 : vector<4x512xf32>
    %c0_88 = arith.constant 0 : index
    %c0_89 = arith.constant 0 : index
    %198 = vector.load %arg8[%c0_88, %c0_89] : memref<4x512xf32, #tpu.memory_space<vmem>>, vector<4x512xf32>
    tpu.vector_store %arg8[%c0_88, %c0_89], %197 {strides = array<i32>} : memref<4x512xf32, #tpu.memory_space<vmem>>, vector<4x512xf32>,
    return
  }
  func.func @transform_0(%arg0: i32) -> (i32, i32) {
    %c0_i32 = arith.constant 0 : i32
    %c0_i32_0 = arith.constant 0 : i32
    %c0_i32_1 = arith.constant 0 : i32
    return %c0_i32, %c0_i32_0 : i32, i32
  }
  func.func @transform_1(%arg0: i32) -> (i32, i32) {
    %c0_i32 = arith.constant 0 : i32
    %c0_i32_0 = arith.constant 0 : i32
    %c0_i32_1 = arith.constant 0 : i32
    return %c0_i32, %c0_i32_0 : i32, i32
  }
  func.func @transform_2(%arg0: i32) -> (i32, i32, i32) {
    %c0_i32 = arith.constant 0 : i32
    %c0_i32_0 = arith.constant 0 : i32
    %c0_i32_1 = arith.constant 0 : i32
    %c0_i32_2 = arith.constant 0 : i32
    return %c0_i32, %c0_i32_0, %c0_i32_1 : i32, i32, i32
  }
  func.func @transform_3(%arg0: i32) -> (i32, i32) {
    %c0_i32 = arith.constant 0 : i32
    %c0_i32_0 = arith.constant 0 : i32
    %c0_i32_1 = arith.constant 0 : i32
    return %c0_i32, %c0_i32_0 : i32, i32
  }
  func.func @transform_4(%arg0: i32) -> (i32, i32) {
    %c0_i32 = arith.constant 0 : i32
    %c0_i32_0 = arith.constant 0 : i32
    %c0_i32_1 = arith.constant 0 : i32
    return %c0_i32, %c0_i32_0 : i32, i32
  }
  func.func @transform_5(%arg0: i32) -> (i32, i32, i32) {
    %c0_i32 = arith.constant 0 : i32
    %c0_i32_0 = arith.constant 0 : i32
    %c0_i32_1 = arith.constant 0 : i32
    %c0_i32_2 = arith.constant 0 : i32
    return %c0_i32, %c0_i32_0, %c0_i32_1 : i32, i32, i32
  }
  func.func @transform_6(%arg0: i32) -> (i32, i32, i32) {
    %c0_i32 = arith.constant 0 : i32
    %c0_i32_0 = arith.constant 0 : i32
    %c0_i32_1 = arith.constant 0 : i32
    %c0_i32_2 = arith.constant 0 : i32
    return %c0_i32, %c0_i32_0, %c0_i32_1 : i32, i32, i32
  }
  func.func @transform_7(%arg0: i32) -> (i32, i32) {
    %c0_i32 = arith.constant 0 : i32
    %c0_i32_0 = arith.constant 0 : i32
    %c0_i32_1 = arith.constant 0 : i32
    return %c0_i32, %c0_i32_0 : i32, i32
  }
}

</mosaic_0001>

<llo_original>
// kernel: structure_ddim_sample.1
$region0: #{structure_ddim_sample.1}
  #allocation0 [shape = 'u32[]', space=smem, size = 0x4, offset = 0x4, fixed_abs, tag = 'smem constant byte address 0x4 - core index']
  #allocation1 [shape = 'u32[144,128]{1,0:T(1,128)}', space=vmem, size = 0x12000, scoped, tag = 'internal scratch']
  %s0 = inlined_call_operand.vmem [shape: f32[4,512], index: 0, kind: input, shape index: {}]
  %s1 = inlined_call_operand.vmem [shape: f32[32,4], index: 1, kind: input, shape index: {}]
  %s2 = inlined_call_operand.vmem [shape: f32[10,32,1], index: 2, kind: input, shape index: {}]
  %s3 = inlined_call_operand.vmem [shape: f32[4,32], index: 3, kind: input, shape index: {}]
  %s4 = inlined_call_operand.vmem [shape: f32[4,1], index: 4, kind: input, shape index: {}]
  %s5 = inlined_call_operand.vmem [shape: f32[10,4,512], index: 5, kind: input, shape index: {}]
  %s6 = inlined_call_operand.vmem [shape: f32[10,4,512], index: 6, kind: input, shape index: {}]
  %s7 = inlined_call_operand.vmem [shape: f32[4,512], index: 7, kind: output, shape index: {}]
  %s8 = sld [smem:[#allocation0]]
  $region38: #{structure_ddim_sample.1} parent=0
    _
  %s10 = ssub.s32 1, %s8
  %s11 = scalar_select 0, %s10, %s8
  // Predicated region
  $region2: #{structure_ddim_sample.1} parent=0 // pred_check
    _
  $region3: #{structure_ddim_sample.1} parent=0 // pred_check_branch
    %13 = sbr.rel (0) target = $region5
  $region4: #{structure_ddim_sample.1} parent=0 // pred_region
    _
  $region5: #{structure_ddim_sample.1} parent=0 // pred_fallthru
    _
  // Predicated region
  $region6: #{structure_ddim_sample.1} parent=0 // pred_check
    _
  $region7: #{structure_ddim_sample.1} parent=0 // pred_check_branch
    %15 = sbr.rel (0) target = $region9
  $region8: #{structure_ddim_sample.1} parent=0 // pred_region
    _
  $region9: #{structure_ddim_sample.1} parent=0 // pred_fallthru
    _
  // Predicated region
  $region10: #{structure_ddim_sample.1} parent=0 // pred_check
    _
  $region11: #{structure_ddim_sample.1} parent=0 // pred_check_branch
    %17 = sbr.rel (0) target = $region13
  $region12: #{structure_ddim_sample.1} parent=0 // pred_region
    _
  $region13: #{structure_ddim_sample.1} parent=0 // pred_fallthru
    _
  // Predicated region
  $region14: #{structure_ddim_sample.1} parent=0 // pred_check
    _
  $region15: #{structure_ddim_sample.1} parent=0 // pred_check_branch
    %19 = sbr.rel (0) target = $region17
  $region16: #{structure_ddim_sample.1} parent=0 // pred_region
    _
  $region17: #{structure_ddim_sample.1} parent=0 // pred_fallthru
    _
  // Predicated region
  $region18: #{structure_ddim_sample.1} parent=0 // pred_check
    _
  $region19: #{structure_ddim_sample.1} parent=0 // pred_check_branch
    %21 = sbr.rel (0) target = $region21
  $region20: #{structure_ddim_sample.1} parent=0 // pred_region
    _
  $region21: #{structure_ddim_sample.1} parent=0 // pred_fallthru
    _
  // Predicated region
  $region22: #{structure_ddim_sample.1} parent=0 // pred_check
    _
  $region23: #{structure_ddim_sample.1} parent=0 // pred_check_branch
    %23 = sbr.rel (0) target = $region25
  $region24: #{structure_ddim_sample.1} parent=0 // pred_region
    _
  $region25: #{structure_ddim_sample.1} parent=0 // pred_fallthru
    _
  // Predicated region
  $region26: #{structure_ddim_sample.1} parent=0 // pred_check
    _
  $region27: #{structure_ddim_sample.1} parent=0 // pred_check_branch
    %25 = sbr.rel (0) target = $region29
  $region28: #{structure_ddim_sample.1} parent=0 // pred_region
    _
  $region29: #{structure_ddim_sample.1} parent=0 // pred_fallthru
    _
  %v26 = vld [vmem:[%s1] sm:$0xff]
  %v27 = vld [vmem:[%s1 + $0x8] sm:$0xff]
  %v28 = vld [vmem:[%s1 + $0x10] sm:$0xff]
  %v29 = vld [vmem:[%s1 + $0x18] sm:$0xff]
  %v30 = vld [vmem:[%s3] sm:$0xf]
  %v31 = vld [vmem:[%s4] sm:$0xf]
  %v32 = vld [vmem:[%s0] sm:$0xff]
  %v33 = vld [vmem:[%s0 + $0x8] sm:$0xff]
  %v34 = vld [vmem:[%s2] sm:$0xff]
  %v35 = vld [vmem:[%s2 + $0x8] sm:$0xff]
  %v36 = vld [vmem:[%s2 + $0x10] sm:$0xff]
  %v37 = vld [vmem:[%s2 + $0x18] sm:$0xff]
  %39 = vset.pattern.permute.xlu0 0
  %40 = vperm.xlu0 %39, %v34
  %v41 = vpop.permute.xlu0 %40
  %44 = vset.pattern.permute.xlu0 0
  %45 = vperm.xlu0 %44, %v35
  %v46 = vpop.permute.xlu0 %45
  %49 = vset.pattern.permute.xlu0 0
  %50 = vperm.xlu0 %49, %v36
  %v51 = vpop.permute.xlu0 %50
  %54 = vset.pattern.permute.xlu0 0
  %55 = vperm.xlu0 %54, %v37
  %v56 = vpop.permute.xlu0 %55
  %v60 = vcombine.high %v32, %v32
  %v61 = vcombine.high %v33, %v33
  %vm62 = vcmask 31744
  %v64 = vsel %vm62, %v26, 0
  %v67 = vsel %vm62, %v27, 0
  %v70 = vsel %vm62, %v28, 0
  %v73 = vsel %vm62, %v29, 0
  %vm75 = vcmask 1043456
  %v76 = vsel %vm75, %v32, 0
  %v78 = vsel %vm75, %v60, 0
  %v80 = vsel %vm75, %v33, 0
  %v82 = vsel %vm75, %v61, 0
  %84 = vmatprep.subr.mxu0 %v78
  %85 = vmatpush1.msra.mxu0 %v76
  %86 = vmatprep.subr.mxu0 0.0
  %87 = vmatpush1.msra.mxu0 0.0
  %88 = vmatprep.subr.mxu0 0.0
  %89 = vmatpush1.msra.mxu0 0.0
  %90 = vmatprep.subr.mxu0 0.0
  %91 = vmatpush1.msra.mxu0 0.0
  %92 = vmatprep.subr.mxu0 0.0
  %93 = vmatpush1.msra.mxu0 0.0
  %94 = vmatprep.subr.mxu0 0.0
  %95 = vmatpush1.msra.mxu0 0.0
  %96 = vmatprep.subr.mxu0 0.0
  %97 = vmatpush1.msra.mxu0 0.0
  %98 = vmatprep.subr.mxu0 0.0
  %99 = vmatpush1.msra.mxu0 0.0
  %100 = vmatprep.subr.mxu0 0.0
  %101 = vmatpush1.msra.mxu0 0.0
  %102 = vmatprep.subr.mxu0 0.0
  %103 = vmatpush1.msra.mxu0 0.0
  %104 = vmatprep.subr.mxu0 0.0
  %105 = vmatpush1.msra.mxu0 0.0
  %106 = vmatprep.subr.mxu0 0.0
  %107 = vmatpush1.msra.mxu0 0.0
  %108 = vmatprep.subr.mxu0 0.0
  %109 = vmatpush1.msra.mxu0 0.0
  %110 = vmatprep.subr.mxu0 0.0
  %111 = vmatpush1.msra.mxu0 0.0
  %112 = vmatprep.subr.mxu0 0.0
  %113 = vmatpush1.msra.mxu0 0.0
  %114 = vmatprep.subr.mxu0 0.0
  %115 = vmatpush1.msra.mxu0 0.0
  %116 = vmatprep.subr.mxu0 0.0
  %117 = vmatpush1.msra.mxu0 0.0
  %118 = vmatprep.subr.mxu0 0.0
  %119 = vmatpush1.msra.mxu0 0.0
  %120 = vmatprep.subr.mxu0 0.0
  %121 = vmatpush1.msra.mxu0 0.0
  %122 = vmatprep.subr.mxu0 0.0
  %123 = vmatpush1.msra.mxu0 0.0
  %124 = vmatprep.subr.mxu0 0.0
  %125 = vmatpush1.msra.mxu0 0.0
  %126 = vmatprep.subr.mxu0 0.0
  %127 = vmatpush1.msra.mxu0 0.0
  %128 = vmatprep.subr.mxu0 0.0
  %129 = vmatpush1.msra.mxu0 0.0
  %130 = vmatprep.subr.mxu0 0.0
  %131 = vmatpush1.msra.mxu0 0.0
  %132 = vmatprep.subr.mxu0 0.0
  %133 = vmatpush1.msra.mxu0 0.0
  %134 = vmatprep.subr.mxu0 0.0
  %135 = vmatpush1.msra.mxu0 0.0
  %136 = vmatprep.subr.mxu0 0.0
  %137 = vmatpush1.msra.mxu0 0.0
  %138 = vmatprep.subr.mxu0 0.0
  %139 = vmatpush1.msra.mxu0 0.0
  %140 = vmatprep.subr.mxu0 0.0
  %141 = vmatpush1.msra.mxu0 0.0
  %142 = vmatprep.subr.mxu0 0.0
  %143 = vmatpush1.msra.mxu0 0.0
  %144 = vmatprep.subr.mxu0 0.0
  %145 = vmatpush1.msra.mxu0 0.0
  %146 = vmatprep.subr.mxu0 0.0
  %147 = vmatpush1.msra.mxu0 0.0
  %148 = vmatprep.mubr.f32.mxu0 0.0
  %149 = vmatmul.mubr.f32.gmra.mrb[0].mxu0 %v64
  %v150 = vpop.f32.mrb[0].mxu0
  %v151 = vadd.f32 %v41, %v150
  %v152 = vpop.f32.mrb[0].mxu0
  %v153 = vadd.f32 %v41, %v152
  %154 = vmatprep.mubr.f32.mxu0 0.0
  %155 = vmatmul.mubr.f32.gmra.mrb[0].mxu0 %v67
  %v156 = vpop.f32.mrb[0].mxu0
  %v157 = vadd.f32 %v46, %v156
  %v158 = vpop.f32.mrb[0].mxu0
  %v159 = vadd.f32 %v46, %v158
  %160 = vmatprep.mubr.f32.mxu0 0.0
  %161 = vmatmul.mubr.f32.gmra.mrb[0].mxu0 %v70
  %v162 = vpop.f32.mrb[0].mxu0
  %v163 = vadd.f32 %v51, %v162
  %v164 = vpop.f32.mrb[0].mxu0
  %v165 = vadd.f32 %v51, %v164
  %166 = vmatprep.mubr.f32.mxu0 0.0
  %167 = vmatmul.mubr.f32.gmra.mrb[0].mxu0 %v73
  %v168 = vpop.f32.mrb[0].mxu0
  %v169 = vadd.f32 %v56, %v168
  %v170 = vpop.f32.mrb[0].mxu0
  %v171 = vadd.f32 %v56, %v170
  %172 = vdwg.mxu0
  %173 = vmatprep.subr.mxu0 %v82
  %174 = vmatpush1.msra.mxu0 %v80
  %175 = vmatprep.subr.mxu0 0.0
  %176 = vmatpush1.msra.mxu0 0.0
  %177 = vmatprep.subr.mxu0 0.0
  %178 = vmatpush1.msra.mxu0 0.0
  %179 = vmatprep.subr.mxu0 0.0
  %180 = vmatpush1.msra.mxu0 0.0
  %181 = vmatprep.subr.mxu0 0.0
  %182 = vmatpush1.msra.mxu0 0.0
  %183 = vmatprep.subr.mxu0 0.0
  %184 = vmatpush1.msra.mxu0 0.0
  %185 = vmatprep.subr.mxu0 0.0
  %186 = vmatpush1.msra.mxu0 0.0
  %187 = vmatprep.subr.mxu0 0.0
  %188 = vmatpush1.msra.mxu0 0.0
  %189 = vmatprep.subr.mxu0 0.0
  %190 = vmatpush1.msra.mxu0 0.0
  %191 = vmatprep.subr.mxu0 0.0
  %192 = vmatpush1.msra.mxu0 0.0
  %193 = vmatprep.subr.mxu0 0.0
  %194 = vmatpush1.msra.mxu0 0.0
  %195 = vmatprep.subr.mxu0 0.0
  %196 = vmatpush1.msra.mxu0 0.0
  %197 = vmatprep.subr.mxu0 0.0
  %198 = vmatpush1.msra.mxu0 0.0
  %199 = vmatprep.subr.mxu0 0.0
  %200 = vmatpush1.msra.mxu0 0.0
  %201 = vmatprep.subr.mxu0 0.0
  %202 = vmatpush1.msra.mxu0 0.0
  %203 = vmatprep.subr.mxu0 0.0
  %204 = vmatpush1.msra.mxu0 0.0
  %205 = vmatprep.subr.mxu0 0.0
  %206 = vmatpush1.msra.mxu0 0.0
  %207 = vmatprep.subr.mxu0 0.0
  %208 = vmatpush1.msra.mxu0 0.0
  %209 = vmatprep.subr.mxu0 0.0
  %210 = vmatpush1.msra.mxu0 0.0
  %211 = vmatprep.subr.mxu0 0.0
  %212 = vmatpush1.msra.mxu0 0.0
  %213 = vmatprep.subr.mxu0 0.0
  %214 = vmatpush1.msra.mxu0 0.0
  %215 = vmatprep.subr.mxu0 0.0
  %216 = vmatpush1.msra.mxu0 0.0
  %217 = vmatprep.subr.mxu0 0.0
  %218 = vmatpush1.msra.mxu0 0.0
  %219 = vmatprep.subr.mxu0 0.0
  %220 = vmatpush1.msra.mxu0 0.0
  %221 = vmatprep.subr.mxu0 0.0
  %222 = vmatpush1.msra.mxu0 0.0
  %223 = vmatprep.subr.mxu0 0.0
  %224 = vmatpush1.msra.mxu0 0.0
  %225 = vmatprep.subr.mxu0 0.0
  %226 = vmatpush1.msra.mxu0 0.0
  %227 = vmatprep.subr.mxu0 0.0
  %228 = vmatpush1.msra.mxu0 0.0
  %229 = vmatprep.subr.mxu0 0.0
  %230 = vmatpush1.msra.mxu0 0.0
  %231 = vmatprep.subr.mxu0 0.0
  %232 = vmatpush1.msra.mxu0 0.0
  %233 = vmatprep.subr.mxu0 0.0
  %234 = vmatpush1.msra.mxu0 0.0
  %235 = vmatprep.subr.mxu0 0.0
  %236 = vmatpush1.msra.mxu0 0.0
  %237 = vmatprep.mubr.f32.mxu0 0.0
  %238 = vmatmul.mubr.f32.gmra.mrb[0].mxu0 %v64
  %v239 = vpop.f32.mrb[0].mxu0
  %v240 = vadd.f32 %v41, %v239
  %v241 = vpop.f32.mrb[0].mxu0
  %v242 = vadd.f32 %v41, %v241
  %243 = vmatprep.mubr.f32.mxu0 0.0
  %244 = vmatmul.mubr.f32.gmra.mrb[0].mxu0 %v67
  %v245 = vpop.f32.mrb[0].mxu0
  %v246 = vadd.f32 %v46, %v245
  %v247 = vpop.f32.mrb[0].mxu0
  %v248 = vadd.f32 %v46, %v247
  %249 = vmatprep.mubr.f32.mxu0 0.0
  %250 = vmatmul.mubr.f32.gmra.mrb[0].mxu0 %v70
  %v251 = vpop.f32.mrb[0].mxu0
  %v252 = vadd.f32 %v51, %v251
  %v253 = vpop.f32.mrb[0].mxu0
  %v254 = vadd.f32 %v51, %v253
  %255 = vmatprep.mubr.f32.mxu0 0.0
  %256 = vmatmul.mubr.f32.gmra.mrb[0].mxu0 %v73
  %v257 = vpop.f32.mrb[0].mxu0
  %v258 = vadd.f32 %v56, %v257
  %v259 = vpop.f32.mrb[0].mxu0
  %v260 = vadd.f32 %v56, %v259
  %261 = vdwg.mxu0
  %v262 = vtanh.pop %v151
  %v263 = vtanh.pop %v153
  %v264 = vtanh.pop %v240
  %v265 = vtanh.pop %v242
  %v266 = vtanh.pop %v157
  %v267 = vtanh.pop %v159
  %v268 = vtanh.pop %v246
  %v269 = vtanh.pop %v248
  %v270 = vtanh.pop %v163
  %v271 = vtanh.pop %v165
  %v272 = vtanh.pop %v252
  %v273 = vtanh.pop %v254
  %v274 = vtanh.pop %v169
  %v275 = vtanh.pop %v171
  %v276 = vtanh.pop %v258
  %v277 = vtanh.pop %v260
  %279 = vset.pattern.permute.xlu0 0
  %280 = vperm.xlu0 %279, %v31
  %v281 = vpop.permute.xlu0 %280
  %vm283 = vcmask 261120
  %v285 = vsel %vm283, %v30, 0
  %287 = vmatprep.subr.mxu0 %v263
  %288 = vmatpush1.msra.mxu0 %v262
  %289 = vmatprep.subr.mxu0 %v267
  %290 = vmatpush1.msra.mxu0 %v266
  %291 = vmatprep.subr.mxu0 %v271
  %292 = vmatpush1.msra.mxu0 %v270
  %293 = vmatprep.subr.mxu0 %v275
  %294 = vmatpush1.msra.mxu0 %v274
  %295 = vmatprep.subr.mxu0 0.0
  %296 = vmatpush1.msra.mxu0 0.0
  %297 = vmatprep.subr.mxu0 0.0
  %298 = vmatpush1.msra.mxu0 0.0
  %299 = vmatprep.subr.mxu0 0.0
  %300 = vmatpush1.msra.mxu0 0.0
  %301 = vmatprep.subr.mxu0 0.0
  %302 = vmatpush1.msra.mxu0 0.0
  %303 = vmatprep.subr.mxu0 0.0
  %304 = vmatpush1.msra.mxu0 0.0
  %305 = vmatprep.subr.mxu0 0.0
  %306 = vmatpush1.msra.mxu0 0.0
  %307 = vmatprep.subr.mxu0 0.0
  %308 = vmatpush1.msra.mxu0 0.0
  %309 = vmatprep.subr.mxu0 0.0
  %310 = vmatpush1.msra.mxu0 0.0
  %311 = vmatprep.subr.mxu0 0.0
  %312 = vmatpush1.msra.mxu0 0.0
  %313 = vmatprep.subr.mxu0 0.0
  %314 = vmatpush1.msra.mxu0 0.0
  %315 = vmatprep.subr.mxu0 0.0
  %316 = vmatpush1.msra.mxu0 0.0
  %317 = vmatprep.subr.mxu0 0.0
  %318 = vmatpush1.msra.mxu0 0.0
  %319 = vmatprep.subr.mxu0 0.0
  %320 = vmatpush1.msra.mxu0 0.0
  %321 = vmatprep.subr.mxu0 0.0
  %322 = vmatpush1.msra.mxu0 0.0
  %323 = vmatprep.subr.mxu0 0.0
  %324 = vmatpush1.msra.mxu0 0.0
  %325 = vmatprep.subr.mxu0 0.0
  %326 = vmatpush1.msra.mxu0 0.0
  %327 = vmatprep.subr.mxu0 0.0
  %328 = vmatpush1.msra.mxu0 0.0
  %329 = vmatprep.subr.mxu0 0.0
  %330 = vmatpush1.msra.mxu0 0.0
  %331 = vmatprep.subr.mxu0 0.0
  %332 = vmatpush1.msra.mxu0 0.0
  %333 = vmatprep.subr.mxu0 0.0
  %334 = vmatpush1.msra.mxu0 0.0
  %335 = vmatprep.subr.mxu0 0.0
  %336 = vmatpush1.msra.mxu0 0.0
  %337 = vmatprep.subr.mxu0 0.0
  %338 = vmatpush1.msra.mxu0 0.0
  %339 = vmatprep.subr.mxu0 0.0
  %340 = vmatpush1.msra.mxu0 0.0
  %341 = vmatprep.subr.mxu0 0.0
  %342 = vmatpush1.msra.mxu0 0.0
  %343 = vmatprep.subr.mxu0 0.0
  %344 = vmatpush1.msra.mxu0 0.0
  %345 = vmatprep.subr.mxu0 0.0
  %346 = vmatpush1.msra.mxu0 0.0
  %347 = vmatprep.subr.mxu0 0.0
  %348 = vmatpush1.msra.mxu0 0.0
  %349 = vmatprep.subr.mxu0 0.0
  %350 = vmatpush1.msra.mxu0 0.0
  %351 = vmatprep.mubr.f32.mxu0 0.0
  %352 = vmatmul.mubr.f32.gmra.mrb[0].mxu0 %v285
  %v353 = vpop.f32.mrb[0].mxu0
  %v354 = vadd.f32 %v281, %v353
  %v355 = vpop.f32.mrb[0].mxu0
  %v356 = vadd.f32 %v281, %v355
  %357 = vdwg.mxu0
  %358 = vmatprep.subr.mxu0 %v265
  %359 = vmatpush1.msra.mxu0 %v264
  %360 = vmatprep.subr.mxu0 %v269
  %361 = vmatpush1.msra.mxu0 %v268
  %362 = vmatprep.subr.mxu0 %v273
  %363 = vmatpush1.msra.mxu0 %v272
  %364 = vmatprep.subr.mxu0 %v277
  %365 = vmatpush1.msra.mxu0 %v276
  %366 = vmatprep.subr.mxu0 0.0
  %367 = vmatpush1.msra.mxu0 0.0
  %368 = vmatprep.subr.mxu0 0.0
  %369 = vmatpush1.msra.mxu0 0.0
  %370 = vmatprep.subr.mxu0 0.0
  %371 = vmatpush1.msra.mxu0 0.0
  %372 = vmatprep.subr.mxu0 0.0
  %373 = vmatpush1.msra.mxu0 0.0
  %374 = vmatprep.subr.mxu0 0.0
  %375 = vmatpush1.msra.mxu0 0.0
  %376 = vmatprep.subr.mxu0 0.0
  %377 = vmatpush1.msra.mxu0 0.0
  %378 = vmatprep.subr.mxu0 0.0
  %379 = vmatpush1.msra.mxu0 0.0
  %380 = vmatprep.subr.mxu0 0.0
  %381 = vmatpush1.msra.mxu0 0.0
  %382 = vmatprep.subr.mxu0 0.0
  %383 = vmatpush1.msra.mxu0 0.0
  %384 = vmatprep.subr.mxu0 0.0
  %385 = vmatpush1.msra.mxu0 0.0
  %386 = vmatprep.subr.mxu0 0.0
  %387 = vmatpush1.msra.mxu0 0.0
  %388 = vmatprep.subr.mxu0 0.0
  %389 = vmatpush1.msra.mxu0 0.0
  %390 = vmatprep.subr.mxu0 0.0
  %391 = vmatpush1.msra.mxu0 0.0
  %392 = vmatprep.subr.mxu0 0.0
  %393 = vmatpush1.msra.mxu0 0.0
  %394 = vmatprep.subr.mxu0 0.0
  %395 = vmatpush1.msra.mxu0 0.0
  %396 = vmatprep.subr.mxu0 0.0
  %397 = vmatpush1.msra.mxu0 0.0
  %398 = vmatprep.subr.mxu0 0.0
  %399 = vmatpush1.msra.mxu0 0.0
  %400 = vmatprep.subr.mxu0 0.0
  %401 = vmatpush1.msra.mxu0 0.0
  %402 = vmatprep.subr.mxu0 0.0
  %403 = vmatpush1.msra.mxu0 0.0
  %404 = vmatprep.subr.mxu0 0.0
  %405 = vmatpush1.msra.mxu0 0.0
  %406 = vmatprep.subr.mxu0 0.0
  %407 = vmatpush1.msra.mxu0 0.0
  %408 = vmatprep.subr.mxu0 0.0
  %409 = vmatpush1.msra.mxu0 0.0
  %410 = vmatprep.subr.mxu0 0.0
  %411 = vmatpush1.msra.mxu0 0.0
  %412 = vmatprep.subr.mxu0 0.0
  %413 = vmatpush1.msra.mxu0 0.0
  %414 = vmatprep.subr.mxu0 0.0
  %415 = vmatpush1.msra.mxu0 0.0
  %416 = vmatprep.subr.mxu0 0.0
  %417 = vmatpush1.msra.mxu0 0.0
  %418 = vmatprep.subr.mxu0 0.0
  %419 = vmatpush1.msra.mxu0 0.0
  %420 = vmatprep.subr.mxu0 0.0
  %421 = vmatpush1.msra.mxu0 0.0
  %422 = vmatprep.mubr.f32.mxu0 0.0
  %423 = vmatmul.mubr.f32.gmra.mrb[0].mxu0 %v285
  %v424 = vpop.f32.mrb[0].mxu0
  %v425 = vadd.f32 %v281, %v424
  %v426 = vpop.f32.mrb[0].mxu0
  %v427 = vadd.f32 %v281, %v426
  %428 = vdwg.mxu0
  %v429 = vld [vmem:[%s5] sm:$0xff]
  %v430 = vld [vmem:[%s5 + $0x8] sm:$0xff]
  %v431 = vmul.f32 %v429, %v32
  %v432 = vmul.f32 %v430, %v33
  %v433 = vld [vmem:[%s6] sm:$0xff]
  %v434 = vld [vmem:[%s6 + $0x8] sm:$0xff]
  %v439 = vcombine.low %v354, %v356
  %v440 = vcombine.low %v425, %v427
  %v443 = vmul.f32 %v433, %v439
  %v444 = vmul.f32 %v434, %v440
  %v445 = vadd.f32 %v431, %v443
  %v446 = vadd.f32 %v432, %v444
  %s447 = scalar_lea.vmem %s2, 32
  %v448 = vld [vmem:[%s447] sm:$0xff]
  %v449 = vld [vmem:[%s447 + $0x8] sm:$0xff]
  %v450 = vld [vmem:[%s447 + $0x10] sm:$0xff]
  %v451 = vld [vmem:[%s447 + $0x18] sm:$0xff]
  %453 = vset.pattern.permute.xlu0 0
  %454 = vperm.xlu0 %453, %v448
  %v455 = vpop.permute.xlu0 %454
  %458 = vset.pattern.permute.xlu0 0
  %459 = vperm.xlu0 %458, %v449
  %v460 = vpop.permute.xlu0 %459
  %463 = vset.pattern.permute.xlu0 0
  %464 = vperm.xlu0 %463, %v450
  %v465 = vpop.permute.xlu0 %464
  %468 = vset.pattern.permute.xlu0 0
  %469 = vperm.xlu0 %468, %v451
  %v470 = vpop.permute.xlu0 %469
  %v474 = vcombine.high %v445, %v445
  %v475 = vcombine.high %v446, %v446
  %v476 = vsel %vm75, %v445, 0
  %v478 = vsel %vm75, %v474, 0
  %v480 = vsel %vm75, %v446, 0
  %v482 = vsel %vm75, %v475, 0
  %484 = vmatprep.subr.mxu0 %v478
  %485 = vmatpush1.msra.mxu0 %v476
  %486 = vmatprep.subr.mxu0 0.0
  %487 = vmatpush1.msra.mxu0 0.0
  %488 = vmatprep.subr.mxu0 0.0
  %489 = vmatpush1.msra.mxu0 0.0
  %490 = vmatprep.subr.mxu0 0.0
  %491 = vmatpush1.msra.mxu0 0.0
  %492 = vmatprep.subr.mxu0 0.0
  %493 = vmatpush1.msra.mxu0 0.0
  %494 = vmatprep.subr.mxu0 0.0
  %495 = vmatpush1.msra.mxu0 0.0
  %496 = vmatprep.subr.mxu0 0.0
  %497 = vmatpush1.msra.mxu0 0.0
  %498 = vmatprep.subr.mxu0 0.0
  %499 = vmatpush1.msra.mxu0 0.0
  %500 = vmatprep.subr.mxu0 0.0
  %501 = vmatpush1.msra.mxu0 0.0
  %502 = vmatprep.subr.mxu0 0.0
  %503 = vmatpush1.msra.mxu0 0.0
  %504 = vmatprep.subr.mxu0 0.0
  %505 = vmatpush1.msra.mxu0 0.0
  %506 = vmatprep.subr.mxu0 0.0
  %507 = vmatpush1.msra.mxu0 0.0
  %508 = vmatprep.subr.mxu0 0.0
  %509 = vmatpush1.msra.mxu0 0.0
  %510 = vmatprep.subr.mxu0 0.0
  %511 = vmatpush1.msra.mxu0 0.0
  %512 = vmatprep.subr.mxu0 0.0
  %513 = vmatpush1.msra.mxu0 0.0
  %514 = vmatprep.subr.mxu0 0.0
  %515 = vmatpush1.msra.mxu0 0.0
  %516 = vmatprep.subr.mxu0 0.0
  %517 = vmatpush1.msra.mxu0 0.0
  %518 = vmatprep.subr.mxu0 0.0
  %519 = vmatpush1.msra.mxu0 0.0
  %520 = vmatprep.subr.mxu0 0.0
  %521 = vmatpush1.msra.mxu0 0.0
  %522 = vmatprep.subr.mxu0 0.0
  %523 = vmatpush1.msra.mxu0 0.0
  %524 = vmatprep.subr.mxu0 0.0
  %525 = vmatpush1.msra.mxu0 0.0
  %526 = vmatprep.subr.mxu0 0.0
  %527 = vmatpush1.msra.mxu0 0.0
  %528 = vmatprep.subr.mxu0 0.0
  %529 = vmatpush1.msra.mxu0 0.0
  %530 = vmatprep.subr.mxu0 0.0
  %531 = vmatpush1.msra.mxu0 0.0
  %532 = vmatprep.subr.mxu0 0.0
  %533 = vmatpush1.msra.mxu0 0.0
  %534 = vmatprep.subr.mxu0 0.0
  %535 = vmatpush1.msra.mxu0 0.0
  %536 = vmatprep.subr.mxu0 0.0
  %537 = vmatpush1.msra.mxu0 0.0
  %538 = vmatprep.subr.mxu0 0.0
  %539 = vmatpush1.msra.mxu0 0.0
  %540 = vmatprep.subr.mxu0 0.0
  %541 = vmatpush1.msra.mxu0 0.0
  %542 = vmatprep.subr.mxu0 0.0
  %543 = vmatpush1.msra.mxu0 0.0
  %544 = vmatprep.subr.mxu0 0.0
  %545 = vmatpush1.msra.mxu0 0.0
  %546 = vmatprep.subr.mxu0 0.0
  %547 = vmatpush1.msra.mxu0 0.0
  %548 = vmatprep.mubr.f32.mxu0 0.0
  %549 = vmatmul.mubr.f32.gmra.mrb[0].mxu0 %v64
  %v550 = vpop.f32.mrb[0].mxu0
  %v551 = vadd.f32 %v455, %v550
  %v552 = vpop.f32.mrb[0].mxu0
  %v553 = vadd.f32 %v455, %v552
  %554 = vmatprep.mubr.f32.mxu0 0.0
  %555 = vmatmul.mubr.f32.gmra.mrb[0].mxu0 %v67
  %v556 = vpop.f32.mrb[0].mxu0
  %v557 = vadd.f32 %v460, %v556
  %v558 = vpop.f32.mrb[0].mxu0
  %v559 = vadd.f32 %v460, %v558
  %560 = vmatprep.mubr.f32.mxu0 0.0
  %561 = vmatmul.mubr.f32.gmra.mrb[0].mxu0 %v70
  %v562 = vpop.f32.mrb[0].mxu0
  %v563 = vadd.f32 %v465, %v562
  %v564 = vpop.f32.mrb[0].mxu0
  %v565 = vadd.f32 %v465, %v564
  %566 = vmatprep.mubr.f32.mxu0 0.0
  %567 = vmatmul.mubr.f32.gmra.mrb[0].mxu0 %v73
  %v568 = vpop.f32.mrb[0].mxu0
  %v569 = vadd.f32 %v470, %v568
  %v570 = vpop.f32.mrb[0].mxu0
  %v571 = vadd.f32 %v470, %v570
  %572 = vdwg.mxu0
  %573 = vmatprep.subr.mxu0 %v482
  %574 = vmatpush1.msra.mxu0 %v480
  %575 = vmatprep.subr.mxu0 0.0
  %576 = vmatpush1.msra.mxu0 0.0
  %577 = vmatprep.subr.mxu0 0.0
  %578 = vmatpush1.msra.mxu0 0.0
  %579 = vmatprep.subr.mxu0 0.0
  %580 = vmatpush1.msra.mxu0 0.0
  %581 = vmatprep.subr.mxu0 0.0
  %582 = vmatpush1.msra.mxu0 0.0
  %583 = vmatprep.subr.mxu0 0.0
  %584 = vmatpush1.msra.mxu0 0.0
  %585 = vmatprep.subr.mxu0 0.0
  %586 = vmatpush1.msra.mxu0 0.0
  %587 = vmatprep.subr.mxu0 0.0
  %588 = vmatpush1.msra.mxu0 0.0
  %589 = vmatprep.subr.mxu0 0.0
  %590 = vmatpush1.msra.mxu0 0.0
  %591 = vmatprep.subr.mxu0 0.0
  %592 = vmatpush1.msra.mxu0 0.0
  %593 = vmatprep.subr.mxu0 0.0
  %594 = vmatpush1.msra.mxu0 0.0
  %595 = vmatprep.subr.mxu0 0.0
  %596 = vmatpush1.msra.mxu0 0.0
  %597 = vmatprep.subr.mxu0 0.0
  %598 = vmatpush1.msra.mxu0 0.0
  %599 = vmatprep.subr.mxu0 0.0
  %600 = vmatpush1.msra.mxu0 0.0
  %601 = vmatprep.subr.mxu0 0.0
  %602 = vmatpush1.msra.mxu0 0.0
  %603 = vmatprep.subr.mxu0 0.0
  %604 = vmatpush1.msra.mxu0 0.0
  %605 = vmatprep.subr.mxu0 0.0
  %606 = vmatpush1.msra.mxu0 0.0
  %607 = vmatprep.subr.mxu0 0.0
  %608 = vmatpush1.msra.mxu0 0.0
  %609 = vmatprep.subr.mxu0 0.0
  %610 = vmatpush1.msra.mxu0 0.0
  %611 = vmatprep.subr.mxu0 0.0
  %612 = vmatpush1.msra.mxu0 0.0
  %613 = vmatprep.subr.mxu0 0.0
  %614 = vmatpush1.msra.mxu0 0.0
  %615 = vmatprep.subr.mxu0 0.0
  %616 = vmatpush1.msra.mxu0 0.0
  %617 = vmatprep.subr.mxu0 0.0
  %618 = vmatpush1.msra.mxu0 0.0
  %619 = vmatprep.subr.mxu0 0.0
  %620 = vmatpush1.msra.mxu0 0.0
  %621 = vmatprep.subr.mxu0 0.0
  %622 = vmatpush1.msra.mxu0 0.0
  %623 = vmatprep.subr.mxu0 0.0
  %624 = vmatpush1.msra.mxu0 0.0
  %625 = vmatprep.subr.mxu0 0.0
  %626 = vmatpush1.msra.mxu0 0.0
  %627 = vmatprep.subr.mxu0 0.0
  %628 = vmatpush1.msra.mxu0 0.0
  %629 = vmatprep.subr.mxu0 0.0
  %630 = vmatpush1.msra.mxu0 0.0
  %631 = vmatprep.subr.mxu0 0.0
  %632 = vmatpush1.msra.mxu0 0.0
  %633 = vmatprep.subr.mxu0 0.0
  %634 = vmatpush1.msra.mxu0 0.0
  %635 = vmatprep.subr.mxu0 0.0
  %636 = vmatpush1.msra.mxu0 0.0
  %637 = vmatprep.mubr.f32.mxu0 0.0
  %638 = vmatmul.mubr.f32.gmra.mrb[0].mxu0 %v64
  %v639 = vpop.f32.mrb[0].mxu0
  %v640 = vadd.f32 %v455, %v639
  %v641 = vpop.f32.mrb[0].mxu0
  %v642 = vadd.f32 %v455, %v641
  %643 = vmatprep.mubr.f32.mxu0 0.0
  %644 = vmatmul.mubr.f32.gmra.mrb[0].mxu0 %v67
  %v645 = vpop.f32.mrb[0].mxu0
  %v646 = vadd.f32 %v460, %v645
  %v647 = vpop.f32.mrb[0].mxu0
  %v648 = vadd.f32 %v460, %v647
  %649 = vmatprep.mubr.f32.mxu0 0.0
  %650 = vmatmul.mubr.f32.gmra.mrb[0].mxu0 %v70
  %v651 = vpop.f32.mrb[0].mxu0
  %v652 = vadd.f32 %v465, %v651
  %v653 = vpop.f32.mrb[0].mxu0
  %v654 = vadd.f32 %v465, %v653
  %655 = vmatprep.mubr.f32.mxu0 0.0
  %656 = vmatmul.mubr.f32.gmra.mrb[0].mxu0 %v73
  %v657 = vpop.f32.mrb[0].mxu0
  %v658 = vadd.f32 %v470, %v657
  %v659 = vpop.f32.mrb[0].mxu0
  %v660 = vadd.f32 %v470, %v659
  %661 = vdwg.mxu0
  %v662 = vtanh.pop %v551
  %v663 = vtanh.pop %v553
  %v664 = vtanh.pop %v640
  %v665 = vtanh.pop %v642
  %v666 = vtanh.pop %v557
  %v667 = vtanh.pop %v559
  %v668 = vtanh.pop %v646
  %v669 = vtanh.pop %v648
  %v670 = vtanh.pop %v563
  %v671 = vtanh.pop %v565
  %v672 = vtanh.pop %v652
  %v673 = vtanh.pop %v654
  %v674 = vtanh.pop %v569
  %v675 = vtanh.pop %v571
  %v676 = vtanh.pop %v658
  %v677 = vtanh.pop %v660
  %678 = vmatprep.subr.mxu0 %v663
  %679 = vmatpush1.msra.mxu0 %v662
  %680 = vmatprep.subr.mxu0 %v667
  %681 = vmatpush1.msra.mxu0 %v666
  %682 = vmatprep.subr.mxu0 %v671
  %683 = vmatpush1.msra.mxu0 %v670
  %684 = vmatprep.subr.mxu0 %v675
  %685 = vmatpush1.msra.mxu0 %v674
  %686 = vmatprep.subr.mxu0 0.0
  %687 = vmatpush1.msra.mxu0 0.0
  %688 = vmatprep.subr.mxu0 0.0
  %689 = vmatpush1.msra.mxu0 0.0
  %690 = vmatprep.subr.mxu0 0.0
  %691 = vmatpush1.msra.mxu0 0.0
  %692 = vmatprep.subr.mxu0 0.0
  %693 = vmatpush1.msra.mxu0 0.0
  %694 = vmatprep.subr.mxu0 0.0
  %695 = vmatpush1.msra.mxu0 0.0
  %696 = vmatprep.subr.mxu0 0.0
  %697 = vmatpush1.msra.mxu0 0.0
  %698 = vmatprep.subr.mxu0 0.0
  %699 = vmatpush1.msra.mxu0 0.0
  %700 = vmatprep.subr.mxu0 0.0
  %701 = vmatpush1.msra.mxu0 0.0
  %702 = vmatprep.subr.mxu0 0.0
  %703 = vmatpush1.msra.mxu0 0.0
  %704 = vmatprep.subr.mxu0 0.0
  %705 = vmatpush1.msra.mxu0 0.0
  %706 = vmatprep.subr.mxu0 0.0
  %707 = vmatpush1.msra.mxu0 0.0
  %708 = vmatprep.subr.mxu0 0.0
  %709 = vmatpush1.msra.mxu0 0.0
  %710 = vmatprep.subr.mxu0 0.0
  %711 = vmatpush1.msra.mxu0 0.0
  %712 = vmatprep.subr.mxu0 0.0
  %713 = vmatpush1.msra.mxu0 0.0
  %714 = vmatprep.subr.mxu0 0.0
  %715 = vmatpush1.msra.mxu0 0.0
  %716 = vmatprep.subr.mxu0 0.0
  %717 = vmatpush1.msra.mxu0 0.0
  %718 = vmatprep.subr.mxu0 0.0
  %719 = vmatpush1.msra.mxu0 0.0
  %720 = vmatprep.subr.mxu0 0.0
  %721 = vmatpush1.msra.mxu0 0.0
  %722 = vmatprep.subr.mxu0 0.0
  %723 = vmatpush1.msra.mxu0 0.0
  %724 = vmatprep.subr.mxu0 0.0
  %725 = vmatpush1.msra.mxu0 0.0
  %726 = vmatprep.subr.mxu0 0.0
  %727 = vmatpush1.msra.mxu0 0.0
  %728 = vmatprep.subr.mxu0 0.0
  %729 = vmatpush1.msra.mxu0 0.0
  %730 = vmatprep.subr.mxu0 0.0
  %731 = vmatpush1.msra.mxu0 0.0
  %732 = vmatprep.subr.mxu0 0.0
  %733 = vmatpush1.msra.mxu0 0.0
  %734 = vmatprep.subr.mxu0 0.0
  %735 = vmatpush1.msra.mxu0 0.0
  %736 = vmatprep.subr.mxu0 0.0
  %737 = vmatpush1.msra.mxu0 0.0
  %738 = vmatprep.subr.mxu0 0.0
  %739 = vmatpush1.msra.mxu0 0.0
  %740 = vmatprep.subr.mxu0 0.0
  %741 = vmatpush1.msra.mxu0 0.0
  %742 = vmatprep.mubr.f32.mxu0 0.0
  %743 = vmatmul.mubr.f32.gmra.mrb[0].mxu0 %v285
  %v744 = vpop.f32.mrb[0].mxu0
  %v745 = vadd.f32 %v281, %v744
  %v746 = vpop.f32.mrb[0].mxu0
  %v747 = vadd.f32 %v281, %v746
  %748 = vdwg.mxu0
  %749 = vmatprep.subr.mxu0 %v665
  %750 = vmatpush1.msra.mxu0 %v664
  %751 = vmatprep.subr.mxu0 %v669
  %752 = vmatpush1.msra.mxu0 %v668
  %753 = vmatprep.subr.mxu0 %v673
  %754 = vmatpush1.msra.mxu0 %v672
  %755 = vmatprep.subr.mxu0 %v677
  %756 = vmatpush1.msra.mxu0 %v676
  %757 = vmatprep.subr.mxu0 0.0
  %758 = vmatpush1.msra.mxu0 0.0
  %759 = vmatprep.subr.mxu0 0.0
  %760 = vmatpush1.msra.mxu0 0.0
  %761 = vmatprep.subr.mxu0 0.0
  %762 = vmatpush1.msra.mxu0 0.0
  %763 = vmatprep.subr.mxu0 0.0
  %764 = vmatpush1.msra.mxu0 0.0
  %765 = vmatprep.subr.mxu0 0.0
  %766 = vmatpush1.msra.mxu0 0.0
  %767 = vmatprep.subr.mxu0 0.0
  %768 = vmatpush1.msra.mxu0 0.0
  %769 = vmatprep.subr.mxu0 0.0
  %770 = vmatpush1.msra.mxu0 0.0
  %771 = vmatprep.subr.mxu0 0.0
  %772 = vmatpush1.msra.mxu0 0.0
  %773 = vmatprep.subr.mxu0 0.0
  %774 = vmatpush1.msra.mxu0 0.0
  %775 = vmatprep.subr.mxu0 0.0
  %776 = vmatpush1.msra.mxu0 0.0
  %777 = vmatprep.subr.mxu0 0.0
  %778 = vmatpush1.msra.mxu0 0.0
  %779 = vmatprep.subr.mxu0 0.0
  %780 = vmatpush1.msra.mxu0 0.0
  %781 = vmatprep.subr.mxu0 0.0
  %782 = vmatpush1.msra.mxu0 0.0
  %783 = vmatprep.subr.mxu0 0.0
  %784 = vmatpush1.msra.mxu0 0.0
  %785 = vmatprep.subr.mxu0 0.0
  %786 = vmatpush1.msra.mxu0 0.0
  %787 = vmatprep.subr.mxu0 0.0
  %788 = vmatpush1.msra.mxu0 0.0
  %789 = vmatprep.subr.mxu0 0.0
  %790 = vmatpush1.msra.mxu0 0.0
  %791 = vmatprep.subr.mxu0 0.0
  %792 = vmatpush1.msra.mxu0 0.0
  %793 = vmatprep.subr.mxu0 0.0
  %794 = vmatpush1.msra.mxu0 0.0
  %795 = vmatprep.subr.mxu0 0.0
  %796 = vmatpush1.msra.mxu0 0.0
  %797 = vmatprep.subr.mxu0 0.0
  %798 = vmatpush1.msra.mxu0 0.0
  %799 = vmatprep.subr.mxu0 0.0
  %800 = vmatpush1.msra.mxu0 0.0
  %801 = vmatprep.subr.mxu0 0.0
  %802 = vmatpush1.msra.mxu0 0.0
  %803 = vmatprep.subr.mxu0 0.0
  %804 = vmatpush1.msra.mxu0 0.0
  %805 = vmatprep.subr.mxu0 0.0
  %806 = vmatpush1.msra.mxu0 0.0
  %807 = vmatprep.subr.mxu0 0.0
  %808 = vmatpush1.msra.mxu0 0.0
  %809 = vmatprep.subr.mxu0 0.0
  %810 = vmatpush1.msra.mxu0 0.0
  %811 = vmatprep.subr.mxu0 0.0
  %812 = vmatpush1.msra.mxu0 0.0
  %813 = vmatprep.mubr.f32.mxu0 0.0
  %814 = vmatmul.mubr.f32.gmra.mrb[0].mxu0 %v285
  %v815 = vpop.f32.mrb[0].mxu0
  %v816 = vadd.f32 %v281, %v815
  %v817 = vpop.f32.mrb[0].mxu0
  %v818 = vadd.f32 %v281, %v817
  %819 = vdwg.mxu0
  %s820 = scalar_lea.vmem %s5, 16
  %v821 = vld [vmem:[%s820] sm:$0xff]
  %v822 = vld [vmem:[%s820 + $0x8] sm:$0xff]
  %v823 = vmul.f32 %v821, %v445
  %v824 = vmul.f32 %v822, %v446
  %s825 = scalar_lea.vmem %s6, 16
  %v826 = vld [vmem:[%s825] sm:$0xff]
  %v827 = vld [vmem:[%s825 + $0x8] sm:$0xff]
  %v832 = vcombine.low %v745, %v747
  %v833 = vcombine.low %v816, %v818
  %v836 = vmul.f32 %v826, %v832
  %v837 = vmul.f32 %v827, %v833
  %v838 = vadd.f32 %v823, %v836
  %v839 = vadd.f32 %v824, %v837
  %s840 = scalar_lea.vmem %s2, 64
  %v841 = vld [vmem:[%s840] sm:$0xff]
  %v842 = vld [vmem:[%s840 + $0x8] sm:$0xff]
  %v843 = vld [vmem:[%s840 + $0x10] sm:$0xff]
  %v844 = vld [vmem:[%s840 + $0x18] sm:$0xff]
  %846 = vset.pattern.permute.xlu0 0
  %847 = vperm.xlu0 %846, %v841
  %v848 = vpop.permute.xlu0 %847
  %851 = vset.pattern.permute.xlu0 0
  %852 = vperm.xlu0 %851, %v842
  %v853 = vpop.permute.xlu0 %852
  %856 = vset.pattern.permute.xlu0 0
  %857 = vperm.xlu0 %856, %v843
  %v858 = vpop.permute.xlu0 %857
  %861 = vset.pattern.permute.xlu0 0
  %862 = vperm.xlu0 %861, %v844
  %v863 = vpop.permute.xlu0 %862
  %v867 = vcombine.high %v838, %v838
  %v868 = vcombine.high %v839, %v839
  %v869 = vsel %vm75, %v838, 0
  %v871 = vsel %vm75, %v867, 0
  %v873 = vsel %vm75, %v839, 0
  %v875 = vsel %vm75, %v868, 0
  %877 = vmatprep.subr.mxu0 %v871
  %878 = vmatpush1.msra.mxu0 %v869
  %879 = vmatprep.subr.mxu0 0.0
  %880 = vmatpush1.msra.mxu0 0.0
  %881 = vmatprep.subr.mxu0 0.0
  %882 = vmatpush1.msra.mxu0 0.0
  %883 = vmatprep.subr.mxu0 0.0
  %884 = vmatpush1.msra.mxu0 0.0
  %885 = vmatprep.subr.mxu0 0.0
  %886 = vmatpush1.msra.mxu0 0.0
  %887 = vmatprep.subr.mxu0 0.0
  %888 = vmatpush1.msra.mxu0 0.0
  %889 = vmatprep.subr.mxu0 0.0
  %890 = vmatpush1.msra.mxu0 0.0
  %891 = vmatprep.subr.mxu0 0.0
  %892 = vmatpush1.msra.mxu0 0.0
  %893 = vmatprep.subr.mxu0 0.0
  %894 = vmatpush1.msra.mxu0 0.0
  %895 = vmatprep.subr.mxu0 0.0
  %896 = vmatpush1.msra.mxu0 0.0
  %897 = vmatprep.subr.mxu0 0.0
  %898 = vmatpush1.msra.mxu0 0.0
  %899 = vmatprep.subr.mxu0 0.0
  %900 = vmatpush1.msra.mxu0 0.0
  %901 = vmatprep.subr.mxu0 0.0
  %902 = vmatpush1.msra.mxu0 0.0
  %903 = vmatprep.subr.mxu0 0.0
  %904 = vmatpush1.msra.mxu0 0.0
  %905 = vmatprep.subr.mxu0 0.0
  %906 = vmatpush1.msra.mxu0 0.0
  %907 = vmatprep.subr.mxu0 0.0
  %908 = vmatpush1.msra.mxu0 0.0
  %909 = vmatprep.subr.mxu0 0.0
  %910 = vmatpush1.msra.mxu0 0.0
  %911 = vmatprep.subr.mxu0 0.0
  %912 = vmatpush1.msra.mxu0 0.0
  %913 = vmatprep.subr.mxu0 0.0
  %914 = vmatpush1.msra.mxu0 0.0
  %915 = vmatprep.subr.mxu0 0.0
  %916 = vmatpush1.msra.mxu0 0.0
  %917 = vmatprep.subr.mxu0 0.0
  %918 = vmatpush1.msra.mxu0 0.0
  %919 = vmatprep.subr.mxu0 0.0
  %920 = vmatpush1.msra.mxu0 0.0
  %921 = vmatprep.subr.mxu0 0.0
  %922 = vmatpush1.msra.mxu0 0.0
  %923 = vmatprep.subr.mxu0 0.0
  %924 = vmatpush1.msra.mxu0 0.0
  %925 = vmatprep.subr.mxu0 0.0
  %926 = vmatpush1.msra.mxu0 0.0
  %927 = vmatprep.subr.mxu0 0.0
  %928 = vmatpush1.msra.mxu0 0.0
  %929 = vmatprep.subr.mxu0 0.0
  %930 = vmatpush1.msra.mxu0 0.0
  %931 = vmatprep.subr.mxu0 0.0
  %932 = vmatpush1.msra.mxu0 0.0
  %933 = vmatprep.subr.mxu0 0.0
  %934 = vmatpush1.msra.mxu0 0.0
  %935 = vmatprep.subr.mxu0 0.0
  %936 = vmatpush1.msra.mxu0 0.0
  %937 = vmatprep.subr.mxu0 0.0
  %938 = vmatpush1.msra.mxu0 0.0
  %939 = vmatprep.subr.mxu0 0.0
  %940 = vmatpush1.msra.mxu0 0.0
  %941 = vmatprep.mubr.f32.mxu0 0.0
  %942 = vmatmul.mubr.f32.gmra.mrb[0].mxu0 %v64
  %v943 = vpop.f32.mrb[0].mxu0
  %v944 = vadd.f32 %v848, %v943
  %v945 = vpop.f32.mrb[0].mxu0
  %v946 = vadd.f32 %v848, %v945
  %947 = vmatprep.mubr.f32.mxu0 0.0
  %948 = vmatmul.mubr.f32.gmra.mrb[0].mxu0 %v67
  %v949 = vpop.f32.mrb[0].mxu0
  %v950 = vadd.f32 %v853, %v949
  %v951 = vpop.f32.mrb[0].mxu0
  %v952 = vadd.f32 %v853, %v951
  %953 = vmatprep.mubr.f32.mxu0 0.0
  %954 = vmatmul.mubr.f32.gmra.mrb[0].mxu0 %v70
  %v955 = vpop.f32.mrb[0].mxu0
  %v956 = vadd.f32 %v858, %v955
  %v957 = vpop.f32.mrb[0].mxu0
  %v958 = vadd.f32 %v858, %v957
  %959 = vmatprep.mubr.f32.mxu0 0.0
  %960 = vmatmul.mubr.f32.gmra.mrb[0].mxu0 %v73
  %v961 = vpop.f32.mrb[0].mxu0
  %v962 = vadd.f32 %v863, %v961
  %v963 = vpop.f32.mrb[0].mxu0
  %v964 = vadd.f32 %v863, %v963
  %965 = vdwg.mxu0
  %966 = vmatprep.subr.mxu0 %v875
  %967 = vmatpush1.msra.mxu0 %v873
  %968 = vmatprep.subr.mxu0 0.0
  %969 = vmatpush1.msra.mxu0 0.0
  %970 = vmatprep.subr.mxu0 0.0
  %971 = vmatpush1.msra.mxu0 0.0
  %972 = vmatprep.subr.mxu0 0.0
  %973 = vmatpush1.msra.mxu0 0.0
  %974 = vmatprep.subr.mxu0 0.0
  %975 = vmatpush1.msra.mxu0 0.0
  %976 = vmatprep.subr.mxu0 0.0
  %977 = vmatpush1.msra.mxu0 0.0
  %978 = vmatprep.subr.mxu0 0.0
  %979 = vmatpush1.msra.mxu0 0.0
  %980 = vmatprep.subr.mxu0 0.0
  %981 = vmatpush1.msra.mxu0 0.0
  %982 = vmatprep.subr.mxu0 0.0
  %983 = vmatpush1.msra.mxu0 0.0
  %984 = vmatprep.subr.mxu0 0.0
  %985 = vmatpush1.msra.mxu0 0.0
  %986 = vmatprep.subr.mxu0 0.0
  %987 = vmatpush1.msra.mxu0 0.0
  %988 = vmatprep.subr.mxu0 0.0
  %989 = vmatpush1.msra.mxu0 0.0
  %990 = vmatprep.subr.mxu0 0.0
  %991 = vmatpush1.msra.mxu0 0.0
  %992 = vmatprep.subr.mxu0 0.0
  %993 = vmatpush1.msra.mxu0 0.0
  %994 = vmatprep.subr.mxu0 0.0
  %995 = vmatpush1.msra.mxu0 0.0
  %996 = vmatprep.subr.mxu0 0.0
  %997 = vmatpush1.msra.mxu0 0.0
  %998 = vmatprep.subr.mxu0 0.0
  %999 = vmatpush1.msra.mxu0 0.0
  %1000 = vmatprep.subr.mxu0 0.0
  %1001 = vmatpush1.msra.mxu0 0.0
  %1002 = vmatprep.subr.mxu0 0.0
  %1003 = vmatpush1.msra.mxu0 0.0
  %1004 = vmatprep.subr.mxu0 0.0
  %1005 = vmatpush1.msra.mxu0 0.0
  %1006 = vmatprep.subr.mxu0 0.0
  %1007 = vmatpush1.msra.mxu0 0.0
  %1008 = vmatprep.subr.mxu0 0.0
  %1009 = vmatpush1.msra.mxu0 0.0
  %1010 = vmatprep.subr.mxu0 0.0
  %1011 = vmatpush1.msra.mxu0 0.0
  %1012 = vmatprep.subr.mxu0 0.0
  %1013 = vmatpush1.msra.mxu0 0.0
  %1014 = vmatprep.subr.mxu0 0.0
  %1015 = vmatpush1.msra.mxu0 0.0
  %1016 = vmatprep.subr.mxu0 0.0
  %1017 = vmatpush1.msra.mxu0 0.0
  %1018 = vmatprep.subr.mxu0 0.0
  %1019 = vmatpush1.msra.mxu0 0.0
  %1020 = vmatprep.subr.mxu0 0.0
  %1021 = vmatpush1.msra.mxu0 0.0
  %1022 = vmatprep.subr.mxu0 0.0
  %1023 = vmatpush1.msra.mxu0 0.0
  %1024 = vmatprep.subr.mxu0 0.0
  %1025 = vmatpush1.msra.mxu0 0.0
  %1026 = vmatprep.subr.mxu0 0.0
  %1027 = vmatpush1.msra.mxu0 0.0
  %1028 = vmatprep.subr.mxu0 0.0
  %1029 = vmatpush1.msra.mxu0 0.0
  %1030 = vmatprep.mubr.f32.mxu0 0.0
  %1031 = vmatmul.mubr.f32.gmra.mrb[0].mxu0 %v64
  %v1032 = vpop.f32.mrb[0].mxu0
  %v1033 = vadd.f32 %v848, %v1032
  %v1034 = vpop.f32.mrb[0].mxu0
  %v1035 = vadd.f32 %v848, %v1034
  %1036 = vmatprep.mubr.f32.mxu0 0.0
  %1037 = vmatmul.mubr.f32.gmra.mrb[0].mxu0 %v67
  %v1038 = vpop.f32.mrb[0].mxu0
  %v1039 = vadd.f32 %v853, %v1038
  %v1040 = vpop.f32.mrb[0].mxu0
  %v1041 = vadd.f32 %v853, %v1040
  %1042 = vmatprep.mubr.f32.mxu0 0.0
  %1043 = vmatmul.mubr.f32.gmra.mrb[0].mxu0 %v70
  %v1044 = vpop.f32.mrb[0].mxu0
  %v1045 = vadd.f32 %v858, %v1044
  %v1046 = vpop.f32.mrb[0].mxu0
  %v1047 = vadd.f32 %v858, %v1046
  %1048 = vmatprep.mubr.f32.mxu0 0.0
  %1049 = vmatmul.mubr.f32.gmra.mrb[0].mxu0 %v73
  %v1050 = vpop.f32.mrb[0].mxu0
  %v1051 = vadd.f32 %v863, %v1050
  %v1052 = vpop.f32.mrb[0].mxu0
  %v1053 = vadd.f32 %v863, %v1052
  %1054 = vdwg.mxu0
  %v1055 = vtanh.pop %v944
  %v1056 = vtanh.pop %v946
  %v1057 = vtanh.pop %v1033
  %v1058 = vtanh.pop %v1035
  %v1059 = vtanh.pop %v950
  %v1060 = vtanh.pop %v952
  %v1061 = vtanh.pop %v1039
  %v1062 = vtanh.pop %v1041
  %v1063 = vtanh.pop %v956
  %v1064 = vtanh.pop %v958
  %v1065 = vtanh.pop %v1045
  %v1066 = vtanh.pop %v1047
  %v1067 = vtanh.pop %v962
  %v1068 = vtanh.pop %v964
  %v1069 = vtanh.pop %v1051
  %v1070 = vtanh.pop %v1053
  %1071 = vmatprep.subr.mxu0 %v1056
  %1072 = vmatpush1.msra.mxu0 %v1055
  %1073 = vmatprep.subr.mxu0 %v1060
  %1074 = vmatpush1.msra.mxu0 %v1059
  %1075 = vmatprep.subr.mxu0 %v1064
  %1076 = vmatpush1.msra.mxu0 %v1063
  %1077 = vmatprep.subr.mxu0 %v1068
  %1078 = vmatpush1.msra.mxu0 %v1067
  %1079 = vmatprep.subr.mxu0 0.0
  %1080 = vmatpush1.msra.mxu0 0.0
  %1081 = vmatprep.subr.mxu0 0.0
  %1082 = vmatpush1.msra.mxu0 0.0
  %1083 = vmatprep.subr.mxu0 0.0
  %1084 = vmatpush1.msra.mxu0 0.0
  %1085 = vmatprep.subr.mxu0 0.0
  %1086 = vmatpush1.msra.mxu0 0.0
  %1087 = vmatprep.subr.mxu0 0.0
  %1088 = vmatpush1.msra.mxu0 0.0
  %1089 = vmatprep.subr.mxu0 0.0
  %1090 = vmatpush1.msra.mxu0 0.0
  %1091 = vmatprep.subr.mxu0 0.0
  %1092 = vmatpush1.msra.mxu0 0.0
  %1093 = vmatprep.subr.mxu0 0.0
  %1094 = vmatpush1.msra.mxu0 0.0
  %1095 = vmatprep.subr.mxu0 0.0
  %1096 = vmatpush1.msra.mxu0 0.0
  %1097 = vmatprep.subr.mxu0 0.0
  %1098 = vmatpush1.msra.mxu0 0.0
  %1099 = vmatprep.subr.mxu0 0.0
  %1100 = vmatpush1.msra.mxu0 0.0
  %1101 = vmatprep.subr.mxu0 0.0
  %1102 = vmatpush1.msra.mxu0 0.0
  %1103 = vmatprep.subr.mxu0 0.0
  %1104 = vmatpush1.msra.mxu0 0.0
  %1105 = vmatprep.subr.mxu0 0.0
  %1106 = vmatpush1.msra.mxu0 0.0
  %1107 = vmatprep.subr.mxu0 0.0
  %1108 = vmatpush1.msra.mxu0 0.0
  %1109 = vmatprep.subr.mxu0 0.0
  %1110 = vmatpush1.msra.mxu0 0.0
  %1111 = vmatprep.subr.mxu0 0.0
  %1112 = vmatpush1.msra.mxu0 0.0
  %1113 = vmatprep.subr.mxu0 0.0
  %1114 = vmatpush1.msra.mxu0 0.0
  %1115 = vmatprep.subr.mxu0 0.0
  %1116 = vmatpush1.msra.mxu0 0.0
  %1117 = vmatprep.subr.mxu0 0.0
  %1118 = vmatpush1.msra.mxu0 0.0
  %1119 = vmatprep.subr.mxu0 0.0
  %1120 = vmatpush1.msra.mxu0 0.0
  %1121 = vmatprep.subr.mxu0 0.0
  %1122 = vmatpush1.msra.mxu0 0.0
  %1123 = vmatprep.subr.mxu0 0.0
  %1124 = vmatpush1.msra.mxu0 0.0
  %1125 = vmatprep.subr.mxu0 0.0
  %1126 = vmatpush1.msra.mxu0 0.0
  %1127 = vmatprep.subr.mxu0 0.0
  %1128 = vmatpush1.msra.mxu0 0.0
  %1129 = vmatprep.subr.mxu0 0.0
  %1130 = vmatpush1.msra.mxu0 0.0
  %1131 = vmatprep.subr.mxu0 0.0
  %1132 = vmatpush1.msra.mxu0 0.0
  %1133 = vmatprep.subr.mxu0 0.0
  %1134 = vmatpush1.msra.mxu0 0.0
  %1135 = vmatprep.mubr.f32.mxu0 0.0
  %1136 = vmatmul.mubr.f32.gmra.mrb[0].mxu0 %v285
  %v1137 = vpop.f32.mrb[0].mxu0
  %v1138 = vadd.f32 %v281, %v1137
  %v1139 = vpop.f32.mrb[0].mxu0
  %v1140 = vadd.f32 %v281, %v1139
  %1141 = vdwg.mxu0
  %1142 = vmatprep.subr.mxu0 %v1058
  %1143 = vmatpush1.msra.mxu0 %v1057
  %1144 = vmatprep.subr.mxu0 %v1062
  %1145 = vmatpush1.msra.mxu0 %v1061
  %1146 = vmatprep.subr.mxu0 %v1066
  %1147 = vmatpush1.msra.mxu0 %v1065
  %1148 = vmatprep.subr.mxu0 %v1070
  %1149 = vmatpush1.msra.mxu0 %v1069
  %1150 = vmatprep.subr.mxu0 0.0
  %1151 = vmatpush1.msra.mxu0 0.0
  %1152 = vmatprep.subr.mxu0 0.0
  %1153 = vmatpush1.msra.mxu0 0.0
  %1154 = vmatprep.subr.mxu0 0.0
  %1155 = vmatpush1.msra.mxu0 0.0
  %1156 = vmatprep.subr.mxu0 0.0
  %1157 = vmatpush1.msra.mxu0 0.0
  %1158 = vmatprep.subr.mxu0 0.0
  %1159 = vmatpush1.msra.mxu0 0.0
  %1160 = vmatprep.subr.mxu0 0.0
  %1161 = vmatpush1.msra.mxu0 0.0
  %1162 = vmatprep.subr.mxu0 0.0
  %1163 = vmatpush1.msra.mxu0 0.0
  %1164 = vmatprep.subr.mxu0 0.0
  %1165 = vmatpush1.msra.mxu0 0.0
  %1166 = vmatprep.subr.mxu0 0.0
  %1167 = vmatpush1.msra.mxu0 0.0
  %1168 = vmatprep.subr.mxu0 0.0
  %1169 = vmatpush1.msra.mxu0 0.0
  %1170 = vmatprep.subr.mxu0 0.0
  %1171 = vmatpush1.msra.mxu0 0.0
  %1172 = vmatprep.subr.mxu0 0.0
  %1173 = vmatpush1.msra.mxu0 0.0
  %1174 = vmatprep.subr.mxu0 0.0
  %1175 = vmatpush1.msra.mxu0 0.0
  %1176 = vmatprep.subr.mxu0 0.0
  %1177 = vmatpush1.msra.mxu0 0.0
  %1178 = vmatprep.subr.mxu0 0.0
  %1179 = vmatpush1.msra.mxu0 0.0
  %1180 = vmatprep.subr.mxu0 0.0
  %1181 = vmatpush1.msra.mxu0 0.0
  %1182 = vmatprep.subr.mxu0 0.0
  %1183 = vmatpush1.msra.mxu0 0.0
  %1184 = vmatprep.subr.mxu0 0.0
  %1185 = vmatpush1.msra.mxu0 0.0
  %1186 = vmatprep.subr.mxu0 0.0
  %1187 = vmatpush1.msra.mxu0 0.0
  %1188 = vmatprep.subr.mxu0 0.0
  %1189 = vmatpush1.msra.mxu0 0.0
  %1190 = vmatprep.subr.mxu0 0.0
  %1191 = vmatpush1.msra.mxu0 0.0
  %1192 = vmatprep.subr.mxu0 0.0
  %1193 = vmatpush1.msra.mxu0 0.0
  %1194 = vmatprep.subr.mxu0 0.0
  %1195 = vmatpush1.msra.mxu0 0.0
  %1196 = vmatprep.subr.mxu0 0.0
  %1197 = vmatpush1.msra.mxu0 0.0
  %1198 = vmatprep.subr.mxu0 0.0
  %1199 = vmatpush1.msra.mxu0 0.0
  %1200 = vmatprep.subr.mxu0 0.0
  %1201 = vmatpush1.msra.mxu0 0.0
  %1202 = vmatprep.subr.mxu0 0.0
  %1203 = vmatpush1.msra.mxu0 0.0
  %1204 = vmatprep.subr.mxu0 0.0
  %1205 = vmatpush1.msra.mxu0 0.0
  %1206 = vmatprep.mubr.f32.mxu0 0.0
  %1207 = vmatmul.mubr.f32.gmra.mrb[0].mxu0 %v285
  %v1208 = vpop.f32.mrb[0].mxu0
  %v1209 = vadd.f32 %v281, %v1208
  %v1210 = vpop.f32.mrb[0].mxu0
  %v1211 = vadd.f32 %v281, %v1210
  %1212 = vdwg.mxu0
  %s1213 = scalar_lea.vmem %s5, 32
  %v1214 = vld [vmem:[%s1213] sm:$0xff]
  %v1215 = vld [vmem:[%s1213 + $0x8] sm:$0xff]
  %v1216 = vmul.f32 %v1214, %v838
  %v1217 = vmul.f32 %v1215, %v839
  %s1218 = scalar_lea.vmem %s6, 32
  %v1219 = vld [vmem:[%s1218] sm:$0xff]
  %v1220 = vld [vmem:[%s1218 + $0x8] sm:$0xff]
  %v1225 = vcombine.low %v1138, %v1140
  %v1226 = vcombine.low %v1209, %v1211
  %v1229 = vmul.f32 %v1219, %v1225
  %v1230 = vmul.f32 %v1220, %v1226
  %v1231 = vadd.f32 %v1216, %v1229
  %v1232 = vadd.f32 %v1217, %v1230
  %s1233 = scalar_lea.vmem %s2, 96
  %v1234 = vld [vmem:[%s1233] sm:$0xff]
  %v1235 = vld [vmem:[%s1233 + $0x8] sm:$0xff]
  %v1236 = vld [vmem:[%s1233 + $0x10] sm:$0xff]
  %v1237 = vld [vmem:[%s1233 + $0x18] sm:$0xff]
  %1239 = vset.pattern.permute.xlu0 0
  %1240 = vperm.xlu0 %1239, %v1234
  %v1241 = vpop.permute.xlu0 %1240
  %1244 = vset.pattern.permute.xlu0 0
  %1245 = vperm.xlu0 %1244, %v1235
  %v1246 = vpop.permute.xlu0 %1245
  %1249 = vset.pattern.permute.xlu0 0
  %1250 = vperm.xlu0 %1249, %v1236
  %v1251 = vpop.permute.xlu0 %1250
  %1254 = vset.pattern.permute.xlu0 0
  %1255 = vperm.xlu0 %1254, %v1237
  %v1256 = vpop.permute.xlu0 %1255
  %v1260 = vcombine.high %v1231, %v1231
  %v1261 = vcombine.high %v1232, %v1232
  %v1262 = vsel %vm75, %v1231, 0
  %v1264 = vsel %vm75, %v1260, 0
  %v1266 = vsel %vm75, %v1232, 0
  %v1268 = vsel %vm75, %v1261, 0
  %1270 = vmatprep.subr.mxu0 %v1264
  %1271 = vmatpush1.msra.mxu0 %v1262
  %1272 = vmatprep.subr.mxu0 0.0
  %1273 = vmatpush1.msra.mxu0 0.0
  %1274 = vmatprep.subr.mxu0 0.0
  %1275 = vmatpush1.msra.mxu0 0.0
  %1276 = vmatprep.subr.mxu0 0.0
  %1277 = vmatpush1.msra.mxu0 0.0
  %1278 = vmatprep.subr.mxu0 0.0
  %1279 = vmatpush1.msra.mxu0 0.0
  %1280 = vmatprep.subr.mxu0 0.0
  %1281 = vmatpush1.msra.mxu0 0.0
  %1282 = vmatprep.subr.mxu0 0.0
  %1283 = vmatpush1.msra.mxu0 0.0
  %1284 = vmatprep.subr.mxu0 0.0
  %1285 = vmatpush1.msra.mxu0 0.0
  %1286 = vmatprep.subr.mxu0 0.0
  %1287 = vmatpush1.msra.mxu0 0.0
  %1288 = vmatprep.subr.mxu0 0.0
  %1289 = vmatpush1.msra.mxu0 0.0
  %1290 = vmatprep.subr.mxu0 0.0
  %1291 = vmatpush1.msra.mxu0 0.0
  %1292 = vmatprep.subr.mxu0 0.0
  %1293 = vmatpush1.msra.mxu0 0.0
  %1294 = vmatprep.subr.mxu0 0.0
  %1295 = vmatpush1.msra.mxu0 0.0
  %1296 = vmatprep.subr.mxu0 0.0
  %1297 = vmatpush1.msra.mxu0 0.0
  %1298 = vmatprep.subr.mxu0 0.0
  %1299 = vmatpush1.msra.mxu0 0.0
  %1300 = vmatprep.subr.mxu0 0.0
  %1301 = vmatpush1.msra.mxu0 0.0
  %1302 = vmatprep.subr.mxu0 0.0
  %1303 = vmatpush1.msra.mxu0 0.0
  %1304 = vmatprep.subr.mxu0 0.0
  %1305 = vmatpush1.msra.mxu0 0.0
  %1306 = vmatprep.subr.mxu0 0.0
  %1307 = vmatpush1.msra.mxu0 0.0
  %1308 = vmatprep.subr.mxu0 0.0
  %1309 = vmatpush1.msra.mxu0 0.0
  %1310 = vmatprep.subr.mxu0 0.0
  %1311 = vmatpush1.msra.mxu0 0.0
  %1312 = vmatprep.subr.mxu0 0.0
  %1313 = vmatpush1.msra.mxu0 0.0
  %1314 = vmatprep.subr.mxu0 0.0
  %1315 = vmatpush1.msra.mxu0 0.0
  %1316 = vmatprep.subr.mxu0 0.0
  %1317 = vmatpush1.msra.mxu0 0.0
  %1318 = vmatprep.subr.mxu0 0.0
  %1319 = vmatpush1.msra.mxu0 0.0
  %1320 = vmatprep.subr.mxu0 0.0
  %1321 = vmatpush1.msra.mxu0 0.0
  %1322 = vmatprep.subr.mxu0 0.0
  %1323 = vmatpush1.msra.mxu0 0.0
  %1324 = vmatprep.subr.mxu0 0.0
  %1325 = vmatpush1.msra.mxu0 0.0
  %1326 = vmatprep.subr.mxu0 0.0
  %1327 = vmatpush1.msra.mxu0 0.0
  %1328 = vmatprep.subr.mxu0 0.0
  %1329 = vmatpush1.msra.mxu0 0.0
  %1330 = vmatprep.subr.mxu0 0.0
  %1331 = vmatpush1.msra.mxu0 0.0
  %1332 = vmatprep.subr.mxu0 0.0
  %1333 = vmatpush1.msra.mxu0 0.0
  %1334 = vmatprep.mubr.f32.mxu0 0.0
  %1335 = vmatmul.mubr.f32.gmra.mrb[0].mxu0 %v64
  %v1336 = vpop.f32.mrb[0].mxu0
  %v1337 = vadd.f32 %v1241, %v1336
  %v1338 = vpop.f32.mrb[0].mxu0
  %v1339 = vadd.f32 %v1241, %v1338
  %1340 = vmatprep.mubr.f32.mxu0 0.0
  %1341 = vmatmul.mubr.f32.gmra.mrb[0].mxu0 %v67
  %v1342 = vpop.f32.mrb[0].mxu0
  %v1343 = vadd.f32 %v1246, %v1342
  %v1344 = vpop.f32.mrb[0].mxu0
  %v1345 = vadd.f32 %v1246, %v1344
  %1346 = vmatprep.mubr.f32.mxu0 0.0
  %1347 = vmatmul.mubr.f32.gmra.mrb[0].mxu0 %v70
  %v1348 = vpop.f32.mrb[0].mxu0
  %v1349 = vadd.f32 %v1251, %v1348
  %v1350 = vpop.f32.mrb[0].mxu0
  %v1351 = vadd.f32 %v1251, %v1350
  %1352 = vmatprep.mubr.f32.mxu0 0.0
  %1353 = vmatmul.mubr.f32.gmra.mrb[0].mxu0 %v73
  %v1354 = vpop.f32.mrb[0].mxu0
  %v1355 = vadd.f32 %v1256, %v1354
  %v1356 = vpop.f32.mrb[0].mxu0
  %v1357 = vadd.f32 %v1256, %v1356
  %1358 = vdwg.mxu0
  %1359 = vmatprep.subr.mxu0 %v1268
  %1360 = vmatpush1.msra.mxu0 %v1266
  %1361 = vmatprep.subr.mxu0 0.0
  %1362 = vmatpush1.msra.mxu0 0.0
  %1363 = vmatprep.subr.mxu0 0.0
  %1364 = vmatpush1.msra.mxu0 0.0
  %1365 = vmatprep.subr.mxu0 0.0
  %1366 = vmatpush1.msra.mxu0 0.0
  %1367 = vmatprep.subr.mxu0 0.0
  %1368 = vmatpush1.msra.mxu0 0.0
  %1369 = vmatprep.subr.mxu0 0.0
  %1370 = vmatpush1.msra.mxu0 0.0
  %1371 = vmatprep.subr.mxu0 0.0
  %1372 = vmatpush1.msra.mxu0 0.0
  %1373 = vmatprep.subr.mxu0 0.0
  %1374 = vmatpush1.msra.mxu0 0.0
  %1375 = vmatprep.subr.mxu0 0.0
  %1376 = vmatpush1.msra.mxu0 0.0
  %1377 = vmatprep.subr.mxu0 0.0
  %1378 = vmatpush1.msra.mxu0 0.0
  %1379 = vmatprep.subr.mxu0 0.0
  %1380 = vmatpush1.msra.mxu0 0.0
  %1381 = vmatprep.subr.mxu0 0.0
  %1382 = vmatpush1.msra.mxu0 0.0
  %1383 = vmatprep.subr.mxu0 0.0
  %1384 = vmatpush1.msra.mxu0 0.0
  %1385 = vmatprep.subr.mxu0 0.0
  %1386 = vmatpush1.msra.mxu0 0.0
  %1387 = vmatprep.subr.mxu0 0.0
  %1388 = vmatpush1.msra.mxu0 0.0
  %1389 = vmatprep.subr.mxu0 0.0
  %1390 = vmatpush1.msra.mxu0 0.0
  %1391 = vmatprep.subr.mxu0 0.0
  %1392 = vmatpush1.msra.mxu0 0.0
  %1393 = vmatprep.subr.mxu0 0.0
  %1394 = vmatpush1.msra.mxu0 0.0
  %1395 = vmatprep.subr.mxu0 0.0
  %1396 = vmatpush1.msra.mxu0 0.0
  %1397 = vmatprep.subr.mxu0 0.0
  %1398 = vmatpush1.msra.mxu0 0.0
  %1399 = vmatprep.subr.mxu0 0.0
  %1400 = vmatpush1.msra.mxu0 0.0
  %1401 = vmatprep.subr.mxu0 0.0
  %1402 = vmatpush1.msra.mxu0 0.0
  %1403 = vmatprep.subr.mxu0 0.0
  %1404 = vmatpush1.msra.mxu0 0.0
  %1405 = vmatprep.subr.mxu0 0.0
  %1406 = vmatpush1.msra.mxu0 0.0
  %1407 = vmatprep.subr.mxu0 0.0
  %1408 = vmatpush1.msra.mxu0 0.0
  %1409 = vmatprep.subr.mxu0 0.0
  %1410 = vmatpush1.msra.mxu0 0.0
  %1411 = vmatprep.subr.mxu0 0.0
  %1412 = vmatpush1.msra.mxu0 0.0
  %1413 = vmatprep.subr.mxu0 0.0
  %1414 = vmatpush1.msra.mxu0 0.0
  %1415 = vmatprep.subr.mxu0 0.0
  %1416 = vmatpush1.msra.mxu0 0.0
  %1417 = vmatprep.subr.mxu0 0.0
  %1418 = vmatpush1.msra.mxu0 0.0
  %1419 = vmatprep.subr.mxu0 0.0
  %1420 = vmatpush1.msra.mxu0 0.0
  %1421 = vmatprep.subr.mxu0 0.0
  %1422 = vmatpush1.msra.mxu0 0.0
  %1423 = vmatprep.mubr.f32.mxu0 0.0
  %1424 = vmatmul.mubr.f32.gmra.mrb[0].mxu0 %v64
  %v1425 = vpop.f32.mrb[0].mxu0
  %v1426 = vadd.f32 %v1241, %v1425
  %v1427 = vpop.f32.mrb[0].mxu0
  %v1428 = vadd.f32 %v1241, %v1427
  %1429 = vmatprep.mubr.f32.mxu0 0.0
  %1430 = vmatmul.mubr.f32.gmra.mrb[0].mxu0 %v67
  %v1431 = vpop.f32.mrb[0].mxu0
  %v1432 = vadd.f32 %v1246, %v1431
  %v1433 = vpop.f32.mrb[0].mxu0
  %v1434 = vadd.f32 %v1246, %v1433
  %1435 = vmatprep.mubr.f32.mxu0 0.0
  %1436 = vmatmul.mubr.f32.gmra.mrb[0].mxu0 %v70
  %v1437 = vpop.f32.mrb[0].mxu0
  %v1438 = vadd.f32 %v1251, %v1437
  %v1439 = vpop.f32.mrb[0].mxu0
  %v1440 = vadd.f32 %v1251, %v1439
  %1441 = vmatprep.mubr.f32.mxu0 0.0
  %1442 = vmatmul.mubr.f32.gmra.mrb[0].mxu0 %v73
  %v1443 = vpop.f32.mrb[0].mxu0
  %v1444 = vadd.f32 %v1256, %v1443
  %v1445 = vpop.f32.mrb[0].mxu0
  %v1446 = vadd.f32 %v1256, %v1445
  %1447 = vdwg.mxu0
  %v1448 = vtanh.pop %v1337
  %v1449 = vtanh.pop %v1339
  %v1450 = vtanh.pop %v1426
  %v1451 = vtanh.pop %v1428
  %v1452 = vtanh.pop %v1343
  %v1453 = vtanh.pop %v1345
  %v1454 = vtanh.pop %v1432
  %v1455 = vtanh.pop %v1434
  %v1456 = vtanh.pop %v1349
  %v1457 = vtanh.pop %v1351
  %v1458 = vtanh.pop %v1438
  %v1459 = vtanh.pop %v1440
  %v1460 = vtanh.pop %v1355
  %v1461 = vtanh.pop %v1357
  %v1462 = vtanh.pop %v1444
  %v1463 = vtanh.pop %v1446
  %1464 = vmatprep.subr.mxu0 %v1449
  %1465 = vmatpush1.msra.mxu0 %v1448
  %1466 = vmatprep.subr.mxu0 %v1453
  %1467 = vmatpush1.msra.mxu0 %v1452
  %1468 = vmatprep.subr.mxu0 %v1457
  %1469 = vmatpush1.msra.mxu0 %v1456
  %1470 = vmatprep.subr.mxu0 %v1461
  %1471 = vmatpush1.msra.mxu0 %v1460
  %1472 = vmatprep.subr.mxu0 0.0
  %1473 = vmatpush1.msra.mxu0 0.0
  %1474 = vmatprep.subr.mxu0 0.0
  %1475 = vmatpush1.msra.mxu0 0.0
  %1476 = vmatprep.subr.mxu0 0.0
  %1477 = vmatpush1.msra.mxu0 0.0
  %1478 = vmatprep.subr.mxu0 0.0
  %1479 = vmatpush1.msra.mxu0 0.0
  %1480 = vmatprep.subr.mxu0 0.0
  %1481 = vmatpush1.msra.mxu0 0.0
  %1482 = vmatprep.subr.mxu0 0.0
  %1483 = vmatpush1.msra.mxu0 0.0
  %1484 = vmatprep.subr.mxu0 0.0
  %1485 = vmatpush1.msra.mxu0 0.0
  %1486 = vmatprep.subr.mxu0 0.0
  %1487 = vmatpush1.msra.mxu0 0.0
  %1488 = vmatprep.subr.mxu0 0.0
  %1489 = vmatpush1.msra.mxu0 0.0
  %1490 = vmatprep.subr.mxu0 0.0
  %1491 = vmatpush1.msra.mxu0 0.0
  %1492 = vmatprep.subr.mxu0 0.0
  %1493 = vmatpush1.msra.mxu0 0.0
  %1494 = vmatprep.subr.mxu0 0.0
  %1495 = vmatpush1.msra.mxu0 0.0
  %1496 = vmatprep.subr.mxu0 0.0
  %1497 = vmatpush1.msra.mxu0 0.0
  %1498 = vmatprep.subr.mxu0 0.0
  %1499 = vmatpush1.msra.mxu0 0.0
  %1500 = vmatprep.subr.mxu0 0.0
  %1501 = vmatpush1.msra.mxu0 0.0
  %1502 = vmatprep.subr.mxu0 0.0
  %1503 = vmatpush1.msra.mxu0 0.0
  %1504 = vmatprep.subr.mxu0 0.0
  %1505 = vmatpush1.msra.mxu0 0.0
  %1506 = vmatprep.subr.mxu0 0.0
  %1507 = vmatpush1.msra.mxu0 0.0
  %1508 = vmatprep.subr.mxu0 0.0
  %1509 = vmatpush1.msra.mxu0 0.0
  %1510 = vmatprep.subr.mxu0 0.0
  %1511 = vmatpush1.msra.mxu0 0.0
  %1512 = vmatprep.subr.mxu0 0.0
  %1513 = vmatpush1.msra.mxu0 0.0
  %1514 = vmatprep.subr.mxu0 0.0
  %1515 = vmatpush1.msra.mxu0 0.0
  %1516 = vmatprep.subr.mxu0 0.0
  %1517 = vmatpush1.msra.mxu0 0.0
  %1518 = vmatprep.subr.mxu0 0.0
  %1519 = vmatpush1.msra.mxu0 0.0
  %1520 = vmatprep.subr.mxu0 0.0
  %1521 = vmatpush1.msra.mxu0 0.0
  %1522 = vmatprep.subr.mxu0 0.0
  %1523 = vmatpush1.msra.mxu0 0.0
  %1524 = vmatprep.subr.mxu0 0.0
  %1525 = vmatpush1.msra.mxu0 0.0
  %1526 = vmatprep.subr.mxu0 0.0
  %1527 = vmatpush1.msra.mxu0 0.0
  %1528 = vmatprep.mubr.f32.mxu0 0.0
  %1529 = vmatmul.mubr.f32.gmra.mrb[0].mxu0 %v285
  %v1530 = vpop.f32.mrb[0].mxu0
  %v1531 = vadd.f32 %v281, %v1530
  %v1532 = vpop.f32.mrb[0].mxu0
  %v1533 = vadd.f32 %v281, %v1532
  %1534 = vdwg.mxu0
  %1535 = vmatprep.subr.mxu0 %v1451
  %1536 = vmatpush1.msra.mxu0 %v1450
  %1537 = vmatprep.subr.mxu0 %v1455
  %1538 = vmatpush1.msra.mxu0 %v1454
  %1539 = vmatprep.subr.mxu0 %v1459
  %1540 = vmatpush1.msra.mxu0 %v1458
  %1541 = vmatprep.subr.mxu0 %v1463
  %1542 = vmatpush1.msra.mxu0 %v1462
  %1543 = vmatprep.subr.mxu0 0.0
  %1544 = vmatpush1.msra.mxu0 0.0
  %1545 = vmatprep.subr.mxu0 0.0
  %1546 = vmatpush1.msra.mxu0 0.0
  %1547 = vmatprep.subr.mxu0 0.0
  %1548 = vmatpush1.msra.mxu0 0.0
  %1549 = vmatprep.subr.mxu0 0.0
  %1550 = vmatpush1.msra.mxu0 0.0
  %1551 = vmatprep.subr.mxu0 0.0
  %1552 = vmatpush1.msra.mxu0 0.0
  %1553 = vmatprep.subr.mxu0 0.0
  %1554 = vmatpush1.msra.mxu0 0.0
  %1555 = vmatprep.subr.mxu0 0.0
  %1556 = vmatpush1.msra.mxu0 0.0
  %1557 = vmatprep.subr.mxu0 0.0
  %1558 = vmatpush1.msra.mxu0 0.0
  %1559 = vmatprep.subr.mxu0 0.0
  %1560 = vmatpush1.msra.mxu0 0.0
  %1561 = vmatprep.subr.mxu0 0.0
  %1562 = vmatpush1.msra.mxu0 0.0
  %1563 = vmatprep.subr.mxu0 0.0
  %1564 = vmatpush1.msra.mxu0 0.0
  %1565 = vmatprep.subr.mxu0 0.0
  %1566 = vmatpush1.msra.mxu0 0.0
  %1567 = vmatprep.subr.mxu0 0.0
  %1568 = vmatpush1.msra.mxu0 0.0
  %1569 = vmatprep.subr.mxu0 0.0
  %1570 = vmatpush1.msra.mxu0 0.0
  %1571 = vmatprep.subr.mxu0 0.0
  %1572 = vmatpush1.msra.mxu0 0.0
  %1573 = vmatprep.subr.mxu0 0.0
  %1574 = vmatpush1.msra.mxu0 0.0
  %1575 = vmatprep.subr.mxu0 0.0
  %1576 = vmatpush1.msra.mxu0 0.0
  %1577 = vmatprep.subr.mxu0 0.0
  %1578 = vmatpush1.msra.mxu0 0.0
  %1579 = vmatprep.subr.mxu0 0.0
  %1580 = vmatpush1.msra.mxu0 0.0
  %1581 = vmatprep.subr.mxu0 0.0
  %1582 = vmatpush1.msra.mxu0 0.0
  %1583 = vmatprep.subr.mxu0 0.0
  %1584 = vmatpush1.msra.mxu0 0.0
  %1585 = vmatprep.subr.mxu0 0.0
  %1586 = vmatpush1.msra.mxu0 0.0
  %1587 = vmatprep.subr.mxu0 0.0
  %1588 = vmatpush1.msra.mxu0 0.0
  %1589 = vmatprep.subr.mxu0 0.0
  %1590 = vmatpush1.msra.mxu0 0.0
  %1591 = vmatprep.subr.mxu0 0.0
  %1592 = vmatpush1.msra.mxu0 0.0
  %1593 = vmatprep.subr.mxu0 0.0
  %1594 = vmatpush1.msra.mxu0 0.0
  %1595 = vmatprep.subr.mxu0 0.0
  %1596 = vmatpush1.msra.mxu0 0.0
  %1597 = vmatprep.subr.mxu0 0.0
  %1598 = vmatpush1.msra.mxu0 0.0
  %1599 = vmatprep.mubr.f32.mxu0 0.0
  %1600 = vmatmul.mubr.f32.gmra.mrb[0].mxu0 %v285
  %v1601 = vpop.f32.mrb[0].mxu0
  %v1602 = vadd.f32 %v281, %v1601
  %v1603 = vpop.f32.mrb[0].mxu0
  %v1604 = vadd.f32 %v281, %v1603
  %1605 = vdwg.mxu0
  %s1606 = scalar_lea.vmem %s5, 48
  %v1607 = vld [vmem:[%s1606] sm:$0xff]
  %v1608 = vld [vmem:[%s1606 + $0x8] sm:$0xff]
  %v1609 = vmul.f32 %v1607, %v1231
  %v1610 = vmul.f32 %v1608, %v1232
  %s1611 = scalar_lea.vmem %s6, 48
  %v1612 = vld [vmem:[%s1611] sm:$0xff]
  %v1613 = vld [vmem:[%s1611 + $0x8] sm:$0xff]
  %v1618 = vcombine.low %v1531, %v1533
  %v1619 = vcombine.low %v1602, %v1604
  %v1622 = vmul.f32 %v1612, %v1618
  %v1623 = vmul.f32 %v1613, %v1619
  %v1624 = vadd.f32 %v1609, %v1622
  %v1625 = vadd.f32 %v1610, %v1623
  %s1626 = scalar_lea.vmem %s2, 128
  %v1627 = vld [vmem:[%s1626] sm:$0xff]
  %v1628 = vld [vmem:[%s1626 + $0x8] sm:$0xff]
  %v1629 = vld [vmem:[%s1626 + $0x10] sm:$0xff]
  %v1630 = vld [vmem:[%s1626 + $0x18] sm:$0xff]
  %1632 = vset.pattern.permute.xlu0 0
  %1633 = vperm.xlu0 %1632, %v1627
  %v1634 = vpop.permute.xlu0 %1633
  %1637 = vset.pattern.permute.xlu0 0
  %1638 = vperm.xlu0 %1637, %v1628
  %v1639 = vpop.permute.xlu0 %1638
  %1642 = vset.pattern.permute.xlu0 0
  %1643 = vperm.xlu0 %1642, %v1629
  %v1644 = vpop.permute.xlu0 %1643
  %1647 = vset.pattern.permute.xlu0 0
  %1648 = vperm.xlu0 %1647, %v1630
  %v1649 = vpop.permute.xlu0 %1648
  %v1653 = vcombine.high %v1624, %v1624
  %v1654 = vcombine.high %v1625, %v1625
  %v1655 = vsel %vm75, %v1624, 0
  %v1657 = vsel %vm75, %v1653, 0
  %v1659 = vsel %vm75, %v1625, 0
  %v1661 = vsel %vm75, %v1654, 0
  %1663 = vmatprep.subr.mxu0 %v1657
  %1664 = vmatpush1.msra.mxu0 %v1655
  %1665 = vmatprep.subr.mxu0 0.0
  %1666 = vmatpush1.msra.mxu0 0.0
  %1667 = vmatprep.subr.mxu0 0.0
  %1668 = vmatpush1.msra.mxu0 0.0
  %1669 = vmatprep.subr.mxu0 0.0
  %1670 = vmatpush1.msra.mxu0 0.0
  %1671 = vmatprep.subr.mxu0 0.0
  %1672 = vmatpush1.msra.mxu0 0.0
  %1673 = vmatprep.subr.mxu0 0.0
  %1674 = vmatpush1.msra.mxu0 0.0
  %1675 = vmatprep.subr.mxu0 0.0
  %1676 = vmatpush1.msra.mxu0 0.0
  %1677 = vmatprep.subr.mxu0 0.0
  %1678 = vmatpush1.msra.mxu0 0.0
  %1679 = vmatprep.subr.mxu0 0.0
  %1680 = vmatpush1.msra.mxu0 0.0
  %1681 = vmatprep.subr.mxu0 0.0
  %1682 = vmatpush1.msra.mxu0 0.0
  %1683 = vmatprep.subr.mxu0 0.0
  %1684 = vmatpush1.msra.mxu0 0.0
  %1685 = vmatprep.subr.mxu0 0.0
  %1686 = vmatpush1.msra.mxu0 0.0
  %1687 = vmatprep.subr.mxu0 0.0
  %1688 = vmatpush1.msra.mxu0 0.0
  %1689 = vmatprep.subr.mxu0 0.0
  %1690 = vmatpush1.msra.mxu0 0.0
  %1691 = vmatprep.subr.mxu0 0.0
  %1692 = vmatpush1.msra.mxu0 0.0
  %1693 = vmatprep.subr.mxu0 0.0
  %1694 = vmatpush1.msra.mxu0 0.0
  %1695 = vmatprep.subr.mxu0 0.0
  %1696 = vmatpush1.msra.mxu0 0.0
  %1697 = vmatprep.subr.mxu0 0.0
  %1698 = vmatpush1.msra.mxu0 0.0
  %1699 = vmatprep.subr.mxu0 0.0
  %1700 = vmatpush1.msra.mxu0 0.0
  %1701 = vmatprep.subr.mxu0 0.0
  %1702 = vmatpush1.msra.mxu0 0.0
  %1703 = vmatprep.subr.mxu0 0.0
  %1704 = vmatpush1.msra.mxu0 0.0
  %1705 = vmatprep.subr.mxu0 0.0
  %1706 = vmatpush1.msra.mxu0 0.0
  %1707 = vmatprep.subr.mxu0 0.0
  %1708 = vmatpush1.msra.mxu0 0.0
  %1709 = vmatprep.subr.mxu0 0.0
  %1710 = vmatpush1.msra.mxu0 0.0
  %1711 = vmatprep.subr.mxu0 0.0
  %1712 = vmatpush1.msra.mxu0 0.0
  %1713 = vmatprep.subr.mxu0 0.0
  %1714 = vmatpush1.msra.mxu0 0.0
  %1715 = vmatprep.subr.mxu0 0.0
  %1716 = vmatpush1.msra.mxu0 0.0
  %1717 = vmatprep.subr.mxu0 0.0
  %1718 = vmatpush1.msra.mxu0 0.0
  %1719 = vmatprep.subr.mxu0 0.0
  %1720 = vmatpush1.msra.mxu0 0.0
  %1721 = vmatprep.subr.mxu0 0.0
  %1722 = vmatpush1.msra.mxu0 0.0
  %1723 = vmatprep.subr.mxu0 0.0
  %1724 = vmatpush1.msra.mxu0 0.0
  %1725 = vmatprep.subr.mxu0 0.0
  %1726 = vmatpush1.msra.mxu0 0.0
  %1727 = vmatprep.mubr.f32.mxu0 0.0
  %1728 = vmatmul.mubr.f32.gmra.mrb[0].mxu0 %v64
  %v1729 = vpop.f32.mrb[0].mxu0
  %v1730 = vadd.f32 %v1634, %v1729
  %v1731 = vpop.f32.mrb[0].mxu0
  %v1732 = vadd.f32 %v1634, %v1731
  %1733 = vmatprep.mubr.f32.mxu0 0.0
  %1734 = vmatmul.mubr.f32.gmra.mrb[0].mxu0 %v67
  %v1735 = vpop.f32.mrb[0].mxu0
  %v1736 = vadd.f32 %v1639, %v1735
  %v1737 = vpop.f32.mrb[0].mxu0
  %v1738 = vadd.f32 %v1639, %v1737
  %1739 = vmatprep.mubr.f32.mxu0 0.0
  %1740 = vmatmul.mubr.f32.gmra.mrb[0].mxu0 %v70
  %v1741 = vpop.f32.mrb[0].mxu0
  %v1742 = vadd.f32 %v1644, %v1741
  %v1743 = vpop.f32.mrb[0].mxu0
  %v1744 = vadd.f32 %v1644, %v1743
  %1745 = vmatprep.mubr.f32.mxu0 0.0
  %1746 = vmatmul.mubr.f32.gmra.mrb[0].mxu0 %v73
  %v1747 = vpop.f32.mrb[0].mxu0
  %v1748 = vadd.f32 %v1649, %v1747
  %v1749 = vpop.f32.mrb[0].mxu0
  %v1750 = vadd.f32 %v1649, %v1749
  %1751 = vdwg.mxu0
  %1752 = vmatprep.subr.mxu0 %v1661
  %1753 = vmatpush1.msra.mxu0 %v1659
  %1754 = vmatprep.subr.mxu0 0.0
  %1755 = vmatpush1.msra.mxu0 0.0
  %1756 = vmatprep.subr.mxu0 0.0
  %1757 = vmatpush1.msra.mxu0 0.0
  %1758 = vmatprep.subr.mxu0 0.0
  %1759 = vmatpush1.msra.mxu0 0.0
  %1760 = vmatprep.subr.mxu0 0.0
  %1761 = vmatpush1.msra.mxu0 0.0
  %1762 = vmatprep.subr.mxu0 0.0
  %1763 = vmatpush1.msra.mxu0 0.0
  %1764 = vmatprep.subr.mxu0 0.0
  %1765 = vmatpush1.msra.mxu0 0.0
  %1766 = vmatprep.subr.mxu0 0.0
  %1767 = vmatpush1.msra.mxu0 0.0
  %1768 = vmatprep.subr.mxu0 0.0
  %1769 = vmatpush1.msra.mxu0 0.0
  %1770 = vmatprep.subr.mxu0 0.0
  %1771 = vmatpush1.msra.mxu0 0.0
  %1772 = vmatprep.subr.mxu0 0.0
  %1773 = vmatpush1.msra.mxu0 0.0
  %1774 = vmatprep.subr.mxu0 0.0
  %1775 = vmatpush1.msra.mxu0 0.0
  %1776 = vmatprep.subr.mxu0 0.0
  %1777 = vmatpush1.msra.mxu0 0.0
  %1778 = vmatprep.subr.mxu0 0.0
  %1779 = vmatpush1.msra.mxu0 0.0
  %1780 = vmatprep.subr.mxu0 0.0
  %1781 = vmatpush1.msra.mxu0 0.0
  %1782 = vmatprep.subr.mxu0 0.0
  %1783 = vmatpush1.msra.mxu0 0.0
  %1784 = vmatprep.subr.mxu0 0.0
  %1785 = vmatpush1.msra.mxu0 0.0
  %1786 = vmatprep.subr.mxu0 0.0
  %1787 = vmatpush1.msra.mxu0 0.0
  %1788 = vmatprep.subr.mxu0 0.0
  %1789 = vmatpush1.msra.mxu0 0.0
  %1790 = vmatprep.subr.mxu0 0.0
  %1791 = vmatpush1.msra.mxu0 0.0
  %1792 = vmatprep.subr.mxu0 0.0
  %1793 = vmatpush1.msra.mxu0 0.0
  %1794 = vmatprep.subr.mxu0 0.0
  %1795 = vmatpush1.msra.mxu0 0.0
  %1796 = vmatprep.subr.mxu0 0.0
  %1797 = vmatpush1.msra.mxu0 0.0
  %1798 = vmatprep.subr.mxu0 0.0
  %1799 = vmatpush1.msra.mxu0 0.0
  %1800 = vmatprep.subr.mxu0 0.0
  %1801 = vmatpush1.msra.mxu0 0.0
  %1802 = vmatprep.subr.mxu0 0.0
  %1803 = vmatpush1.msra.mxu0 0.0
  %1804 = vmatprep.subr.mxu0 0.0
  %1805 = vmatpush1.msra.mxu0 0.0
  %1806 = vmatprep.subr.mxu0 0.0
  %1807 = vmatpush1.msra.mxu0 0.0
  %1808 = vmatprep.subr.mxu0 0.0
  %1809 = vmatpush1.msra.mxu0 0.0
  %1810 = vmatprep.subr.mxu0 0.0
  %1811 = vmatpush1.msra.mxu0 0.0
  %1812 = vmatprep.subr.mxu0 0.0
  %1813 = vmatpush1.msra.mxu0 0.0
  %1814 = vmatprep.subr.mxu0 0.0
  %1815 = vmatpush1.msra.mxu0 0.0
  %1816 = vmatprep.mubr.f32.mxu0 0.0
  %1817 = vmatmul.mubr.f32.gmra.mrb[0].mxu0 %v64
  %v1818 = vpop.f32.mrb[0].mxu0
  %v1819 = vadd.f32 %v1634, %v1818
  %v1820 = vpop.f32.mrb[0].mxu0
  %v1821 = vadd.f32 %v1634, %v1820
  %1822 = vmatprep.mubr.f32.mxu0 0.0
  %1823 = vmatmul.mubr.f32.gmra.mrb[0].mxu0 %v67
  %v1824 = vpop.f32.mrb[0].mxu0
  %v1825 = vadd.f32 %v1639, %v1824
  %v1826 = vpop.f32.mrb[0].mxu0
  %v1827 = vadd.f32 %v1639, %v1826
  %1828 = vmatprep.mubr.f32.mxu0 0.0
  %1829 = vmatmul.mubr.f32.gmra.mrb[0].mxu0 %v70
  %v1830 = vpop.f32.mrb[0].mxu0
  %v1831 = vadd.f32 %v1644, %v1830
  %v1832 = vpop.f32.mrb[0].mxu0
  %v1833 = vadd.f32 %v1644, %v1832
  %1834 = vmatprep.mubr.f32.mxu0 0.0
  %1835 = vmatmul.mubr.f32.gmra.mrb[0].mxu0 %v73
  %v1836 = vpop.f32.mrb[0].mxu0
  %v1837 = vadd.f32 %v1649, %v1836
  %v1838 = vpop.f32.mrb[0].mxu0
  %v1839 = vadd.f32 %v1649, %v1838
  %1840 = vdwg.mxu0
  %v1841 = vtanh.pop %v1730
  %v1842 = vtanh.pop %v1732
  %v1843 = vtanh.pop %v1819
  %v1844 = vtanh.pop %v1821
  %v1845 = vtanh.pop %v1736
  %v1846 = vtanh.pop %v1738
  %v1847 = vtanh.pop %v1825
  %v1848 = vtanh.pop %v1827
  %v1849 = vtanh.pop %v1742
  %v1850 = vtanh.pop %v1744
  %v1851 = vtanh.pop %v1831
  %v1852 = vtanh.pop %v1833
  %v1853 = vtanh.pop %v1748
  %v1854 = vtanh.pop %v1750
  %v1855 = vtanh.pop %v1837
  %v1856 = vtanh.pop %v1839
  %1857 = vmatprep.subr.mxu0 %v1842
  %1858 = vmatpush1.msra.mxu0 %v1841
  %1859 = vmatprep.subr.mxu0 %v1846
  %1860 = vmatpush1.msra.mxu0 %v1845
  %1861 = vmatprep.subr.mxu0 %v1850
  %1862 = vmatpush1.msra.mxu0 %v1849
  %1863 = vmatprep.subr.mxu0 %v1854
  %1864 = vmatpush1.msra.mxu0 %v1853
  %1865 = vmatprep.subr.mxu0 0.0
  %1866 = vmatpush1.msra.mxu0 0.0
  %1867 = vmatprep.subr.mxu0 0.0
  %1868 = vmatpush1.msra.mxu0 0.0
  %1869 = vmatprep.subr.mxu0 0.0
  %1870 = vmatpush1.msra.mxu0 0.0
  %1871 = vmatprep.subr.mxu0 0.0
  %1872 = vmatpush1.msra.mxu0 0.0
  %1873 = vmatprep.subr.mxu0 0.0
  %1874 = vmatpush1.msra.mxu0 0.0
  %1875 = vmatprep.subr.mxu0 0.0
  %1876 = vmatpush1.msra.mxu0 0.0
  %1877 = vmatprep.subr.mxu0 0.0
  %1878 = vmatpush1.msra.mxu0 0.0
  %1879 = vmatprep.subr.mxu0 0.0
  %1880 = vmatpush1.msra.mxu0 0.0
  %1881 = vmatprep.subr.mxu0 0.0
  %1882 = vmatpush1.msra.mxu0 0.0
  %1883 = vmatprep.subr.mxu0 0.0
  %1884 = vmatpush1.msra.mxu0 0.0
  %1885 = vmatprep.subr.mxu0 0.0
  %1886 = vmatpush1.msra.mxu0 0.0
  %1887 = vmatprep.subr.mxu0 0.0
  %1888 = vmatpush1.msra.mxu0 0.0
  %1889 = vmatprep.subr.mxu0 0.0
  %1890 = vmatpush1.msra.mxu0 0.0
  %1891 = vmatprep.subr.mxu0 0.0
  %1892 = vmatpush1.msra.mxu0 0.0
  %1893 = vmatprep.subr.mxu0 0.0
  %1894 = vmatpush1.msra.mxu0 0.0
  %1895 = vmatprep.subr.mxu0 0.0
  %1896 = vmatpush1.msra.mxu0 0.0
  %1897 = vmatprep.subr.mxu0 0.0
  %1898 = vmatpush1.msra.mxu0 0.0
  %1899 = vmatprep.subr.mxu0 0.0
  %1900 = vmatpush1.msra.mxu0 0.0
  %1901 = vmatprep.subr.mxu0 0.0
  %1902 = vmatpush1.msra.mxu0 0.0
  %1903 = vmatprep.subr.mxu0 0.0
  %1904 = vmatpush1.msra.mxu0 0.0
  %1905 = vmatprep.subr.mxu0 0.0
  %1906 = vmatpush1.msra.mxu0 0.0
  %1907 = vmatprep.subr.mxu0 0.0
  %1908 = vmatpush1.msra.mxu0 0.0
  %1909 = vmatprep.subr.mxu0 0.0
  %1910 = vmatpush1.msra.mxu0 0.0
  %1911 = vmatprep.subr.mxu0 0.0
  %1912 = vmatpush1.msra.mxu0 0.0
  %1913 = vmatprep.subr.mxu0 0.0
  %1914 = vmatpush1.msra.mxu0 0.0
  %1915 = vmatprep.subr.mxu0 0.0
  %1916 = vmatpush1.msra.mxu0 0.0
  %1917 = vmatprep.subr.mxu0 0.0
  %1918 = vmatpush1.msra.mxu0 0.0
  %1919 = vmatprep.subr.mxu0 0.0
  %1920 = vmatpush1.msra.mxu0 0.0
  %1921 = vmatprep.mubr.f32.mxu0 0.0
  %1922 = vmatmul.mubr.f32.gmra.mrb[0].mxu0 %v285
  %v1923 = vpop.f32.mrb[0].mxu0
  %v1924 = vadd.f32 %v281, %v1923
  %v1925 = vpop.f32.mrb[0].mxu0
  %v1926 = vadd.f32 %v281, %v1925
  %1927 = vdwg.mxu0
  %1928 = vmatprep.subr.mxu0 %v1844
  %1929 = vmatpush1.msra.mxu0 %v1843
  %1930 = vmatprep.subr.mxu0 %v1848
  %1931 = vmatpush1.msra.mxu0 %v1847
  %1932 = vmatprep.subr.mxu0 %v1852
  %1933 = vmatpush1.msra.mxu0 %v1851
  %1934 = vmatprep.subr.mxu0 %v1856
  %1935 = vmatpush1.msra.mxu0 %v1855
  %1936 = vmatprep.subr.mxu0 0.0
  %1937 = vmatpush1.msra.mxu0 0.0
  %1938 = vmatprep.subr.mxu0 0.0
  %1939 = vmatpush1.msra.mxu0 0.0
  %1940 = vmatprep.subr.mxu0 0.0
  %1941 = vmatpush1.msra.mxu0 0.0
  %1942 = vmatprep.subr.mxu0 0.0
  %1943 = vmatpush1.msra.mxu0 0.0
  %1944 = vmatprep.subr.mxu0 0.0
  %1945 = vmatpush1.msra.mxu0 0.0
  %1946 = vmatprep.subr.mxu0 0.0
  %1947 = vmatpush1.msra.mxu0 0.0
  %1948 = vmatprep.subr.mxu0 0.0
  %1949 = vmatpush1.msra.mxu0 0.0
  %1950 = vmatprep.subr.mxu0 0.0
  %1951 = vmatpush1.msra.mxu0 0.0
  %1952 = vmatprep.subr.mxu0 0.0
  %1953 = vmatpush1.msra.mxu0 0.0
  %1954 = vmatprep.subr.mxu0 0.0
  %1955 = vmatpush1.msra.mxu0 0.0
  %1956 = vmatprep.subr.mxu0 0.0
  %1957 = vmatpush1.msra.mxu0 0.0
  %1958 = vmatprep.subr.mxu0 0.0
  %1959 = vmatpush1.msra.mxu0 0.0
  %1960 = vmatprep.subr.mxu0 0.0
  %1961 = vmatpush1.msra.mxu0 0.0
  %1962 = vmatprep.subr.mxu0 0.0
  %1963 = vmatpush1.msra.mxu0 0.0
  %1964 = vmatprep.subr.mxu0 0.0
  %1965 = vmatpush1.msra.mxu0 0.0
  %1966 = vmatprep.subr.mxu0 0.0
  %1967 = vmatpush1.msra.mxu0 0.0
  %1968 = vmatprep.subr.mxu0 0.0
  %1969 = vmatpush1.msra.mxu0 0.0
  %1970 = vmatprep.subr.mxu0 0.0
  %1971 = vmatpush1.msra.mxu0 0.0
  %1972 = vmatprep.subr.mxu0 0.0
  %1973 = vmatpush1.msra.mxu0 0.0
  %1974 = vmatprep.subr.mxu0 0.0
  %1975 = vmatpush1.msra.mxu0 0.0
  %1976 = vmatprep.subr.mxu0 0.0
  %1977 = vmatpush1.msra.mxu0 0.0
  %1978 = vmatprep.subr.mxu0 0.0
  %1979 = vmatpush1.msra.mxu0 0.0
  %1980 = vmatprep.subr.mxu0 0.0
  %1981 = vmatpush1.msra.mxu0 0.0
  %1982 = vmatprep.subr.mxu0 0.0
  %1983 = vmatpush1.msra.mxu0 0.0
  %1984 = vmatprep.subr.mxu0 0.0
  %1985 = vmatpush1.msra.mxu0 0.0
  %1986 = vmatprep.subr.mxu0 0.0
  %1987 = vmatpush1.msra.mxu0 0.0
  %1988 = vmatprep.subr.mxu0 0.0
  %1989 = vmatpush1.msra.mxu0 0.0
  %1990 = vmatprep.subr.mxu0 0.0
  %1991 = vmatpush1.msra.mxu0 0.0
  %1992 = vmatprep.mubr.f32.mxu0 0.0
  %1993 = vmatmul.mubr.f32.gmra.mrb[0].mxu0 %v285
  %v1994 = vpop.f32.mrb[0].mxu0
  %v1995 = vadd.f32 %v281, %v1994
  %v1996 = vpop.f32.mrb[0].mxu0
  %v1997 = vadd.f32 %v281, %v1996
  %1998 = vdwg.mxu0
  %s1999 = scalar_lea.vmem %s5, 64
  %v2000 = vld [vmem:[%s1999] sm:$0xff]
  %v2001 = vld [vmem:[%s1999 + $0x8] sm:$0xff]
  %v2002 = vmul.f32 %v2000, %v1624
  %v2003 = vmul.f32 %v2001, %v1625
  %s2004 = scalar_lea.vmem %s6, 64
  %v2005 = vld [vmem:[%s2004] sm:$0xff]
  %v2006 = vld [vmem:[%s2004 + $0x8] sm:$0xff]
  %v2011 = vcombine.low %v1924, %v1926
  %v2012 = vcombine.low %v1995, %v1997
  %v2015 = vmul.f32 %v2005, %v2011
  %v2016 = vmul.f32 %v2006, %v2012
  %v2017 = vadd.f32 %v2002, %v2015
  %v2018 = vadd.f32 %v2003, %v2016
  %s2019 = scalar_lea.vmem %s2, 160
  %v2020 = vld [vmem:[%s2019] sm:$0xff]
  %v2021 = vld [vmem:[%s2019 + $0x8] sm:$0xff]
  %v2022 = vld [vmem:[%s2019 + $0x10] sm:$0xff]
  %v2023 = vld [vmem:[%s2019 + $0x18] sm:$0xff]
  %2025 = vset.pattern.permute.xlu0 0
  %2026 = vperm.xlu0 %2025, %v2020
  %v2027 = vpop.permute.xlu0 %2026
  %2030 = vset.pattern.permute.xlu0 0
  %2031 = vperm.xlu0 %2030, %v2021
  %v2032 = vpop.permute.xlu0 %2031
  %2035 = vset.pattern.permute.xlu0 0
  %2036 = vperm.xlu0 %2035, %v2022
  %v2037 = vpop.permute.xlu0 %2036
  %2040 = vset.pattern.permute.xlu0 0
  %2041 = vperm.xlu0 %2040, %v2023
  %v2042 = vpop.permute.xlu0 %2041
  %v2046 = vcombine.high %v2017, %v2017
  %v2047 = vcombine.high %v2018, %v2018
  %v2048 = vsel %vm75, %v2017, 0
  %v2050 = vsel %vm75, %v2046, 0
  %v2052 = vsel %vm75, %v2018, 0
  %v2054 = vsel %vm75, %v2047, 0
  %2056 = vmatprep.subr.mxu0 %v2050
  %2057 = vmatpush1.msra.mxu0 %v2048
  %2058 = vmatprep.subr.mxu0 0.0
  %2059 = vmatpush1.msra.mxu0 0.0
  %2060 = vmatprep.subr.mxu0 0.0
  %2061 = vmatpush1.msra.mxu0 0.0
  %2062 = vmatprep.subr.mxu0 0.0
  %2063 = vmatpush1.msra.mxu0 0.0
  %2064 = vmatprep.subr.mxu0 0.0
  %2065 = vmatpush1.msra.mxu0 0.0
  %2066 = vmatprep.subr.mxu0 0.0
  %2067 = vmatpush1.msra.mxu0 0.0
  %2068 = vmatprep.subr.mxu0 0.0
  %2069 = vmatpush1.msra.mxu0 0.0
  %2070 = vmatprep.subr.mxu0 0.0
  %2071 = vmatpush1.msra.mxu0 0.0
  %2072 = vmatprep.subr.mxu0 0.0
  %2073 = vmatpush1.msra.mxu0 0.0
  %2074 = vmatprep.subr.mxu0 0.0
  %2075 = vmatpush1.msra.mxu0 0.0
  %2076 = vmatprep.subr.mxu0 0.0
  %2077 = vmatpush1.msra.mxu0 0.0
  %2078 = vmatprep.subr.mxu0 0.0
  %2079 = vmatpush1.msra.mxu0 0.0
  %2080 = vmatprep.subr.mxu0 0.0
  %2081 = vmatpush1.msra.mxu0 0.0
  %2082 = vmatprep.subr.mxu0 0.0
  %2083 = vmatpush1.msra.mxu0 0.0
  %2084 = vmatprep.subr.mxu0 0.0
  %2085 = vmatpush1.msra.mxu0 0.0
  %2086 = vmatprep.subr.mxu0 0.0
  %2087 = vmatpush1.msra.mxu0 0.0
  %2088 = vmatprep.subr.mxu0 0.0
  %2089 = vmatpush1.msra.mxu0 0.0
  %2090 = vmatprep.subr.mxu0 0.0
  %2091 = vmatpush1.msra.mxu0 0.0
  %2092 = vmatprep.subr.mxu0 0.0
  %2093 = vmatpush1.msra.mxu0 0.0
  %2094 = vmatprep.subr.mxu0 0.0
  %2095 = vmatpush1.msra.mxu0 0.0
  %2096 = vmatprep.subr.mxu0 0.0
  %2097 = vmatpush1.msra.mxu0 0.0
  %2098 = vmatprep.subr.mxu0 0.0
  %2099 = vmatpush1.msra.mxu0 0.0
  %2100 = vmatprep.subr.mxu0 0.0
  %2101 = vmatpush1.msra.mxu0 0.0
  %2102 = vmatprep.subr.mxu0 0.0
  %2103 = vmatpush1.msra.mxu0 0.0
  %2104 = vmatprep.subr.mxu0 0.0
  %2105 = vmatpush1.msra.mxu0 0.0
  %2106 = vmatprep.subr.mxu0 0.0
  %2107 = vmatpush1.msra.mxu0 0.0
  %2108 = vmatprep.subr.mxu0 0.0
  %2109 = vmatpush1.msra.mxu0 0.0
  %2110 = vmatprep.subr.mxu0 0.0
  %2111 = vmatpush1.msra.mxu0 0.0
  %2112 = vmatprep.subr.mxu0 0.0
  %2113 = vmatpush1.msra.mxu0 0.0
  %2114 = vmatprep.subr.mxu0 0.0
  %2115 = vmatpush1.msra.mxu0 0.0
  %2116 = vmatprep.subr.mxu0 0.0
  %2117 = vmatpush1.msra.mxu0 0.0
  %2118 = vmatprep.subr.mxu0 0.0
  %2119 = vmatpush1.msra.mxu0 0.0
  %2120 = vmatprep.mubr.f32.mxu0 0.0
  %2121 = vmatmul.mubr.f32.gmra.mrb[0].mxu0 %v64
  %v2122 = vpop.f32.mrb[0].mxu0
  %v2123 = vadd.f32 %v2027, %v2122
  %v2124 = vpop.f32.mrb[0].mxu0
  %v2125 = vadd.f32 %v2027, %v2124
  %2126 = vmatprep.mubr.f32.mxu0 0.0
  %2127 = vmatmul.mubr.f32.gmra.mrb[0].mxu0 %v67
  %v2128 = vpop.f32.mrb[0].mxu0
  %v2129 = vadd.f32 %v2032, %v2128
  %v2130 = vpop.f32.mrb[0].mxu0
  %v2131 = vadd.f32 %v2032, %v2130
  %2132 = vmatprep.mubr.f32.mxu0 0.0
  %2133 = vmatmul.mubr.f32.gmra.mrb[0].mxu0 %v70
  %v2134 = vpop.f32.mrb[0].mxu0
  %v2135 = vadd.f32 %v2037, %v2134
  %v2136 = vpop.f32.mrb[0].mxu0
  %v2137 = vadd.f32 %v2037, %v2136
  %2138 = vmatprep.mubr.f32.mxu0 0.0
  %2139 = vmatmul.mubr.f32.gmra.mrb[0].mxu0 %v73
  %v2140 = vpop.f32.mrb[0].mxu0
  %v2141 = vadd.f32 %v2042, %v2140
  %v2142 = vpop.f32.mrb[0].mxu0
  %v2143 = vadd.f32 %v2042, %v2142
  %2144 = vdwg.mxu0
  %2145 = vmatprep.subr.mxu0 %v2054
  %2146 = vmatpush1.msra.mxu0 %v2052
  %2147 = vmatprep.subr.mxu0 0.0
  %2148 = vmatpush1.msra.mxu0 0.0
  %2149 = vmatprep.subr.mxu0 0.0
  %2150 = vmatpush1.msra.mxu0 0.0
  %2151 = vmatprep.subr.mxu0 0.0
  %2152 = vmatpush1.msra.mxu0 0.0
  %2153 = vmatprep.subr.mxu0 0.0
  %2154 = vmatpush1.msra.mxu0 0.0
  %2155 = vmatprep.subr.mxu0 0.0
  %2156 = vmatpush1.msra.mxu0 0.0
  %2157 = vmatprep.subr.mxu0 0.0
  %2158 = vmatpush1.msra.mxu0 0.0
  %2159 = vmatprep.subr.mxu0 0.0
  %2160 = vmatpush1.msra.mxu0 0.0
  %2161 = vmatprep.subr.mxu0 0.0
  %2162 = vmatpush1.msra.mxu0 0.0
  %2163 = vmatprep.subr.mxu0 0.0
  %2164 = vmatpush1.msra.mxu0 0.0
  %2165 = vmatprep.subr.mxu0 0.0
  %2166 = vmatpush1.msra.mxu0 0.0
  %2167 = vmatprep.subr.mxu0 0.0
  %2168 = vmatpush1.msra.mxu0 0.0
  %2169 = vmatprep.subr.mxu0 0.0
  %2170 = vmatpush1.msra.mxu0 0.0
  %2171 = vmatprep.subr.mxu0 0.0
  %2172 = vmatpush1.msra.mxu0 0.0
  %2173 = vmatprep.subr.mxu0 0.0
  %2174 = vmatpush1.msra.mxu0 0.0
  %2175 = vmatprep.subr.mxu0 0.0
  %2176 = vmatpush1.msra.mxu0 0.0
  %2177 = vmatprep.subr.mxu0 0.0
  %2178 = vmatpush1.msra.mxu0 0.0
  %2179 = vmatprep.subr.mxu0 0.0
  %2180 = vmatpush1.msra.mxu0 0.0
  %2181 = vmatprep.subr.mxu0 0.0
  %2182 = vmatpush1.msra.mxu0 0.0
  %2183 = vmatprep.subr.mxu0 0.0
  %2184 = vmatpush1.msra.mxu0 0.0
  %2185 = vmatprep.subr.mxu0 0.0
  %2186 = vmatpush1.msra.mxu0 0.0
  %2187 = vmatprep.subr.mxu0 0.0
  %2188 = vmatpush1.msra.mxu0 0.0
  %2189 = vmatprep.subr.mxu0 0.0
  %2190 = vmatpush1.msra.mxu0 0.0
  %2191 = vmatprep.subr.mxu0 0.0
  %2192 = vmatpush1.msra.mxu0 0.0
  %2193 = vmatprep.subr.mxu0 0.0
  %2194 = vmatpush1.msra.mxu0 0.0
  %2195 = vmatprep.subr.mxu0 0.0
  %2196 = vmatpush1.msra.mxu0 0.0
  %2197 = vmatprep.subr.mxu0 0.0
  %2198 = vmatpush1.msra.mxu0 0.0
  %2199 = vmatprep.subr.mxu0 0.0
  %2200 = vmatpush1.msra.mxu0 0.0
  %2201 = vmatprep.subr.mxu0 0.0
  %2202 = vmatpush1.msra.mxu0 0.0
  %2203 = vmatprep.subr.mxu0 0.0
  %2204 = vmatpush1.msra.mxu0 0.0
  %2205 = vmatprep.subr.mxu0 0.0
  %2206 = vmatpush1.msra.mxu0 0.0
  %2207 = vmatprep.subr.mxu0 0.0
  %2208 = vmatpush1.msra.mxu0 0.0
  %2209 = vmatprep.mubr.f32.mxu0 0.0
  %2210 = vmatmul.mubr.f32.gmra.mrb[0].mxu0 %v64
  %v2211 = vpop.f32.mrb[0].mxu0
  %v2212 = vadd.f32 %v2027, %v2211
  %v2213 = vpop.f32.mrb[0].mxu0
  %v2214 = vadd.f32 %v2027, %v2213
  %2215 = vmatprep.mubr.f32.mxu0 0.0
  %2216 = vmatmul.mubr.f32.gmra.mrb[0].mxu0 %v67
  %v2217 = vpop.f32.mrb[0].mxu0
  %v2218 = vadd.f32 %v2032, %v2217
  %v2219 = vpop.f32.mrb[0].mxu0
  %v2220 = vadd.f32 %v2032, %v2219
  %2221 = vmatprep.mubr.f32.mxu0 0.0
  %2222 = vmatmul.mubr.f32.gmra.mrb[0].mxu0 %v70
  %v2223 = vpop.f32.mrb[0].mxu0
  %v2224 = vadd.f32 %v2037, %v2223
  %v2225 = vpop.f32.mrb[0].mxu0
  %v2226 = vadd.f32 %v2037, %v2225
  %2227 = vmatprep.mubr.f32.mxu0 0.0
  %2228 = vmatmul.mubr.f32.gmra.mrb[0].mxu0 %v73
  %v2229 = vpop.f32.mrb[0].mxu0
  %v2230 = vadd.f32 %v2042, %v2229
  %v2231 = vpop.f32.mrb[0].mxu0
  %v2232 = vadd.f32 %v2042, %v2231
  %2233 = vdwg.mxu0
  %v2234 = vtanh.pop %v2123
  %v2235 = vtanh.pop %v2125
  %v2236 = vtanh.pop %v2212
  %v2237 = vtanh.pop %v2214
  %v2238 = vtanh.pop %v2129
  %v2239 = vtanh.pop %v2131
  %v2240 = vtanh.pop %v2218
  %v2241 = vtanh.pop %v2220
  %v2242 = vtanh.pop %v2135
  %v2243 = vtanh.pop %v2137
  %v2244 = vtanh.pop %v2224
  %v2245 = vtanh.pop %v2226
  %v2246 = vtanh.pop %v2141
  %v2247 = vtanh.pop %v2143
  %v2248 = vtanh.pop %v2230
  %v2249 = vtanh.pop %v2232
  %2250 = vmatprep.subr.mxu0 %v2235
  %2251 = vmatpush1.msra.mxu0 %v2234
  %2252 = vmatprep.subr.mxu0 %v2239
  %2253 = vmatpush1.msra.mxu0 %v2238
  %2254 = vmatprep.subr.mxu0 %v2243
  %2255 = vmatpush1.msra.mxu0 %v2242
  %2256 = vmatprep.subr.mxu0 %v2247
  %2257 = vmatpush1.msra.mxu0 %v2246
  %2258 = vmatprep.subr.mxu0 0.0
  %2259 = vmatpush1.msra.mxu0 0.0
  %2260 = vmatprep.subr.mxu0 0.0
  %2261 = vmatpush1.msra.mxu0 0.0
  %2262 = vmatprep.subr.mxu0 0.0
  %2263 = vmatpush1.msra.mxu0 0.0
  %2264 = vmatprep.subr.mxu0 0.0
  %2265 = vmatpush1.msra.mxu0 0.0
  %2266 = vmatprep.subr.mxu0 0.0
  %2267 = vmatpush1.msra.mxu0 0.0
  %2268 = vmatprep.subr.mxu0 0.0
  %2269 = vmatpush1.msra.mxu0 0.0
  %2270 = vmatprep.subr.mxu0 0.0
  %2271 = vmatpush1.msra.mxu0 0.0
  %2272 = vmatprep.subr.mxu0 0.0
  %2273 = vmatpush1.msra.mxu0 0.0
  %2274 = vmatprep.subr.mxu0 0.0
  %2275 = vmatpush1.msra.mxu0 0.0
  %2276 = vmatprep.subr.mxu0 0.0
  %2277 = vmatpush1.msra.mxu0 0.0
  %2278 = vmatprep.subr.mxu0 0.0
  %2279 = vmatpush1.msra.mxu0 0.0
  %2280 = vmatprep.subr.mxu0 0.0
  %2281 = vmatpush1.msra.mxu0 0.0
  %2282 = vmatprep.subr.mxu0 0.0
  %2283 = vmatpush1.msra.mxu0 0.0
  %2284 = vmatprep.subr.mxu0 0.0
  %2285 = vmatpush1.msra.mxu0 0.0
  %2286 = vmatprep.subr.mxu0 0.0
  %2287 = vmatpush1.msra.mxu0 0.0
  %2288 = vmatprep.subr.mxu0 0.0
  %2289 = vmatpush1.msra.mxu0 0.0
  %2290 = vmatprep.subr.mxu0 0.0
  %2291 = vmatpush1.msra.mxu0 0.0
  %2292 = vmatprep.subr.mxu0 0.0
  %2293 = vmatpush1.msra.mxu0 0.0
  %2294 = vmatprep.subr.mxu0 0.0
  %2295 = vmatpush1.msra.mxu0 0.0
  %2296 = vmatprep.subr.mxu0 0.0
  %2297 = vmatpush1.msra.mxu0 0.0
  %2298 = vmatprep.subr.mxu0 0.0
  %2299 = vmatpush1.msra.mxu0 0.0
  %2300 = vmatprep.subr.mxu0 0.0
  %2301 = vmatpush1.msra.mxu0 0.0
  %2302 = vmatprep.subr.mxu0 0.0
  %2303 = vmatpush1.msra.mxu0 0.0
  %2304 = vmatprep.subr.mxu0 0.0
  %2305 = vmatpush1.msra.mxu0 0.0
  %2306 = vmatprep.subr.mxu0 0.0
  %2307 = vmatpush1.msra.mxu0 0.0
  %2308 = vmatprep.subr.mxu0 0.0
  %2309 = vmatpush1.msra.mxu0 0.0
  %2310 = vmatprep.subr.mxu0 0.0
  %2311 = vmatpush1.msra.mxu0 0.0
  %2312 = vmatprep.subr.mxu0 0.0
  %2313 = vmatpush1.msra.mxu0 0.0
  %2314 = vmatprep.mubr.f32.mxu0 0.0
  %2315 = vmatmul.mubr.f32.gmra.mrb[0].mxu0 %v285
  %v2316 = vpop.f32.mrb[0].mxu0
  %v2317 = vadd.f32 %v281, %v2316
  %v2318 = vpop.f32.mrb[0].mxu0
  %v2319 = vadd.f32 %v281, %v2318
  %2320 = vdwg.mxu0
  %2321 = vmatprep.subr.mxu0 %v2237
  %2322 = vmatpush1.msra.mxu0 %v2236
  %2323 = vmatprep.subr.mxu0 %v2241
  %2324 = vmatpush1.msra.mxu0 %v2240
  %2325 = vmatprep.subr.mxu0 %v2245
  %2326 = vmatpush1.msra.mxu0 %v2244
  %2327 = vmatprep.subr.mxu0 %v2249
  %2328 = vmatpush1.msra.mxu0 %v2248
  %2329 = vmatprep.subr.mxu0 0.0
  %2330 = vmatpush1.msra.mxu0 0.0
  %2331 = vmatprep.subr.mxu0 0.0
  %2332 = vmatpush1.msra.mxu0 0.0
  %2333 = vmatprep.subr.mxu0 0.0
  %2334 = vmatpush1.msra.mxu0 0.0
  %2335 = vmatprep.subr.mxu0 0.0
  %2336 = vmatpush1.msra.mxu0 0.0
  %2337 = vmatprep.subr.mxu0 0.0
  %2338 = vmatpush1.msra.mxu0 0.0
  %2339 = vmatprep.subr.mxu0 0.0
  %2340 = vmatpush1.msra.mxu0 0.0
  %2341 = vmatprep.subr.mxu0 0.0
  %2342 = vmatpush1.msra.mxu0 0.0
  %2343 = vmatprep.subr.mxu0 0.0
  %2344 = vmatpush1.msra.mxu0 0.0
  %2345 = vmatprep.subr.mxu0 0.0
  %2346 = vmatpush1.msra.mxu0 0.0
  %2347 = vmatprep.subr.mxu0 0.0
  %2348 = vmatpush1.msra.mxu0 0.0
  %2349 = vmatprep.subr.mxu0 0.0
  %2350 = vmatpush1.msra.mxu0 0.0
  %2351 = vmatprep.subr.mxu0 0.0
  %2352 = vmatpush1.msra.mxu0 0.0
  %2353 = vmatprep.subr.mxu0 0.0
  %2354 = vmatpush1.msra.mxu0 0.0
  %2355 = vmatprep.subr.mxu0 0.0
  %2356 = vmatpush1.msra.mxu0 0.0
  %2357 = vmatprep.subr.mxu0 0.0
  %2358 = vmatpush1.msra.mxu0 0.0
  %2359 = vmatprep.subr.mxu0 0.0
  %2360 = vmatpush1.msra.mxu0 0.0
  %2361 = vmatprep.subr.mxu0 0.0
  %2362 = vmatpush1.msra.mxu0 0.0
  %2363 = vmatprep.subr.mxu0 0.0
  %2364 = vmatpush1.msra.mxu0 0.0
  %2365 = vmatprep.subr.mxu0 0.0
  %2366 = vmatpush1.msra.mxu0 0.0
  %2367 = vmatprep.subr.mxu0 0.0
  %2368 = vmatpush1.msra.mxu0 0.0
  %2369 = vmatprep.subr.mxu0 0.0
  %2370 = vmatpush1.msra.mxu0 0.0
  %2371 = vmatprep.subr.mxu0 0.0
  %2372 = vmatpush1.msra.mxu0 0.0
  %2373 = vmatprep.subr.mxu0 0.0
  %2374 = vmatpush1.msra.mxu0 0.0
  %2375 = vmatprep.subr.mxu0 0.0
  %2376 = vmatpush1.msra.mxu0 0.0
  %2377 = vmatprep.subr.mxu0 0.0
  %2378 = vmatpush1.msra.mxu0 0.0
  %2379 = vmatprep.subr.mxu0 0.0
  %2380 = vmatpush1.msra.mxu0 0.0
  %2381 = vmatprep.subr.mxu0 0.0
  %2382 = vmatpush1.msra.mxu0 0.0
  %2383 = vmatprep.subr.mxu0 0.0
  %2384 = vmatpush1.msra.mxu0 0.0
  %2385 = vmatprep.mubr.f32.mxu0 0.0
  %2386 = vmatmul.mubr.f32.gmra.mrb[0].mxu0 %v285
  %v2387 = vpop.f32.mrb[0].mxu0
  %v2388 = vadd.f32 %v281, %v2387
  %v2389 = vpop.f32.mrb[0].mxu0
  %v2390 = vadd.f32 %v281, %v2389
  %2391 = vdwg.mxu0
  %s2392 = scalar_lea.vmem %s5, 80
  %v2393 = vld [vmem:[%s2392] sm:$0xff]
  %v2394 = vld [vmem:[%s2392 + $0x8] sm:$0xff]
  %v2395 = vmul.f32 %v2393, %v2017
  %v2396 = vmul.f32 %v2394, %v2018
  %s2397 = scalar_lea.vmem %s6, 80
  %v2398 = vld [vmem:[%s2397] sm:$0xff]
  %v2399 = vld [vmem:[%s2397 + $0x8] sm:$0xff]
  %v2404 = vcombine.low %v2317, %v2319
  %v2405 = vcombine.low %v2388, %v2390
  %v2408 = vmul.f32 %v2398, %v2404
  %v2409 = vmul.f32 %v2399, %v2405
  %v2410 = vadd.f32 %v2395, %v2408
  %v2411 = vadd.f32 %v2396, %v2409
  %s2412 = scalar_lea.vmem %s2, 192
  %v2413 = vld [vmem:[%s2412] sm:$0xff]
  %v2414 = vld [vmem:[%s2412 + $0x8] sm:$0xff]
  %v2415 = vld [vmem:[%s2412 + $0x10] sm:$0xff]
  %v2416 = vld [vmem:[%s2412 + $0x18] sm:$0xff]
  %2418 = vset.pattern.permute.xlu0 0
  %2419 = vperm.xlu0 %2418, %v2413
  %v2420 = vpop.permute.xlu0 %2419
  %2423 = vset.pattern.permute.xlu0 0
  %2424 = vperm.xlu0 %2423, %v2414
  %v2425 = vpop.permute.xlu0 %2424
  %2428 = vset.pattern.permute.xlu0 0
  %2429 = vperm.xlu0 %2428, %v2415
  %v2430 = vpop.permute.xlu0 %2429
  %2433 = vset.pattern.permute.xlu0 0
  %2434 = vperm.xlu0 %2433, %v2416
  %v2435 = vpop.permute.xlu0 %2434
  %v2439 = vcombine.high %v2410, %v2410
  %v2440 = vcombine.high %v2411, %v2411
  %v2441 = vsel %vm75, %v2410, 0
  %v2443 = vsel %vm75, %v2439, 0
  %v2445 = vsel %vm75, %v2411, 0
  %v2447 = vsel %vm75, %v2440, 0
  %2449 = vmatprep.subr.mxu0 %v2443
  %2450 = vmatpush1.msra.mxu0 %v2441
  %2451 = vmatprep.subr.mxu0 0.0
  %2452 = vmatpush1.msra.mxu0 0.0
  %2453 = vmatprep.subr.mxu0 0.0
  %2454 = vmatpush1.msra.mxu0 0.0
  %2455 = vmatprep.subr.mxu0 0.0
  %2456 = vmatpush1.msra.mxu0 0.0
  %2457 = vmatprep.subr.mxu0 0.0
  %2458 = vmatpush1.msra.mxu0 0.0
  %2459 = vmatprep.subr.mxu0 0.0
  %2460 = vmatpush1.msra.mxu0 0.0
  %2461 = vmatprep.subr.mxu0 0.0
  %2462 = vmatpush1.msra.mxu0 0.0
  %2463 = vmatprep.subr.mxu0 0.0
  %2464 = vmatpush1.msra.mxu0 0.0
  %2465 = vmatprep.subr.mxu0 0.0
  %2466 = vmatpush1.msra.mxu0 0.0
  %2467 = vmatprep.subr.mxu0 0.0
  %2468 = vmatpush1.msra.mxu0 0.0
  %2469 = vmatprep.subr.mxu0 0.0
  %2470 = vmatpush1.msra.mxu0 0.0
  %2471 = vmatprep.subr.mxu0 0.0
  %2472 = vmatpush1.msra.mxu0 0.0
  %2473 = vmatprep.subr.mxu0 0.0
  %2474 = vmatpush1.msra.mxu0 0.0
  %2475 = vmatprep.subr.mxu0 0.0
  %2476 = vmatpush1.msra.mxu0 0.0
  %2477 = vmatprep.subr.mxu0 0.0
  %2478 = vmatpush1.msra.mxu0 0.0
  %2479 = vmatprep.subr.mxu0 0.0
  %2480 = vmatpush1.msra.mxu0 0.0
  %2481 = vmatprep.subr.mxu0 0.0
  %2482 = vmatpush1.msra.mxu0 0.0
  %2483 = vmatprep.subr.mxu0 0.0
  %2484 = vmatpush1.msra.mxu0 0.0
  %2485 = vmatprep.subr.mxu0 0.0
  %2486 = vmatpush1.msra.mxu0 0.0
  %2487 = vmatprep.subr.mxu0 0.0
  %2488 = vmatpush1.msra.mxu0 0.0
  %2489 = vmatprep.subr.mxu0 0.0
  %2490 = vmatpush1.msra.mxu0 0.0
  %2491 = vmatprep.subr.mxu0 0.0
  %2492 = vmatpush1.msra.mxu0 0.0
  %2493 = vmatprep.subr.mxu0 0.0
  %2494 = vmatpush1.msra.mxu0 0.0
  %2495 = vmatprep.subr.mxu0 0.0
  %2496 = vmatpush1.msra.mxu0 0.0
  %2497 = vmatprep.subr.mxu0 0.0
  %2498 = vmatpush1.msra.mxu0 0.0
  %2499 = vmatprep.subr.mxu0 0.0
  %2500 = vmatpush1.msra.mxu0 0.0
  %2501 = vmatprep.subr.mxu0 0.0
  %2502 = vmatpush1.msra.mxu0 0.0
  %2503 = vmatprep.subr.mxu0 0.0
  %2504 = vmatpush1.msra.mxu0 0.0
  %2505 = vmatprep.subr.mxu0 0.0
  %2506 = vmatpush1.msra.mxu0 0.0
  %2507 = vmatprep.subr.mxu0 0.0
  %2508 = vmatpush1.msra.mxu0 0.0
  %2509 = vmatprep.subr.mxu0 0.0
  %2510 = vmatpush1.msra.mxu0 0.0
  %2511 = vmatprep.subr.mxu0 0.0
  %2512 = vmatpush1.msra.mxu0 0.0
  %2513 = vmatprep.mubr.f32.mxu0 0.0
  %2514 = vmatmul.mubr.f32.gmra.mrb[0].mxu0 %v64
  %v2515 = vpop.f32.mrb[0].mxu0
  %v2516 = vadd.f32 %v2420, %v2515
  %v2517 = vpop.f32.mrb[0].mxu0
  %v2518 = vadd.f32 %v2420, %v2517
  %2519 = vmatprep.mubr.f32.mxu0 0.0
  %2520 = vmatmul.mubr.f32.gmra.mrb[0].mxu0 %v67
  %v2521 = vpop.f32.mrb[0].mxu0
  %v2522 = vadd.f32 %v2425, %v2521
  %v2523 = vpop.f32.mrb[0].mxu0
  %v2524 = vadd.f32 %v2425, %v2523
  %2525 = vmatprep.mubr.f32.mxu0 0.0
  %2526 = vmatmul.mubr.f32.gmra.mrb[0].mxu0 %v70
  %v2527 = vpop.f32.mrb[0].mxu0
  %v2528 = vadd.f32 %v2430, %v2527
  %v2529 = vpop.f32.mrb[0].mxu0
  %v2530 = vadd.f32 %v2430, %v2529
  %2531 = vmatprep.mubr.f32.mxu0 0.0
  %2532 = vmatmul.mubr.f32.gmra.mrb[0].mxu0 %v73
  %v2533 = vpop.f32.mrb[0].mxu0
  %v2534 = vadd.f32 %v2435, %v2533
  %v2535 = vpop.f32.mrb[0].mxu0
  %v2536 = vadd.f32 %v2435, %v2535
  %2537 = vdwg.mxu0
  %2538 = vmatprep.subr.mxu0 %v2447
  %2539 = vmatpush1.msra.mxu0 %v2445
  %2540 = vmatprep.subr.mxu0 0.0
  %2541 = vmatpush1.msra.mxu0 0.0
  %2542 = vmatprep.subr.mxu0 0.0
  %2543 = vmatpush1.msra.mxu0 0.0
  %2544 = vmatprep.subr.mxu0 0.0
  %2545 = vmatpush1.msra.mxu0 0.0
  %2546 = vmatprep.subr.mxu0 0.0
  %2547 = vmatpush1.msra.mxu0 0.0
  %2548 = vmatprep.subr.mxu0 0.0
  %2549 = vmatpush1.msra.mxu0 0.0
  %2550 = vmatprep.subr.mxu0 0.0
  %2551 = vmatpush1.msra.mxu0 0.0
  %2552 = vmatprep.subr.mxu0 0.0
  %2553 = vmatpush1.msra.mxu0 0.0
  %2554 = vmatprep.subr.mxu0 0.0
  %2555 = vmatpush1.msra.mxu0 0.0
  %2556 = vmatprep.subr.mxu0 0.0
  %2557 = vmatpush1.msra.mxu0 0.0
  %2558 = vmatprep.subr.mxu0 0.0
  %2559 = vmatpush1.msra.mxu0 0.0
  %2560 = vmatprep.subr.mxu0 0.0
  %2561 = vmatpush1.msra.mxu0 0.0
  %2562 = vmatprep.subr.mxu0 0.0
  %2563 = vmatpush1.msra.mxu0 0.0
  %2564 = vmatprep.subr.mxu0 0.0
  %2565 = vmatpush1.msra.mxu0 0.0
  %2566 = vmatprep.subr.mxu0 0.0
  %2567 = vmatpush1.msra.mxu0 0.0
  %2568 = vmatprep.subr.mxu0 0.0
  %2569 = vmatpush1.msra.mxu0 0.0
  %2570 = vmatprep.subr.mxu0 0.0
  %2571 = vmatpush1.msra.mxu0 0.0
  %2572 = vmatprep.subr.mxu0 0.0
  %2573 = vmatpush1.msra.mxu0 0.0
  %2574 = vmatprep.subr.mxu0 0.0
  %2575 = vmatpush1.msra.mxu0 0.0
  %2576 = vmatprep.subr.mxu0 0.0
  %2577 = vmatpush1.msra.mxu0 0.0
  %2578 = vmatprep.subr.mxu0 0.0
  %2579 = vmatpush1.msra.mxu0 0.0
  %2580 = vmatprep.subr.mxu0 0.0
  %2581 = vmatpush1.msra.mxu0 0.0
  %2582 = vmatprep.subr.mxu0 0.0
  %2583 = vmatpush1.msra.mxu0 0.0
  %2584 = vmatprep.subr.mxu0 0.0
  %2585 = vmatpush1.msra.mxu0 0.0
  %2586 = vmatprep.subr.mxu0 0.0
  %2587 = vmatpush1.msra.mxu0 0.0
  %2588 = vmatprep.subr.mxu0 0.0
  %2589 = vmatpush1.msra.mxu0 0.0
  %2590 = vmatprep.subr.mxu0 0.0
  %2591 = vmatpush1.msra.mxu0 0.0
  %2592 = vmatprep.subr.mxu0 0.0
  %2593 = vmatpush1.msra.mxu0 0.0
  %2594 = vmatprep.subr.mxu0 0.0
  %2595 = vmatpush1.msra.mxu0 0.0
  %2596 = vmatprep.subr.mxu0 0.0
  %2597 = vmatpush1.msra.mxu0 0.0
  %2598 = vmatprep.subr.mxu0 0.0
  %2599 = vmatpush1.msra.mxu0 0.0
  %2600 = vmatprep.subr.mxu0 0.0
  %2601 = vmatpush1.msra.mxu0 0.0
  %2602 = vmatprep.mubr.f32.mxu0 0.0
  %2603 = vmatmul.mubr.f32.gmra.mrb[0].mxu0 %v64
  %v2604 = vpop.f32.mrb[0].mxu0
  %v2605 = vadd.f32 %v2420, %v2604
  %v2606 = vpop.f32.mrb[0].mxu0
  %v2607 = vadd.f32 %v2420, %v2606
  %2608 = vmatprep.mubr.f32.mxu0 0.0
  %2609 = vmatmul.mubr.f32.gmra.mrb[0].mxu0 %v67
  %v2610 = vpop.f32.mrb[0].mxu0
  %v2611 = vadd.f32 %v2425, %v2610
  %v2612 = vpop.f32.mrb[0].mxu0
  %v2613 = vadd.f32 %v2425, %v2612
  %2614 = vmatprep.mubr.f32.mxu0 0.0
  %2615 = vmatmul.mubr.f32.gmra.mrb[0].mxu0 %v70
  %v2616 = vpop.f32.mrb[0].mxu0
  %v2617 = vadd.f32 %v2430, %v2616
  %v2618 = vpop.f32.mrb[0].mxu0
  %v2619 = vadd.f32 %v2430, %v2618
  %2620 = vmatprep.mubr.f32.mxu0 0.0
  %2621 = vmatmul.mubr.f32.gmra.mrb[0].mxu0 %v73
  %v2622 = vpop.f32.mrb[0].mxu0
  %v2623 = vadd.f32 %v2435, %v2622
  %v2624 = vpop.f32.mrb[0].mxu0
  %v2625 = vadd.f32 %v2435, %v2624
  %2626 = vdwg.mxu0
  %v2627 = vtanh.pop %v2516
  %v2628 = vtanh.pop %v2518
  %v2629 = vtanh.pop %v2605
  %v2630 = vtanh.pop %v2607
  %v2631 = vtanh.pop %v2522
  %v2632 = vtanh.pop %v2524
  %v2633 = vtanh.pop %v2611
  %v2634 = vtanh.pop %v2613
  %v2635 = vtanh.pop %v2528
  %v2636 = vtanh.pop %v2530
  %v2637 = vtanh.pop %v2617
  %v2638 = vtanh.pop %v2619
  %v2639 = vtanh.pop %v2534
  %v2640 = vtanh.pop %v2536
  %v2641 = vtanh.pop %v2623
  %v2642 = vtanh.pop %v2625
  %2643 = vmatprep.subr.mxu0 %v2628
  %2644 = vmatpush1.msra.mxu0 %v2627
  %2645 = vmatprep.subr.mxu0 %v2632
  %2646 = vmatpush1.msra.mxu0 %v2631
  %2647 = vmatprep.subr.mxu0 %v2636
  %2648 = vmatpush1.msra.mxu0 %v2635
  %2649 = vmatprep.subr.mxu0 %v2640
  %2650 = vmatpush1.msra.mxu0 %v2639
  %2651 = vmatprep.subr.mxu0 0.0
  %2652 = vmatpush1.msra.mxu0 0.0
  %2653 = vmatprep.subr.mxu0 0.0
  %2654 = vmatpush1.msra.mxu0 0.0
  %2655 = vmatprep.subr.mxu0 0.0
  %2656 = vmatpush1.msra.mxu0 0.0
  %2657 = vmatprep.subr.mxu0 0.0
  %2658 = vmatpush1.msra.mxu0 0.0
  %2659 = vmatprep.subr.mxu0 0.0
  %2660 = vmatpush1.msra.mxu0 0.0
  %2661 = vmatprep.subr.mxu0 0.0
  %2662 = vmatpush1.msra.mxu0 0.0
  %2663 = vmatprep.subr.mxu0 0.0
  %2664 = vmatpush1.msra.mxu0 0.0
  %2665 = vmatprep.subr.mxu0 0.0
  %2666 = vmatpush1.msra.mxu0 0.0
  %2667 = vmatprep.subr.mxu0 0.0
  %2668 = vmatpush1.msra.mxu0 0.0
  %2669 = vmatprep.subr.mxu0 0.0
  %2670 = vmatpush1.msra.mxu0 0.0
  %2671 = vmatprep.subr.mxu0 0.0
  %2672 = vmatpush1.msra.mxu0 0.0
  %2673 = vmatprep.subr.mxu0 0.0
  %2674 = vmatpush1.msra.mxu0 0.0
  %2675 = vmatprep.subr.mxu0 0.0
  %2676 = vmatpush1.msra.mxu0 0.0
  %2677 = vmatprep.subr.mxu0 0.0
  %2678 = vmatpush1.msra.mxu0 0.0
  %2679 = vmatprep.subr.mxu0 0.0
  %2680 = vmatpush1.msra.mxu0 0.0
  %2681 = vmatprep.subr.mxu0 0.0
  %2682 = vmatpush1.msra.mxu0 0.0
  %2683 = vmatprep.subr.mxu0 0.0
  %2684 = vmatpush1.msra.mxu0 0.0
  %2685 = vmatprep.subr.mxu0 0.0
  %2686 = vmatpush1.msra.mxu0 0.0
  %2687 = vmatprep.subr.mxu0 0.0
  %2688 = vmatpush1.msra.mxu0 0.0
  %2689 = vmatprep.subr.mxu0 0.0
  %2690 = vmatpush1.msra.mxu0 0.0
  %2691 = vmatprep.subr.mxu0 0.0
  %2692 = vmatpush1.msra.mxu0 0.0
  %2693 = vmatprep.subr.mxu0 0.0
  %2694 = vmatpush1.msra.mxu0 0.0
  %2695 = vmatprep.subr.mxu0 0.0
  %2696 = vmatpush1.msra.mxu0 0.0
  %2697 = vmatprep.subr.mxu0 0.0
  %2698 = vmatpush1.msra.mxu0 0.0
  %2699 = vmatprep.subr.mxu0 0.0
  %2700 = vmatpush1.msra.mxu0 0.0
  %2701 = vmatprep.subr.mxu0 0.0
  %2702 = vmatpush1.msra.mxu0 0.0
  %2703 = vmatprep.subr.mxu0 0.0
  %2704 = vmatpush1.msra.mxu0 0.0
  %2705 = vmatprep.subr.mxu0 0.0
  %2706 = vmatpush1.msra.mxu0 0.0
  %2707 = vmatprep.mubr.f32.mxu0 0.0
  %2708 = vmatmul.mubr.f32.gmra.mrb[0].mxu0 %v285
  %v2709 = vpop.f32.mrb[0].mxu0
  %v2710 = vadd.f32 %v281, %v2709
  %v2711 = vpop.f32.mrb[0].mxu0
  %v2712 = vadd.f32 %v281, %v2711
  %2713 = vdwg.mxu0
  %2714 = vmatprep.subr.mxu0 %v2630
  %2715 = vmatpush1.msra.mxu0 %v2629
  %2716 = vmatprep.subr.mxu0 %v2634
  %2717 = vmatpush1.msra.mxu0 %v2633
  %2718 = vmatprep.subr.mxu0 %v2638
  %2719 = vmatpush1.msra.mxu0 %v2637
  %2720 = vmatprep.subr.mxu0 %v2642
  %2721 = vmatpush1.msra.mxu0 %v2641
  %2722 = vmatprep.subr.mxu0 0.0
  %2723 = vmatpush1.msra.mxu0 0.0
  %2724 = vmatprep.subr.mxu0 0.0
  %2725 = vmatpush1.msra.mxu0 0.0
  %2726 = vmatprep.subr.mxu0 0.0
  %2727 = vmatpush1.msra.mxu0 0.0
  %2728 = vmatprep.subr.mxu0 0.0
  %2729 = vmatpush1.msra.mxu0 0.0
  %2730 = vmatprep.subr.mxu0 0.0
  %2731 = vmatpush1.msra.mxu0 0.0
  %2732 = vmatprep.subr.mxu0 0.0
  %2733 = vmatpush1.msra.mxu0 0.0
  %2734 = vmatprep.subr.mxu0 0.0
  %2735 = vmatpush1.msra.mxu0 0.0
  %2736 = vmatprep.subr.mxu0 0.0
  %2737 = vmatpush1.msra.mxu0 0.0
  %2738 = vmatprep.subr.mxu0 0.0
  %2739 = vmatpush1.msra.mxu0 0.0
  %2740 = vmatprep.subr.mxu0 0.0
  %2741 = vmatpush1.msra.mxu0 0.0
  %2742 = vmatprep.subr.mxu0 0.0
  %2743 = vmatpush1.msra.mxu0 0.0
  %2744 = vmatprep.subr.mxu0 0.0
  %2745 = vmatpush1.msra.mxu0 0.0
  %2746 = vmatprep.subr.mxu0 0.0
  %2747 = vmatpush1.msra.mxu0 0.0
  %2748 = vmatprep.subr.mxu0 0.0
  %2749 = vmatpush1.msra.mxu0 0.0
  %2750 = vmatprep.subr.mxu0 0.0
  %2751 = vmatpush1.msra.mxu0 0.0
  %2752 = vmatprep.subr.mxu0 0.0
  %2753 = vmatpush1.msra.mxu0 0.0
  %2754 = vmatprep.subr.mxu0 0.0
  %2755 = vmatpush1.msra.mxu0 0.0
  %2756 = vmatprep.subr.mxu0 0.0
  %2757 = vmatpush1.msra.mxu0 0.0
  %2758 = vmatprep.subr.mxu0 0.0
  %2759 = vmatpush1.msra.mxu0 0.0
  %2760 = vmatprep.subr.mxu0 0.0
  %2761 = vmatpush1.msra.mxu0 0.0
  %2762 = vmatprep.subr.mxu0 0.0
  %2763 = vmatpush1.msra.mxu0 0.0
  %2764 = vmatprep.subr.mxu0 0.0
  %2765 = vmatpush1.msra.mxu0 0.0
  %2766 = vmatprep.subr.mxu0 0.0
  %2767 = vmatpush1.msra.mxu0 0.0
  %2768 = vmatprep.subr.mxu0 0.0
  %2769 = vmatpush1.msra.mxu0 0.0
  %2770 = vmatprep.subr.mxu0 0.0
  %2771 = vmatpush1.msra.mxu0 0.0
  %2772 = vmatprep.subr.mxu0 0.0
  %2773 = vmatpush1.msra.mxu0 0.0
  %2774 = vmatprep.subr.mxu0 0.0
  %2775 = vmatpush1.msra.mxu0 0.0
  %2776 = vmatprep.subr.mxu0 0.0
  %2777 = vmatpush1.msra.mxu0 0.0
  %2778 = vmatprep.mubr.f32.mxu0 0.0
  %2779 = vmatmul.mubr.f32.gmra.mrb[0].mxu0 %v285
  %v2780 = vpop.f32.mrb[0].mxu0
  %v2781 = vadd.f32 %v281, %v2780
  %v2782 = vpop.f32.mrb[0].mxu0
  %v2783 = vadd.f32 %v281, %v2782
  %2784 = vdwg.mxu0
  %s2785 = scalar_lea.vmem %s5, 96
  %v2786 = vld [vmem:[%s2785] sm:$0xff]
  %v2787 = vld [vmem:[%s2785 + $0x8] sm:$0xff]
  %v2788 = vmul.f32 %v2786, %v2410
  %v2789 = vmul.f32 %v2787, %v2411
  %s2790 = scalar_lea.vmem %s6, 96
  %v2791 = vld [vmem:[%s2790] sm:$0xff]
  %v2792 = vld [vmem:[%s2790 + $0x8] sm:$0xff]
  %v2797 = vcombine.low %v2710, %v2712
  %v2798 = vcombine.low %v2781, %v2783
  %v2801 = vmul.f32 %v2791, %v2797
  %v2802 = vmul.f32 %v2792, %v2798
  %v2803 = vadd.f32 %v2788, %v2801
  %v2804 = vadd.f32 %v2789, %v2802
  %s2805 = scalar_lea.vmem %s2, 224
  %v2806 = vld [vmem:[%s2805] sm:$0xff]
  %v2807 = vld [vmem:[%s2805 + $0x8] sm:$0xff]
  %v2808 = vld [vmem:[%s2805 + $0x10] sm:$0xff]
  %v2809 = vld [vmem:[%s2805 + $0x18] sm:$0xff]
  %2811 = vset.pattern.permute.xlu0 0
  %2812 = vperm.xlu0 %2811, %v2806
  %v2813 = vpop.permute.xlu0 %2812
  %2816 = vset.pattern.permute.xlu0 0
  %2817 = vperm.xlu0 %2816, %v2807
  %v2818 = vpop.permute.xlu0 %2817
  %2821 = vset.pattern.permute.xlu0 0
  %2822 = vperm.xlu0 %2821, %v2808
  %v2823 = vpop.permute.xlu0 %2822
  %2826 = vset.pattern.permute.xlu0 0
  %2827 = vperm.xlu0 %2826, %v2809
  %v2828 = vpop.permute.xlu0 %2827
  %v2832 = vcombine.high %v2803, %v2803
  %v2833 = vcombine.high %v2804, %v2804
  %v2834 = vsel %vm75, %v2803, 0
  %v2836 = vsel %vm75, %v2832, 0
  %v2838 = vsel %vm75, %v2804, 0
  %v2840 = vsel %vm75, %v2833, 0
  %2842 = vmatprep.subr.mxu0 %v2836
  %2843 = vmatpush1.msra.mxu0 %v2834
  %2844 = vmatprep.subr.mxu0 0.0
  %2845 = vmatpush1.msra.mxu0 0.0
  %2846 = vmatprep.subr.mxu0 0.0
  %2847 = vmatpush1.msra.mxu0 0.0
  %2848 = vmatprep.subr.mxu0 0.0
  %2849 = vmatpush1.msra.mxu0 0.0
  %2850 = vmatprep.subr.mxu0 0.0
  %2851 = vmatpush1.msra.mxu0 0.0
  %2852 = vmatprep.subr.mxu0 0.0
  %2853 = vmatpush1.msra.mxu0 0.0
  %2854 = vmatprep.subr.mxu0 0.0
  %2855 = vmatpush1.msra.mxu0 0.0
  %2856 = vmatprep.subr.mxu0 0.0
  %2857 = vmatpush1.msra.mxu0 0.0
  %2858 = vmatprep.subr.mxu0 0.0
  %2859 = vmatpush1.msra.mxu0 0.0
  %2860 = vmatprep.subr.mxu0 0.0
  %2861 = vmatpush1.msra.mxu0 0.0
  %2862 = vmatprep.subr.mxu0 0.0
  %2863 = vmatpush1.msra.mxu0 0.0
  %2864 = vmatprep.subr.mxu0 0.0
  %2865 = vmatpush1.msra.mxu0 0.0
  %2866 = vmatprep.subr.mxu0 0.0
  %2867 = vmatpush1.msra.mxu0 0.0
  %2868 = vmatprep.subr.mxu0 0.0
  %2869 = vmatpush1.msra.mxu0 0.0
  %2870 = vmatprep.subr.mxu0 0.0
  %2871 = vmatpush1.msra.mxu0 0.0
  %2872 = vmatprep.subr.mxu0 0.0
  %2873 = vmatpush1.msra.mxu0 0.0
  %2874 = vmatprep.subr.mxu0 0.0
  %2875 = vmatpush1.msra.mxu0 0.0
  %2876 = vmatprep.subr.mxu0 0.0
  %2877 = vmatpush1.msra.mxu0 0.0
  %2878 = vmatprep.subr.mxu0 0.0
  %2879 = vmatpush1.msra.mxu0 0.0
  %2880 = vmatprep.subr.mxu0 0.0
  %2881 = vmatpush1.msra.mxu0 0.0
  %2882 = vmatprep.subr.mxu0 0.0
  %2883 = vmatpush1.msra.mxu0 0.0
  %2884 = vmatprep.subr.mxu0 0.0
  %2885 = vmatpush1.msra.mxu0 0.0
  %2886 = vmatprep.subr.mxu0 0.0
  %2887 = vmatpush1.msra.mxu0 0.0
  %2888 = vmatprep.subr.mxu0 0.0
  %2889 = vmatpush1.msra.mxu0 0.0
  %2890 = vmatprep.subr.mxu0 0.0
  %2891 = vmatpush1.msra.mxu0 0.0
  %2892 = vmatprep.subr.mxu0 0.0
  %2893 = vmatpush1.msra.mxu0 0.0
  %2894 = vmatprep.subr.mxu0 0.0
  %2895 = vmatpush1.msra.mxu0 0.0
  %2896 = vmatprep.subr.mxu0 0.0
  %2897 = vmatpush1.msra.mxu0 0.0
  %2898 = vmatprep.subr.mxu0 0.0
  %2899 = vmatpush1.msra.mxu0 0.0
  %2900 = vmatprep.subr.mxu0 0.0
  %2901 = vmatpush1.msra.mxu0 0.0
  %2902 = vmatprep.subr.mxu0 0.0
  %2903 = vmatpush1.msra.mxu0 0.0
  %2904 = vmatprep.subr.mxu0 0.0
  %2905 = vmatpush1.msra.mxu0 0.0
  %2906 = vmatprep.mubr.f32.mxu0 0.0
  %2907 = vmatmul.mubr.f32.gmra.mrb[0].mxu0 %v64
  %v2908 = vpop.f32.mrb[0].mxu0
  %v2909 = vadd.f32 %v2813, %v2908
  %v2910 = vpop.f32.mrb[0].mxu0
  %v2911 = vadd.f32 %v2813, %v2910
  %2912 = vmatprep.mubr.f32.mxu0 0.0
  %2913 = vmatmul.mubr.f32.gmra.mrb[0].mxu0 %v67
  %v2914 = vpop.f32.mrb[0].mxu0
  %v2915 = vadd.f32 %v2818, %v2914
  %v2916 = vpop.f32.mrb[0].mxu0
  %v2917 = vadd.f32 %v2818, %v2916
  %2918 = vmatprep.mubr.f32.mxu0 0.0
  %2919 = vmatmul.mubr.f32.gmra.mrb[0].mxu0 %v70
  %v2920 = vpop.f32.mrb[0].mxu0
  %v2921 = vadd.f32 %v2823, %v2920
  %v2922 = vpop.f32.mrb[0].mxu0
  %v2923 = vadd.f32 %v2823, %v2922
  %2924 = vmatprep.mubr.f32.mxu0 0.0
  %2925 = vmatmul.mubr.f32.gmra.mrb[0].mxu0 %v73
  %v2926 = vpop.f32.mrb[0].mxu0
  %v2927 = vadd.f32 %v2828, %v2926
  %v2928 = vpop.f32.mrb[0].mxu0
  %v2929 = vadd.f32 %v2828, %v2928
  %2930 = vdwg.mxu0
  %2931 = vmatprep.subr.mxu0 %v2840
  %2932 = vmatpush1.msra.mxu0 %v2838
  %2933 = vmatprep.subr.mxu0 0.0
  %2934 = vmatpush1.msra.mxu0 0.0
  %2935 = vmatprep.subr.mxu0 0.0
  %2936 = vmatpush1.msra.mxu0 0.0
  %2937 = vmatprep.subr.mxu0 0.0
  %2938 = vmatpush1.msra.mxu0 0.0
  %2939 = vmatprep.subr.mxu0 0.0
  %2940 = vmatpush1.msra.mxu0 0.0
  %2941 = vmatprep.subr.mxu0 0.0
  %2942 = vmatpush1.msra.mxu0 0.0
  %2943 = vmatprep.subr.mxu0 0.0
  %2944 = vmatpush1.msra.mxu0 0.0
  %2945 = vmatprep.subr.mxu0 0.0
  %2946 = vmatpush1.msra.mxu0 0.0
  %2947 = vmatprep.subr.mxu0 0.0
  %2948 = vmatpush1.msra.mxu0 0.0
  %2949 = vmatprep.subr.mxu0 0.0
  %2950 = vmatpush1.msra.mxu0 0.0
  %2951 = vmatprep.subr.mxu0 0.0
  %2952 = vmatpush1.msra.mxu0 0.0
  %2953 = vmatprep.subr.mxu0 0.0
  %2954 = vmatpush1.msra.mxu0 0.0
  %2955 = vmatprep.subr.mxu0 0.0
  %2956 = vmatpush1.msra.mxu0 0.0
  %2957 = vmatprep.subr.mxu0 0.0
  %2958 = vmatpush1.msra.mxu0 0.0
  %2959 = vmatprep.subr.mxu0 0.0
  %2960 = vmatpush1.msra.mxu0 0.0
  %2961 = vmatprep.subr.mxu0 0.0
  %2962 = vmatpush1.msra.mxu0 0.0
  %2963 = vmatprep.subr.mxu0 0.0
  %2964 = vmatpush1.msra.mxu0 0.0
  %2965 = vmatprep.subr.mxu0 0.0
  %2966 = vmatpush1.msra.mxu0 0.0
  %2967 = vmatprep.subr.mxu0 0.0
  %2968 = vmatpush1.msra.mxu0 0.0
  %2969 = vmatprep.subr.mxu0 0.0
  %2970 = vmatpush1.msra.mxu0 0.0
  %2971 = vmatprep.subr.mxu0 0.0
  %2972 = vmatpush1.msra.mxu0 0.0
  %2973 = vmatprep.subr.mxu0 0.0
  %2974 = vmatpush1.msra.mxu0 0.0
  %2975 = vmatprep.subr.mxu0 0.0
  %2976 = vmatpush1.msra.mxu0 0.0
  %2977 = vmatprep.subr.mxu0 0.0
  %2978 = vmatpush1.msra.mxu0 0.0
  %2979 = vmatprep.subr.mxu0 0.0
  %2980 = vmatpush1.msra.mxu0 0.0
  %2981 = vmatprep.subr.mxu0 0.0
  %2982 = vmatpush1.msra.mxu0 0.0
  %2983 = vmatprep.subr.mxu0 0.0
  %2984 = vmatpush1.msra.mxu0 0.0
  %2985 = vmatprep.subr.mxu0 0.0
  %2986 = vmatpush1.msra.mxu0 0.0
  %2987 = vmatprep.subr.mxu0 0.0
  %2988 = vmatpush1.msra.mxu0 0.0
  %2989 = vmatprep.subr.mxu0 0.0
  %2990 = vmatpush1.msra.mxu0 0.0
  %2991 = vmatprep.subr.mxu0 0.0
  %2992 = vmatpush1.msra.mxu0 0.0
  %2993 = vmatprep.subr.mxu0 0.0
  %2994 = vmatpush1.msra.mxu0 0.0
  %2995 = vmatprep.mubr.f32.mxu0 0.0
  %2996 = vmatmul.mubr.f32.gmra.mrb[0].mxu0 %v64
  %v2997 = vpop.f32.mrb[0].mxu0
  %v2998 = vadd.f32 %v2813, %v2997
  %v2999 = vpop.f32.mrb[0].mxu0
  %v3000 = vadd.f32 %v2813, %v2999
  %3001 = vmatprep.mubr.f32.mxu0 0.0
  %3002 = vmatmul.mubr.f32.gmra.mrb[0].mxu0 %v67
  %v3003 = vpop.f32.mrb[0].mxu0
  %v3004 = vadd.f32 %v2818, %v3003
  %v3005 = vpop.f32.mrb[0].mxu0
  %v3006 = vadd.f32 %v2818, %v3005
  %3007 = vmatprep.mubr.f32.mxu0 0.0
  %3008 = vmatmul.mubr.f32.gmra.mrb[0].mxu0 %v70
  %v3009 = vpop.f32.mrb[0].mxu0
  %v3010 = vadd.f32 %v2823, %v3009
  %v3011 = vpop.f32.mrb[0].mxu0
  %v3012 = vadd.f32 %v2823, %v3011
  %3013 = vmatprep.mubr.f32.mxu0 0.0
  %3014 = vmatmul.mubr.f32.gmra.mrb[0].mxu0 %v73
  %v3015 = vpop.f32.mrb[0].mxu0
  %v3016 = vadd.f32 %v2828, %v3015
  %v3017 = vpop.f32.mrb[0].mxu0
  %v3018 = vadd.f32 %v2828, %v3017
  %3019 = vdwg.mxu0
  %v3020 = vtanh.pop %v2909
  %v3021 = vtanh.pop %v2911
  %v3022 = vtanh.pop %v2998
  %v3023 = vtanh.pop %v3000
  %v3024 = vtanh.pop %v2915
  %v3025 = vtanh.pop %v2917
  %v3026 = vtanh.pop %v3004
  %v3027 = vtanh.pop %v3006
  %v3028 = vtanh.pop %v2921
  %v3029 = vtanh.pop %v2923
  %v3030 = vtanh.pop %v3010
  %v3031 = vtanh.pop %v3012
  %v3032 = vtanh.pop %v2927
  %v3033 = vtanh.pop %v2929
  %v3034 = vtanh.pop %v3016
  %v3035 = vtanh.pop %v3018
  %3036 = vmatprep.subr.mxu0 %v3021
  %3037 = vmatpush1.msra.mxu0 %v3020
  %3038 = vmatprep.subr.mxu0 %v3025
  %3039 = vmatpush1.msra.mxu0 %v3024
  %3040 = vmatprep.subr.mxu0 %v3029
  %3041 = vmatpush1.msra.mxu0 %v3028
  %3042 = vmatprep.subr.mxu0 %v3033
  %3043 = vmatpush1.msra.mxu0 %v3032
  %3044 = vmatprep.subr.mxu0 0.0
  %3045 = vmatpush1.msra.mxu0 0.0
  %3046 = vmatprep.subr.mxu0 0.0
  %3047 = vmatpush1.msra.mxu0 0.0
  %3048 = vmatprep.subr.mxu0 0.0
  %3049 = vmatpush1.msra.mxu0 0.0
  %3050 = vmatprep.subr.mxu0 0.0
  %3051 = vmatpush1.msra.mxu0 0.0
  %3052 = vmatprep.subr.mxu0 0.0
  %3053 = vmatpush1.msra.mxu0 0.0
  %3054 = vmatprep.subr.mxu0 0.0
  %3055 = vmatpush1.msra.mxu0 0.0
  %3056 = vmatprep.subr.mxu0 0.0
  %3057 = vmatpush1.msra.mxu0 0.0
  %3058 = vmatprep.subr.mxu0 0.0
  %3059 = vmatpush1.msra.mxu0 0.0
  %3060 = vmatprep.subr.mxu0 0.0
  %3061 = vmatpush1.msra.mxu0 0.0
  %3062 = vmatprep.subr.mxu0 0.0
  %3063 = vmatpush1.msra.mxu0 0.0
  %3064 = vmatprep.subr.mxu0 0.0
  %3065 = vmatpush1.msra.mxu0 0.0
  %3066 = vmatprep.subr.mxu0 0.0
  %3067 = vmatpush1.msra.mxu0 0.0
  %3068 = vmatprep.subr.mxu0 0.0
  %3069 = vmatpush1.msra.mxu0 0.0
  %3070 = vmatprep.subr.mxu0 0.0
  %3071 = vmatpush1.msra.mxu0 0.0
  %3072 = vmatprep.subr.mxu0 0.0
  %3073 = vmatpush1.msra.mxu0 0.0
  %3074 = vmatprep.subr.mxu0 0.0
  %3075 = vmatpush1.msra.mxu0 0.0
  %3076 = vmatprep.subr.mxu0 0.0
  %3077 = vmatpush1.msra.mxu0 0.0
  %3078 = vmatprep.subr.mxu0 0.0
  %3079 = vmatpush1.msra.mxu0 0.0
  %3080 = vmatprep.subr.mxu0 0.0
  %3081 = vmatpush1.msra.mxu0 0.0
  %3082 = vmatprep.subr.mxu0 0.0
  %3083 = vmatpush1.msra.mxu0 0.0
  %3084 = vmatprep.subr.mxu0 0.0
  %3085 = vmatpush1.msra.mxu0 0.0
  %3086 = vmatprep.subr.mxu0 0.0
  %3087 = vmatpush1.msra.mxu0 0.0
  %3088 = vmatprep.subr.mxu0 0.0
  %3089 = vmatpush1.msra.mxu0 0.0
  %3090 = vmatprep.subr.mxu0 0.0
  %3091 = vmatpush1.msra.mxu0 0.0
  %3092 = vmatprep.subr.mxu0 0.0
  %3093 = vmatpush1.msra.mxu0 0.0
  %3094 = vmatprep.subr.mxu0 0.0
  %3095 = vmatpush1.msra.mxu0 0.0
  %3096 = vmatprep.subr.mxu0 0.0
  %3097 = vmatpush1.msra.mxu0 0.0
  %3098 = vmatprep.subr.mxu0 0.0
  %3099 = vmatpush1.msra.mxu0 0.0
  %3100 = vmatprep.mubr.f32.mxu0 0.0
  %3101 = vmatmul.mubr.f32.gmra.mrb[0].mxu0 %v285
  %v3102 = vpop.f32.mrb[0].mxu0
  %v3103 = vadd.f32 %v281, %v3102
  %v3104 = vpop.f32.mrb[0].mxu0
  %v3105 = vadd.f32 %v281, %v3104
  %3106 = vdwg.mxu0
  %3107 = vmatprep.subr.mxu0 %v3023
  %3108 = vmatpush1.msra.mxu0 %v3022
  %3109 = vmatprep.subr.mxu0 %v3027
  %3110 = vmatpush1.msra.mxu0 %v3026
  %3111 = vmatprep.subr.mxu0 %v3031
  %3112 = vmatpush1.msra.mxu0 %v3030
  %3113 = vmatprep.subr.mxu0 %v3035
  %3114 = vmatpush1.msra.mxu0 %v3034
  %3115 = vmatprep.subr.mxu0 0.0
  %3116 = vmatpush1.msra.mxu0 0.0
  %3117 = vmatprep.subr.mxu0 0.0
  %3118 = vmatpush1.msra.mxu0 0.0
  %3119 = vmatprep.subr.mxu0 0.0
  %3120 = vmatpush1.msra.mxu0 0.0
  %3121 = vmatprep.subr.mxu0 0.0
  %3122 = vmatpush1.msra.mxu0 0.0
  %3123 = vmatprep.subr.mxu0 0.0
  %3124 = vmatpush1.msra.mxu0 0.0
  %3125 = vmatprep.subr.mxu0 0.0
  %3126 = vmatpush1.msra.mxu0 0.0
  %3127 = vmatprep.subr.mxu0 0.0
  %3128 = vmatpush1.msra.mxu0 0.0
  %3129 = vmatprep.subr.mxu0 0.0
  %3130 = vmatpush1.msra.mxu0 0.0
  %3131 = vmatprep.subr.mxu0 0.0
  %3132 = vmatpush1.msra.mxu0 0.0
  %3133 = vmatprep.subr.mxu0 0.0
  %3134 = vmatpush1.msra.mxu0 0.0
  %3135 = vmatprep.subr.mxu0 0.0
  %3136 = vmatpush1.msra.mxu0 0.0
  %3137 = vmatprep.subr.mxu0 0.0
  %3138 = vmatpush1.msra.mxu0 0.0
  %3139 = vmatprep.subr.mxu0 0.0
  %3140 = vmatpush1.msra.mxu0 0.0
  %3141 = vmatprep.subr.mxu0 0.0
  %3142 = vmatpush1.msra.mxu0 0.0
  %3143 = vmatprep.subr.mxu0 0.0
  %3144 = vmatpush1.msra.mxu0 0.0
  %3145 = vmatprep.subr.mxu0 0.0
  %3146 = vmatpush1.msra.mxu0 0.0
  %3147 = vmatprep.subr.mxu0 0.0
  %3148 = vmatpush1.msra.mxu0 0.0
  %3149 = vmatprep.subr.mxu0 0.0
  %3150 = vmatpush1.msra.mxu0 0.0
  %3151 = vmatprep.subr.mxu0 0.0
  %3152 = vmatpush1.msra.mxu0 0.0
  %3153 = vmatprep.subr.mxu0 0.0
  %3154 = vmatpush1.msra.mxu0 0.0
  %3155 = vmatprep.subr.mxu0 0.0
  %3156 = vmatpush1.msra.mxu0 0.0
  %3157 = vmatprep.subr.mxu0 0.0
  %3158 = vmatpush1.msra.mxu0 0.0
  %3159 = vmatprep.subr.mxu0 0.0
  %3160 = vmatpush1.msra.mxu0 0.0
  %3161 = vmatprep.subr.mxu0 0.0
  %3162 = vmatpush1.msra.mxu0 0.0
  %3163 = vmatprep.subr.mxu0 0.0
  %3164 = vmatpush1.msra.mxu0 0.0
  %3165 = vmatprep.subr.mxu0 0.0
  %3166 = vmatpush1.msra.mxu0 0.0
  %3167 = vmatprep.subr.mxu0 0.0
  %3168 = vmatpush1.msra.mxu0 0.0
  %3169 = vmatprep.subr.mxu0 0.0
  %3170 = vmatpush1.msra.mxu0 0.0
  %3171 = vmatprep.mubr.f32.mxu0 0.0
  %3172 = vmatmul.mubr.f32.gmra.mrb[0].mxu0 %v285
  %v3173 = vpop.f32.mrb[0].mxu0
  %v3174 = vadd.f32 %v281, %v3173
  %v3175 = vpop.f32.mrb[0].mxu0
  %v3176 = vadd.f32 %v281, %v3175
  %3177 = vdwg.mxu0
  %s3178 = scalar_lea.vmem %s5, 112
  %v3179 = vld [vmem:[%s3178] sm:$0xff]
  %v3180 = vld [vmem:[%s3178 + $0x8] sm:$0xff]
  %v3181 = vmul.f32 %v3179, %v2803
  %v3182 = vmul.f32 %v3180, %v2804
  %s3183 = scalar_lea.vmem %s6, 112
  %v3184 = vld [vmem:[%s3183] sm:$0xff]
  %v3185 = vld [vmem:[%s3183 + $0x8] sm:$0xff]
  %v3190 = vcombine.low %v3103, %v3105
  %v3191 = vcombine.low %v3174, %v3176
  %v3194 = vmul.f32 %v3184, %v3190
  %v3195 = vmul.f32 %v3185, %v3191
  %v3196 = vadd.f32 %v3181, %v3194
  %v3197 = vadd.f32 %v3182, %v3195
  %s3198 = scalar_lea.vmem %s2, 256
  %v3199 = vld [vmem:[%s3198] sm:$0xff]
  %v3200 = vld [vmem:[%s3198 + $0x8] sm:$0xff]
  %v3201 = vld [vmem:[%s3198 + $0x10] sm:$0xff]
  %v3202 = vld [vmem:[%s3198 + $0x18] sm:$0xff]
  %3204 = vset.pattern.permute.xlu0 0
  %3205 = vperm.xlu0 %3204, %v3199
  %v3206 = vpop.permute.xlu0 %3205
  %3209 = vset.pattern.permute.xlu0 0
  %3210 = vperm.xlu0 %3209, %v3200
  %v3211 = vpop.permute.xlu0 %3210
  %3214 = vset.pattern.permute.xlu0 0
  %3215 = vperm.xlu0 %3214, %v3201
  %v3216 = vpop.permute.xlu0 %3215
  %3219 = vset.pattern.permute.xlu0 0
  %3220 = vperm.xlu0 %3219, %v3202
  %v3221 = vpop.permute.xlu0 %3220
  %v3225 = vcombine.high %v3196, %v3196
  %v3226 = vcombine.high %v3197, %v3197
  %v3227 = vsel %vm75, %v3196, 0
  %v3229 = vsel %vm75, %v3225, 0
  %v3231 = vsel %vm75, %v3197, 0
  %v3233 = vsel %vm75, %v3226, 0
  %3235 = vmatprep.subr.mxu0 %v3229
  %3236 = vmatpush1.msra.mxu0 %v3227
  %3237 = vmatprep.subr.mxu0 0.0
  %3238 = vmatpush1.msra.mxu0 0.0
  %3239 = vmatprep.subr.mxu0 0.0
  %3240 = vmatpush1.msra.mxu0 0.0
  %3241 = vmatprep.subr.mxu0 0.0
  %3242 = vmatpush1.msra.mxu0 0.0
  %3243 = vmatprep.subr.mxu0 0.0
  %3244 = vmatpush1.msra.mxu0 0.0
  %3245 = vmatprep.subr.mxu0 0.0
  %3246 = vmatpush1.msra.mxu0 0.0
  %3247 = vmatprep.subr.mxu0 0.0
  %3248 = vmatpush1.msra.mxu0 0.0
  %3249 = vmatprep.subr.mxu0 0.0
  %3250 = vmatpush1.msra.mxu0 0.0
  %3251 = vmatprep.subr.mxu0 0.0
  %3252 = vmatpush1.msra.mxu0 0.0
  %3253 = vmatprep.subr.mxu0 0.0
  %3254 = vmatpush1.msra.mxu0 0.0
  %3255 = vmatprep.subr.mxu0 0.0
  %3256 = vmatpush1.msra.mxu0 0.0
  %3257 = vmatprep.subr.mxu0 0.0
  %3258 = vmatpush1.msra.mxu0 0.0
  %3259 = vmatprep.subr.mxu0 0.0
  %3260 = vmatpush1.msra.mxu0 0.0
  %3261 = vmatprep.subr.mxu0 0.0
  %3262 = vmatpush1.msra.mxu0 0.0
  %3263 = vmatprep.subr.mxu0 0.0
  %3264 = vmatpush1.msra.mxu0 0.0
  %3265 = vmatprep.subr.mxu0 0.0
  %3266 = vmatpush1.msra.mxu0 0.0
  %3267 = vmatprep.subr.mxu0 0.0
  %3268 = vmatpush1.msra.mxu0 0.0
  %3269 = vmatprep.subr.mxu0 0.0
  %3270 = vmatpush1.msra.mxu0 0.0
  %3271 = vmatprep.subr.mxu0 0.0
  %3272 = vmatpush1.msra.mxu0 0.0
  %3273 = vmatprep.subr.mxu0 0.0
  %3274 = vmatpush1.msra.mxu0 0.0
  %3275 = vmatprep.subr.mxu0 0.0
  %3276 = vmatpush1.msra.mxu0 0.0
  %3277 = vmatprep.subr.mxu0 0.0
  %3278 = vmatpush1.msra.mxu0 0.0
  %3279 = vmatprep.subr.mxu0 0.0
  %3280 = vmatpush1.msra.mxu0 0.0
  %3281 = vmatprep.subr.mxu0 0.0
  %3282 = vmatpush1.msra.mxu0 0.0
  %3283 = vmatprep.subr.mxu0 0.0
  %3284 = vmatpush1.msra.mxu0 0.0
  %3285 = vmatprep.subr.mxu0 0.0
  %3286 = vmatpush1.msra.mxu0 0.0
  %3287 = vmatprep.subr.mxu0 0.0
  %3288 = vmatpush1.msra.mxu0 0.0
  %3289 = vmatprep.subr.mxu0 0.0
  %3290 = vmatpush1.msra.mxu0 0.0
  %3291 = vmatprep.subr.mxu0 0.0
  %3292 = vmatpush1.msra.mxu0 0.0
  %3293 = vmatprep.subr.mxu0 0.0
  %3294 = vmatpush1.msra.mxu0 0.0
  %3295 = vmatprep.subr.mxu0 0.0
  %3296 = vmatpush1.msra.mxu0 0.0
  %3297 = vmatprep.subr.mxu0 0.0
  %3298 = vmatpush1.msra.mxu0 0.0
  %3299 = vmatprep.mubr.f32.mxu0 0.0
  %3300 = vmatmul.mubr.f32.gmra.mrb[0].mxu0 %v64
  %v3301 = vpop.f32.mrb[0].mxu0
  %v3302 = vadd.f32 %v3206, %v3301
  %v3303 = vpop.f32.mrb[0].mxu0
  %v3304 = vadd.f32 %v3206, %v3303
  %3305 = vmatprep.mubr.f32.mxu0 0.0
  %3306 = vmatmul.mubr.f32.gmra.mrb[0].mxu0 %v67
  %v3307 = vpop.f32.mrb[0].mxu0
  %v3308 = vadd.f32 %v3211, %v3307
  %v3309 = vpop.f32.mrb[0].mxu0
  %v3310 = vadd.f32 %v3211, %v3309
  %3311 = vmatprep.mubr.f32.mxu0 0.0
  %3312 = vmatmul.mubr.f32.gmra.mrb[0].mxu0 %v70
  %v3313 = vpop.f32.mrb[0].mxu0
  %v3314 = vadd.f32 %v3216, %v3313
  %v3315 = vpop.f32.mrb[0].mxu0
  %v3316 = vadd.f32 %v3216, %v3315
  %3317 = vmatprep.mubr.f32.mxu0 0.0
  %3318 = vmatmul.mubr.f32.gmra.mrb[0].mxu0 %v73
  %v3319 = vpop.f32.mrb[0].mxu0
  %v3320 = vadd.f32 %v3221, %v3319
  %v3321 = vpop.f32.mrb[0].mxu0
  %v3322 = vadd.f32 %v3221, %v3321
  %3323 = vdwg.mxu0
  %3324 = vmatprep.subr.mxu0 %v3233
  %3325 = vmatpush1.msra.mxu0 %v3231
  %3326 = vmatprep.subr.mxu0 0.0
  %3327 = vmatpush1.msra.mxu0 0.0
  %3328 = vmatprep.subr.mxu0 0.0
  %3329 = vmatpush1.msra.mxu0 0.0
  %3330 = vmatprep.subr.mxu0 0.0
  %3331 = vmatpush1.msra.mxu0 0.0
  %3332 = vmatprep.subr.mxu0 0.0
  %3333 = vmatpush1.msra.mxu0 0.0
  %3334 = vmatprep.subr.mxu0 0.0
  %3335 = vmatpush1.msra.mxu0 0.0
  %3336 = vmatprep.subr.mxu0 0.0
  %3337 = vmatpush1.msra.mxu0 0.0
  %3338 = vmatprep.subr.mxu0 0.0
  %3339 = vmatpush1.msra.mxu0 0.0
  %3340 = vmatprep.subr.mxu0 0.0
  %3341 = vmatpush1.msra.mxu0 0.0
  %3342 = vmatprep.subr.mxu0 0.0
  %3343 = vmatpush1.msra.mxu0 0.0
  %3344 = vmatprep.subr.mxu0 0.0
  %3345 = vmatpush1.msra.mxu0 0.0
  %3346 = vmatprep.subr.mxu0 0.0
  %3347 = vmatpush1.msra.mxu0 0.0
  %3348 = vmatprep.subr.mxu0 0.0
  %3349 = vmatpush1.msra.mxu0 0.0
  %3350 = vmatprep.subr.mxu0 0.0
  %3351 = vmatpush1.msra.mxu0 0.0
  %3352 = vmatprep.subr.mxu0 0.0
  %3353 = vmatpush1.msra.mxu0 0.0
  %3354 = vmatprep.subr.mxu0 0.0
  %3355 = vmatpush1.msra.mxu0 0.0
  %3356 = vmatprep.subr.mxu0 0.0
  %3357 = vmatpush1.msra.mxu0 0.0
  %3358 = vmatprep.subr.mxu0 0.0
  %3359 = vmatpush1.msra.mxu0 0.0
  %3360 = vmatprep.subr.mxu0 0.0
  %3361 = vmatpush1.msra.mxu0 0.0
  %3362 = vmatprep.subr.mxu0 0.0
  %3363 = vmatpush1.msra.mxu0 0.0
  %3364 = vmatprep.subr.mxu0 0.0
  %3365 = vmatpush1.msra.mxu0 0.0
  %3366 = vmatprep.subr.mxu0 0.0
  %3367 = vmatpush1.msra.mxu0 0.0
  %3368 = vmatprep.subr.mxu0 0.0
  %3369 = vmatpush1.msra.mxu0 0.0
  %3370 = vmatprep.subr.mxu0 0.0
  %3371 = vmatpush1.msra.mxu0 0.0
  %3372 = vmatprep.subr.mxu0 0.0
  %3373 = vmatpush1.msra.mxu0 0.0
  %3374 = vmatprep.subr.mxu0 0.0
  %3375 = vmatpush1.msra.mxu0 0.0
  %3376 = vmatprep.subr.mxu0 0.0
  %3377 = vmatpush1.msra.mxu0 0.0
  %3378 = vmatprep.subr.mxu0 0.0
  %3379 = vmatpush1.msra.mxu0 0.0
  %3380 = vmatprep.subr.mxu0 0.0
  %3381 = vmatpush1.msra.mxu0 0.0
  %3382 = vmatprep.subr.mxu0 0.0
  %3383 = vmatpush1.msra.mxu0 0.0
  %3384 = vmatprep.subr.mxu0 0.0
  %3385 = vmatpush1.msra.mxu0 0.0
  %3386 = vmatprep.subr.mxu0 0.0
  %3387 = vmatpush1.msra.mxu0 0.0
  %3388 = vmatprep.mubr.f32.mxu0 0.0
  %3389 = vmatmul.mubr.f32.gmra.mrb[0].mxu0 %v64
  %v3390 = vpop.f32.mrb[0].mxu0
  %v3391 = vadd.f32 %v3206, %v3390
  %v3392 = vpop.f32.mrb[0].mxu0
  %v3393 = vadd.f32 %v3206, %v3392
  %3394 = vmatprep.mubr.f32.mxu0 0.0
  %3395 = vmatmul.mubr.f32.gmra.mrb[0].mxu0 %v67
  %v3396 = vpop.f32.mrb[0].mxu0
  %v3397 = vadd.f32 %v3211, %v3396
  %v3398 = vpop.f32.mrb[0].mxu0
  %v3399 = vadd.f32 %v3211, %v3398
  %3400 = vmatprep.mubr.f32.mxu0 0.0
  %3401 = vmatmul.mubr.f32.gmra.mrb[0].mxu0 %v70
  %v3402 = vpop.f32.mrb[0].mxu0
  %v3403 = vadd.f32 %v3216, %v3402
  %v3404 = vpop.f32.mrb[0].mxu0
  %v3405 = vadd.f32 %v3216, %v3404
  %3406 = vmatprep.mubr.f32.mxu0 0.0
  %3407 = vmatmul.mubr.f32.gmra.mrb[0].mxu0 %v73
  %v3408 = vpop.f32.mrb[0].mxu0
  %v3409 = vadd.f32 %v3221, %v3408
  %v3410 = vpop.f32.mrb[0].mxu0
  %v3411 = vadd.f32 %v3221, %v3410
  %3412 = vdwg.mxu0
  %v3413 = vtanh.pop %v3302
  %v3414 = vtanh.pop %v3304
  %v3415 = vtanh.pop %v3391
  %v3416 = vtanh.pop %v3393
  %v3417 = vtanh.pop %v3308
  %v3418 = vtanh.pop %v3310
  %v3419 = vtanh.pop %v3397
  %v3420 = vtanh.pop %v3399
  %v3421 = vtanh.pop %v3314
  %v3422 = vtanh.pop %v3316
  %v3423 = vtanh.pop %v3403
  %v3424 = vtanh.pop %v3405
  %v3425 = vtanh.pop %v3320
  %v3426 = vtanh.pop %v3322
  %v3427 = vtanh.pop %v3409
  %v3428 = vtanh.pop %v3411
  %3429 = vmatprep.subr.mxu0 %v3414
  %3430 = vmatpush1.msra.mxu0 %v3413
  %3431 = vmatprep.subr.mxu0 %v3418
  %3432 = vmatpush1.msra.mxu0 %v3417
  %3433 = vmatprep.subr.mxu0 %v3422
  %3434 = vmatpush1.msra.mxu0 %v3421
  %3435 = vmatprep.subr.mxu0 %v3426
  %3436 = vmatpush1.msra.mxu0 %v3425
  %3437 = vmatprep.subr.mxu0 0.0
  %3438 = vmatpush1.msra.mxu0 0.0
  %3439 = vmatprep.subr.mxu0 0.0
  %3440 = vmatpush1.msra.mxu0 0.0
  %3441 = vmatprep.subr.mxu0 0.0
  %3442 = vmatpush1.msra.mxu0 0.0
  %3443 = vmatprep.subr.mxu0 0.0
  %3444 = vmatpush1.msra.mxu0 0.0
  %3445 = vmatprep.subr.mxu0 0.0
  %3446 = vmatpush1.msra.mxu0 0.0
  %3447 = vmatprep.subr.mxu0 0.0
  %3448 = vmatpush1.msra.mxu0 0.0
  %3449 = vmatprep.subr.mxu0 0.0
  %3450 = vmatpush1.msra.mxu0 0.0
  %3451 = vmatprep.subr.mxu0 0.0
  %3452 = vmatpush1.msra.mxu0 0.0
  %3453 = vmatprep.subr.mxu0 0.0
  %3454 = vmatpush1.msra.mxu0 0.0
  %3455 = vmatprep.subr.mxu0 0.0
  %3456 = vmatpush1.msra.mxu0 0.0
  %3457 = vmatprep.subr.mxu0 0.0
  %3458 = vmatpush1.msra.mxu0 0.0
  %3459 = vmatprep.subr.mxu0 0.0
  %3460 = vmatpush1.msra.mxu0 0.0
  %3461 = vmatprep.subr.mxu0 0.0
  %3462 = vmatpush1.msra.mxu0 0.0
  %3463 = vmatprep.subr.mxu0 0.0
  %3464 = vmatpush1.msra.mxu0 0.0
  %3465 = vmatprep.subr.mxu0 0.0
  %3466 = vmatpush1.msra.mxu0 0.0
  %3467 = vmatprep.subr.mxu0 0.0
  %3468 = vmatpush1.msra.mxu0 0.0
  %3469 = vmatprep.subr.mxu0 0.0
  %3470 = vmatpush1.msra.mxu0 0.0
  %3471 = vmatprep.subr.mxu0 0.0
  %3472 = vmatpush1.msra.mxu0 0.0
  %3473 = vmatprep.subr.mxu0 0.0
  %3474 = vmatpush1.msra.mxu0 0.0
  %3475 = vmatprep.subr.mxu0 0.0
  %3476 = vmatpush1.msra.mxu0 0.0
  %3477 = vmatprep.subr.mxu0 0.0
  %3478 = vmatpush1.msra.mxu0 0.0
  %3479 = vmatprep.subr.mxu0 0.0
  %3480 = vmatpush1.msra.mxu0 0.0
  %3481 = vmatprep.subr.mxu0 0.0
  %3482 = vmatpush1.msra.mxu0 0.0
  %3483 = vmatprep.subr.mxu0 0.0
  %3484 = vmatpush1.msra.mxu0 0.0
  %3485 = vmatprep.subr.mxu0 0.0
  %3486 = vmatpush1.msra.mxu0 0.0
  %3487 = vmatprep.subr.mxu0 0.0
  %3488 = vmatpush1.msra.mxu0 0.0
  %3489 = vmatprep.subr.mxu0 0.0
  %3490 = vmatpush1.msra.mxu0 0.0
  %3491 = vmatprep.subr.mxu0 0.0
  %3492 = vmatpush1.msra.mxu0 0.0
  %3493 = vmatprep.mubr.f32.mxu0 0.0
  %3494 = vmatmul.mubr.f32.gmra.mrb[0].mxu0 %v285
  %v3495 = vpop.f32.mrb[0].mxu0
  %v3496 = vadd.f32 %v281, %v3495
  %v3497 = vpop.f32.mrb[0].mxu0
  %v3498 = vadd.f32 %v281, %v3497
  %3499 = vdwg.mxu0
  %3500 = vmatprep.subr.mxu0 %v3416
  %3501 = vmatpush1.msra.mxu0 %v3415
  %3502 = vmatprep.subr.mxu0 %v3420
  %3503 = vmatpush1.msra.mxu0 %v3419
  %3504 = vmatprep.subr.mxu0 %v3424
  %3505 = vmatpush1.msra.mxu0 %v3423
  %3506 = vmatprep.subr.mxu0 %v3428
  %3507 = vmatpush1.msra.mxu0 %v3427
  %3508 = vmatprep.subr.mxu0 0.0
  %3509 = vmatpush1.msra.mxu0 0.0
  %3510 = vmatprep.subr.mxu0 0.0
  %3511 = vmatpush1.msra.mxu0 0.0
  %3512 = vmatprep.subr.mxu0 0.0
  %3513 = vmatpush1.msra.mxu0 0.0
  %3514 = vmatprep.subr.mxu0 0.0
  %3515 = vmatpush1.msra.mxu0 0.0
  %3516 = vmatprep.subr.mxu0 0.0
  %3517 = vmatpush1.msra.mxu0 0.0
  %3518 = vmatprep.subr.mxu0 0.0
  %3519 = vmatpush1.msra.mxu0 0.0
  %3520 = vmatprep.subr.mxu0 0.0
  %3521 = vmatpush1.msra.mxu0 0.0
  %3522 = vmatprep.subr.mxu0 0.0
  %3523 = vmatpush1.msra.mxu0 0.0
  %3524 = vmatprep.subr.mxu0 0.0
  %3525 = vmatpush1.msra.mxu0 0.0
  %3526 = vmatprep.subr.mxu0 0.0
  %3527 = vmatpush1.msra.mxu0 0.0
  %3528 = vmatprep.subr.mxu0 0.0
  %3529 = vmatpush1.msra.mxu0 0.0
  %3530 = vmatprep.subr.mxu0 0.0
  %3531 = vmatpush1.msra.mxu0 0.0
  %3532 = vmatprep.subr.mxu0 0.0
  %3533 = vmatpush1.msra.mxu0 0.0
  %3534 = vmatprep.subr.mxu0 0.0
  %3535 = vmatpush1.msra.mxu0 0.0
  %3536 = vmatprep.subr.mxu0 0.0
  %3537 = vmatpush1.msra.mxu0 0.0
  %3538 = vmatprep.subr.mxu0 0.0
  %3539 = vmatpush1.msra.mxu0 0.0
  %3540 = vmatprep.subr.mxu0 0.0
  %3541 = vmatpush1.msra.mxu0 0.0
  %3542 = vmatprep.subr.mxu0 0.0
  %3543 = vmatpush1.msra.mxu0 0.0
  %3544 = vmatprep.subr.mxu0 0.0
  %3545 = vmatpush1.msra.mxu0 0.0
  %3546 = vmatprep.subr.mxu0 0.0
  %3547 = vmatpush1.msra.mxu0 0.0
  %3548 = vmatprep.subr.mxu0 0.0
  %3549 = vmatpush1.msra.mxu0 0.0
  %3550 = vmatprep.subr.mxu0 0.0
  %3551 = vmatpush1.msra.mxu0 0.0
  %3552 = vmatprep.subr.mxu0 0.0
  %3553 = vmatpush1.msra.mxu0 0.0
  %3554 = vmatprep.subr.mxu0 0.0
  %3555 = vmatpush1.msra.mxu0 0.0
  %3556 = vmatprep.subr.mxu0 0.0
  %3557 = vmatpush1.msra.mxu0 0.0
  %3558 = vmatprep.subr.mxu0 0.0
  %3559 = vmatpush1.msra.mxu0 0.0
  %3560 = vmatprep.subr.mxu0 0.0
  %3561 = vmatpush1.msra.mxu0 0.0
  %3562 = vmatprep.subr.mxu0 0.0
  %3563 = vmatpush1.msra.mxu0 0.0
  %3564 = vmatprep.mubr.f32.mxu0 0.0
  %3565 = vmatmul.mubr.f32.gmra.mrb[0].mxu0 %v285
  %v3566 = vpop.f32.mrb[0].mxu0
  %v3567 = vadd.f32 %v281, %v3566
  %v3568 = vpop.f32.mrb[0].mxu0
  %v3569 = vadd.f32 %v281, %v3568
  %3570 = vdwg.mxu0
  %s3571 = scalar_lea.vmem %s5, 128
  %v3572 = vld [vmem:[%s3571] sm:$0xff]
  %v3573 = vld [vmem:[%s3571 + $0x8] sm:$0xff]
  %v3574 = vmul.f32 %v3572, %v3196
  %v3575 = vmul.f32 %v3573, %v3197
  %s3576 = scalar_lea.vmem %s6, 128
  %v3577 = vld [vmem:[%s3576] sm:$0xff]
  %v3578 = vld [vmem:[%s3576 + $0x8] sm:$0xff]
  %v3583 = vcombine.low %v3496, %v3498
  %v3584 = vcombine.low %v3567, %v3569
  %v3587 = vmul.f32 %v3577, %v3583
  %v3588 = vmul.f32 %v3578, %v3584
  %v3589 = vadd.f32 %v3574, %v3587
  %v3590 = vadd.f32 %v3575, %v3588
  %s3591 = scalar_lea.vmem %s2, 288
  %v3592 = vld [vmem:[%s3591] sm:$0xff]
  %v3593 = vld [vmem:[%s3591 + $0x8] sm:$0xff]
  %v3594 = vld [vmem:[%s3591 + $0x10] sm:$0xff]
  %v3595 = vld [vmem:[%s3591 + $0x18] sm:$0xff]
  %3597 = vset.pattern.permute.xlu0 0
  %3598 = vperm.xlu0 %3597, %v3592
  %v3599 = vpop.permute.xlu0 %3598
  %3602 = vset.pattern.permute.xlu0 0
  %3603 = vperm.xlu0 %3602, %v3593
  %v3604 = vpop.permute.xlu0 %3603
  %3607 = vset.pattern.permute.xlu0 0
  %3608 = vperm.xlu0 %3607, %v3594
  %v3609 = vpop.permute.xlu0 %3608
  %3612 = vset.pattern.permute.xlu0 0
  %3613 = vperm.xlu0 %3612, %v3595
  %v3614 = vpop.permute.xlu0 %3613
  %v3618 = vcombine.high %v3589, %v3589
  %v3619 = vcombine.high %v3590, %v3590
  %v3620 = vsel %vm75, %v3589, 0
  %v3622 = vsel %vm75, %v3618, 0
  %v3624 = vsel %vm75, %v3590, 0
  %v3626 = vsel %vm75, %v3619, 0
  %3628 = vmatprep.subr.mxu0 %v3622
  %3629 = vmatpush1.msra.mxu0 %v3620
  %3630 = vmatprep.subr.mxu0 0.0
  %3631 = vmatpush1.msra.mxu0 0.0
  %3632 = vmatprep.subr.mxu0 0.0
  %3633 = vmatpush1.msra.mxu0 0.0
  %3634 = vmatprep.subr.mxu0 0.0
  %3635 = vmatpush1.msra.mxu0 0.0
  %3636 = vmatprep.subr.mxu0 0.0
  %3637 = vmatpush1.msra.mxu0 0.0
  %3638 = vmatprep.subr.mxu0 0.0
  %3639 = vmatpush1.msra.mxu0 0.0
  %3640 = vmatprep.subr.mxu0 0.0
  %3641 = vmatpush1.msra.mxu0 0.0
  %3642 = vmatprep.subr.mxu0 0.0
  %3643 = vmatpush1.msra.mxu0 0.0
  %3644 = vmatprep.subr.mxu0 0.0
  %3645 = vmatpush1.msra.mxu0 0.0
  %3646 = vmatprep.subr.mxu0 0.0
  %3647 = vmatpush1.msra.mxu0 0.0
  %3648 = vmatprep.subr.mxu0 0.0
  %3649 = vmatpush1.msra.mxu0 0.0
  %3650 = vmatprep.subr.mxu0 0.0
  %3651 = vmatpush1.msra.mxu0 0.0
  %3652 = vmatprep.subr.mxu0 0.0
  %3653 = vmatpush1.msra.mxu0 0.0
  %3654 = vmatprep.subr.mxu0 0.0
  %3655 = vmatpush1.msra.mxu0 0.0
  %3656 = vmatprep.subr.mxu0 0.0
  %3657 = vmatpush1.msra.mxu0 0.0
  %3658 = vmatprep.subr.mxu0 0.0
  %3659 = vmatpush1.msra.mxu0 0.0
  %3660 = vmatprep.subr.mxu0 0.0
  %3661 = vmatpush1.msra.mxu0 0.0
  %3662 = vmatprep.subr.mxu0 0.0
  %3663 = vmatpush1.msra.mxu0 0.0
  %3664 = vmatprep.subr.mxu0 0.0
  %3665 = vmatpush1.msra.mxu0 0.0
  %3666 = vmatprep.subr.mxu0 0.0
  %3667 = vmatpush1.msra.mxu0 0.0
  %3668 = vmatprep.subr.mxu0 0.0
  %3669 = vmatpush1.msra.mxu0 0.0
  %3670 = vmatprep.subr.mxu0 0.0
  %3671 = vmatpush1.msra.mxu0 0.0
  %3672 = vmatprep.subr.mxu0 0.0
  %3673 = vmatpush1.msra.mxu0 0.0
  %3674 = vmatprep.subr.mxu0 0.0
  %3675 = vmatpush1.msra.mxu0 0.0
  %3676 = vmatprep.subr.mxu0 0.0
  %3677 = vmatpush1.msra.mxu0 0.0
  %3678 = vmatprep.subr.mxu0 0.0
  %3679 = vmatpush1.msra.mxu0 0.0
  %3680 = vmatprep.subr.mxu0 0.0
  %3681 = vmatpush1.msra.mxu0 0.0
  %3682 = vmatprep.subr.mxu0 0.0
  %3683 = vmatpush1.msra.mxu0 0.0
  %3684 = vmatprep.subr.mxu0 0.0
  %3685 = vmatpush1.msra.mxu0 0.0
  %3686 = vmatprep.subr.mxu0 0.0
  %3687 = vmatpush1.msra.mxu0 0.0
  %3688 = vmatprep.subr.mxu0 0.0
  %3689 = vmatpush1.msra.mxu0 0.0
  %3690 = vmatprep.subr.mxu0 0.0
  %3691 = vmatpush1.msra.mxu0 0.0
  %3692 = vmatprep.mubr.f32.mxu0 0.0
  %3693 = vmatmul.mubr.f32.gmra.mrb[0].mxu0 %v64
  %v3694 = vpop.f32.mrb[0].mxu0
  %v3695 = vadd.f32 %v3599, %v3694
  %v3696 = vpop.f32.mrb[0].mxu0
  %v3697 = vadd.f32 %v3599, %v3696
  %3698 = vmatprep.mubr.f32.mxu0 0.0
  %3699 = vmatmul.mubr.f32.gmra.mrb[0].mxu0 %v67
  %v3700 = vpop.f32.mrb[0].mxu0
  %v3701 = vadd.f32 %v3604, %v3700
  %v3702 = vpop.f32.mrb[0].mxu0
  %v3703 = vadd.f32 %v3604, %v3702
  %3704 = vmatprep.mubr.f32.mxu0 0.0
  %3705 = vmatmul.mubr.f32.gmra.mrb[0].mxu0 %v70
  %v3706 = vpop.f32.mrb[0].mxu0
  %v3707 = vadd.f32 %v3609, %v3706
  %v3708 = vpop.f32.mrb[0].mxu0
  %v3709 = vadd.f32 %v3609, %v3708
  %3710 = vmatprep.mubr.f32.mxu0 0.0
  %3711 = vmatmul.mubr.f32.gmra.mrb[0].mxu0 %v73
  %v3712 = vpop.f32.mrb[0].mxu0
  %v3713 = vadd.f32 %v3614, %v3712
  %v3714 = vpop.f32.mrb[0].mxu0
  %v3715 = vadd.f32 %v3614, %v3714
  %3716 = vdwg.mxu0
  %3717 = vmatprep.subr.mxu0 %v3626
  %3718 = vmatpush1.msra.mxu0 %v3624
  %3719 = vmatprep.subr.mxu0 0.0
  %3720 = vmatpush1.msra.mxu0 0.0
  %3721 = vmatprep.subr.mxu0 0.0
  %3722 = vmatpush1.msra.mxu0 0.0
  %3723 = vmatprep.subr.mxu0 0.0
  %3724 = vmatpush1.msra.mxu0 0.0
  %3725 = vmatprep.subr.mxu0 0.0
  %3726 = vmatpush1.msra.mxu0 0.0
  %3727 = vmatprep.subr.mxu0 0.0
  %3728 = vmatpush1.msra.mxu0 0.0
  %3729 = vmatprep.subr.mxu0 0.0
  %3730 = vmatpush1.msra.mxu0 0.0
  %3731 = vmatprep.subr.mxu0 0.0
  %3732 = vmatpush1.msra.mxu0 0.0
  %3733 = vmatprep.subr.mxu0 0.0
  %3734 = vmatpush1.msra.mxu0 0.0
  %3735 = vmatprep.subr.mxu0 0.0
  %3736 = vmatpush1.msra.mxu0 0.0
  %3737 = vmatprep.subr.mxu0 0.0
  %3738 = vmatpush1.msra.mxu0 0.0
  %3739 = vmatprep.subr.mxu0 0.0
  %3740 = vmatpush1.msra.mxu0 0.0
  %3741 = vmatprep.subr.mxu0 0.0
  %3742 = vmatpush1.msra.mxu0 0.0
  %3743 = vmatprep.subr.mxu0 0.0
  %3744 = vmatpush1.msra.mxu0 0.0
  %3745 = vmatprep.subr.mxu0 0.0
  %3746 = vmatpush1.msra.mxu0 0.0
  %3747 = vmatprep.subr.mxu0 0.0
  %3748 = vmatpush1.msra.mxu0 0.0
  %3749 = vmatprep.subr.mxu0 0.0
  %3750 = vmatpush1.msra.mxu0 0.0
  %3751 = vmatprep.subr.mxu0 0.0
  %3752 = vmatpush1.msra.mxu0 0.0
  %3753 = vmatprep.subr.mxu0 0.0
  %3754 = vmatpush1.msra.mxu0 0.0
  %3755 = vmatprep.subr.mxu0 0.0
  %3756 = vmatpush1.msra.mxu0 0.0
  %3757 = vmatprep.subr.mxu0 0.0
  %3758 = vmatpush1.msra.mxu0 0.0
  %3759 = vmatprep.subr.mxu0 0.0
  %3760 = vmatpush1.msra.mxu0 0.0
  %3761 = vmatprep.subr.mxu0 0.0
  %3762 = vmatpush1.msra.mxu0 0.0
  %3763 = vmatprep.subr.mxu0 0.0
  %3764 = vmatpush1.msra.mxu0 0.0
  %3765 = vmatprep.subr.mxu0 0.0
  %3766 = vmatpush1.msra.mxu0 0.0
  %3767 = vmatprep.subr.mxu0 0.0
  %3768 = vmatpush1.msra.mxu0 0.0
  %3769 = vmatprep.subr.mxu0 0.0
  %3770 = vmatpush1.msra.mxu0 0.0
  %3771 = vmatprep.subr.mxu0 0.0
  %3772 = vmatpush1.msra.mxu0 0.0
  %3773 = vmatprep.subr.mxu0 0.0
  %3774 = vmatpush1.msra.mxu0 0.0
  %3775 = vmatprep.subr.mxu0 0.0
  %3776 = vmatpush1.msra.mxu0 0.0
  %3777 = vmatprep.subr.mxu0 0.0
  %3778 = vmatpush1.msra.mxu0 0.0
  %3779 = vmatprep.subr.mxu0 0.0
  %3780 = vmatpush1.msra.mxu0 0.0
  %3781 = vmatprep.mubr.f32.mxu0 0.0
  %3782 = vmatmul.mubr.f32.gmra.mrb[0].mxu0 %v64
  %v3783 = vpop.f32.mrb[0].mxu0
  %v3784 = vadd.f32 %v3599, %v3783
  %v3785 = vpop.f32.mrb[0].mxu0
  %v3786 = vadd.f32 %v3599, %v3785
  %3787 = vmatprep.mubr.f32.mxu0 0.0
  %3788 = vmatmul.mubr.f32.gmra.mrb[0].mxu0 %v67
  %v3789 = vpop.f32.mrb[0].mxu0
  %v3790 = vadd.f32 %v3604, %v3789
  %v3791 = vpop.f32.mrb[0].mxu0
  %v3792 = vadd.f32 %v3604, %v3791
  %3793 = vmatprep.mubr.f32.mxu0 0.0
  %3794 = vmatmul.mubr.f32.gmra.mrb[0].mxu0 %v70
  %v3795 = vpop.f32.mrb[0].mxu0
  %v3796 = vadd.f32 %v3609, %v3795
  %v3797 = vpop.f32.mrb[0].mxu0
  %v3798 = vadd.f32 %v3609, %v3797
  %3799 = vmatprep.mubr.f32.mxu0 0.0
  %3800 = vmatmul.mubr.f32.gmra.mrb[0].mxu0 %v73
  %v3801 = vpop.f32.mrb[0].mxu0
  %v3802 = vadd.f32 %v3614, %v3801
  %v3803 = vpop.f32.mrb[0].mxu0
  %v3804 = vadd.f32 %v3614, %v3803
  %3805 = vdwg.mxu0
  %v3806 = vtanh.pop %v3695
  %v3807 = vtanh.pop %v3697
  %v3808 = vtanh.pop %v3784
  %v3809 = vtanh.pop %v3786
  %v3810 = vtanh.pop %v3701
  %v3811 = vtanh.pop %v3703
  %v3812 = vtanh.pop %v3790
  %v3813 = vtanh.pop %v3792
  %v3814 = vtanh.pop %v3707
  %v3815 = vtanh.pop %v3709
  %v3816 = vtanh.pop %v3796
  %v3817 = vtanh.pop %v3798
  %v3818 = vtanh.pop %v3713
  %v3819 = vtanh.pop %v3715
  %v3820 = vtanh.pop %v3802
  %v3821 = vtanh.pop %v3804
  %3822 = vmatprep.subr.mxu0 %v3807
  %3823 = vmatpush1.msra.mxu0 %v3806
  %3824 = vmatprep.subr.mxu0 %v3811
  %3825 = vmatpush1.msra.mxu0 %v3810
  %3826 = vmatprep.subr.mxu0 %v3815
  %3827 = vmatpush1.msra.mxu0 %v3814
  %3828 = vmatprep.subr.mxu0 %v3819
  %3829 = vmatpush1.msra.mxu0 %v3818
  %3830 = vmatprep.subr.mxu0 0.0
  %3831 = vmatpush1.msra.mxu0 0.0
  %3832 = vmatprep.subr.mxu0 0.0
  %3833 = vmatpush1.msra.mxu0 0.0
  %3834 = vmatprep.subr.mxu0 0.0
  %3835 = vmatpush1.msra.mxu0 0.0
  %3836 = vmatprep.subr.mxu0 0.0
  %3837 = vmatpush1.msra.mxu0 0.0
  %3838 = vmatprep.subr.mxu0 0.0
  %3839 = vmatpush1.msra.mxu0 0.0
  %3840 = vmatprep.subr.mxu0 0.0
  %3841 = vmatpush1.msra.mxu0 0.0
  %3842 = vmatprep.subr.mxu0 0.0
  %3843 = vmatpush1.msra.mxu0 0.0
  %3844 = vmatprep.subr.mxu0 0.0
  %3845 = vmatpush1.msra.mxu0 0.0
  %3846 = vmatprep.subr.mxu0 0.0
  %3847 = vmatpush1.msra.mxu0 0.0
  %3848 = vmatprep.subr.mxu0 0.0
  %3849 = vmatpush1.msra.mxu0 0.0
  %3850 = vmatprep.subr.mxu0 0.0
  %3851 = vmatpush1.msra.mxu0 0.0
  %3852 = vmatprep.subr.mxu0 0.0
  %3853 = vmatpush1.msra.mxu0 0.0
  %3854 = vmatprep.subr.mxu0 0.0
  %3855 = vmatpush1.msra.mxu0 0.0
  %3856 = vmatprep.subr.mxu0 0.0
  %3857 = vmatpush1.msra.mxu0 0.0
  %3858 = vmatprep.subr.mxu0 0.0
  %3859 = vmatpush1.msra.mxu0 0.0
  %3860 = vmatprep.subr.mxu0 0.0
  %3861 = vmatpush1.msra.mxu0 0.0
  %3862 = vmatprep.subr.mxu0 0.0
  %3863 = vmatpush1.msra.mxu0 0.0
  %3864 = vmatprep.subr.mxu0 0.0
  %3865 = vmatpush1.msra.mxu0 0.0
  %3866 = vmatprep.subr.mxu0 0.0
  %3867 = vmatpush1.msra.mxu0 0.0
  %3868 = vmatprep.subr.mxu0 0.0
  %3869 = vmatpush1.msra.mxu0 0.0
  %3870 = vmatprep.subr.mxu0 0.0
  %3871 = vmatpush1.msra.mxu0 0.0
  %3872 = vmatprep.subr.mxu0 0.0
  %3873 = vmatpush1.msra.mxu0 0.0
  %3874 = vmatprep.subr.mxu0 0.0
  %3875 = vmatpush1.msra.mxu0 0.0
  %3876 = vmatprep.subr.mxu0 0.0
  %3877 = vmatpush1.msra.mxu0 0.0
  %3878 = vmatprep.subr.mxu0 0.0
  %3879 = vmatpush1.msra.mxu0 0.0
  %3880 = vmatprep.subr.mxu0 0.0
  %3881 = vmatpush1.msra.mxu0 0.0
  %3882 = vmatprep.subr.mxu0 0.0
  %3883 = vmatpush1.msra.mxu0 0.0
  %3884 = vmatprep.subr.mxu0 0.0
  %3885 = vmatpush1.msra.mxu0 0.0
  %3886 = vmatprep.mubr.f32.mxu0 0.0
  %3887 = vmatmul.mubr.f32.gmra.mrb[0].mxu0 %v285
  %v3888 = vpop.f32.mrb[0].mxu0
  %v3889 = vadd.f32 %v281, %v3888
  %v3890 = vpop.f32.mrb[0].mxu0
  %v3891 = vadd.f32 %v281, %v3890
  %3892 = vdwg.mxu0
  %3893 = vmatprep.subr.mxu0 %v3809
  %3894 = vmatpush1.msra.mxu0 %v3808
  %3895 = vmatprep.subr.mxu0 %v3813
  %3896 = vmatpush1.msra.mxu0 %v3812
  %3897 = vmatprep.subr.mxu0 %v3817
  %3898 = vmatpush1.msra.mxu0 %v3816
  %3899 = vmatprep.subr.mxu0 %v3821
  %3900 = vmatpush1.msra.mxu0 %v3820
  %3901 = vmatprep.subr.mxu0 0.0
  %3902 = vmatpush1.msra.mxu0 0.0
  %3903 = vmatprep.subr.mxu0 0.0
  %3904 = vmatpush1.msra.mxu0 0.0
  %3905 = vmatprep.subr.mxu0 0.0
  %3906 = vmatpush1.msra.mxu0 0.0
  %3907 = vmatprep.subr.mxu0 0.0
  %3908 = vmatpush1.msra.mxu0 0.0
  %3909 = vmatprep.subr.mxu0 0.0
  %3910 = vmatpush1.msra.mxu0 0.0
  %3911 = vmatprep.subr.mxu0 0.0
  %3912 = vmatpush1.msra.mxu0 0.0
  %3913 = vmatprep.subr.mxu0 0.0
  %3914 = vmatpush1.msra.mxu0 0.0
  %3915 = vmatprep.subr.mxu0 0.0
  %3916 = vmatpush1.msra.mxu0 0.0
  %3917 = vmatprep.subr.mxu0 0.0
  %3918 = vmatpush1.msra.mxu0 0.0
  %3919 = vmatprep.subr.mxu0 0.0
  %3920 = vmatpush1.msra.mxu0 0.0
  %3921 = vmatprep.subr.mxu0 0.0
  %3922 = vmatpush1.msra.mxu0 0.0
  %3923 = vmatprep.subr.mxu0 0.0
  %3924 = vmatpush1.msra.mxu0 0.0
  %3925 = vmatprep.subr.mxu0 0.0
  %3926 = vmatpush1.msra.mxu0 0.0
  %3927 = vmatprep.subr.mxu0 0.0
  %3928 = vmatpush1.msra.mxu0 0.0
  %3929 = vmatprep.subr.mxu0 0.0
  %3930 = vmatpush1.msra.mxu0 0.0
  %3931 = vmatprep.subr.mxu0 0.0
  %3932 = vmatpush1.msra.mxu0 0.0
  %3933 = vmatprep.subr.mxu0 0.0
  %3934 = vmatpush1.msra.mxu0 0.0
  %3935 = vmatprep.subr.mxu0 0.0
  %3936 = vmatpush1.msra.mxu0 0.0
  %3937 = vmatprep.subr.mxu0 0.0
  %3938 = vmatpush1.msra.mxu0 0.0
  %3939 = vmatprep.subr.mxu0 0.0
  %3940 = vmatpush1.msra.mxu0 0.0
  %3941 = vmatprep.subr.mxu0 0.0
  %3942 = vmatpush1.msra.mxu0 0.0
  %3943 = vmatprep.subr.mxu0 0.0
  %3944 = vmatpush1.msra.mxu0 0.0
  %3945 = vmatprep.subr.mxu0 0.0
  %3946 = vmatpush1.msra.mxu0 0.0
  %3947 = vmatprep.subr.mxu0 0.0
  %3948 = vmatpush1.msra.mxu0 0.0
  %3949 = vmatprep.subr.mxu0 0.0
  %3950 = vmatpush1.msra.mxu0 0.0
  %3951 = vmatprep.subr.mxu0 0.0
  %3952 = vmatpush1.msra.mxu0 0.0
  %3953 = vmatprep.subr.mxu0 0.0
  %3954 = vmatpush1.msra.mxu0 0.0
  %3955 = vmatprep.subr.mxu0 0.0
  %3956 = vmatpush1.msra.mxu0 0.0
  %3957 = vmatprep.mubr.f32.mxu0 0.0
  %3958 = vmatmul.mubr.f32.gmra.mrb[0].mxu0 %v285
  %v3959 = vpop.f32.mrb[0].mxu0
  %v3960 = vadd.f32 %v281, %v3959
  %v3961 = vpop.f32.mrb[0].mxu0
  %v3962 = vadd.f32 %v281, %v3961
  %3963 = vdwg.mxu0
  %s3964 = scalar_lea.vmem %s5, 144
  %v3965 = vld [vmem:[%s3964] sm:$0xff]
  %v3966 = vld [vmem:[%s3964 + $0x8] sm:$0xff]
  %v3967 = vmul.f32 %v3965, %v3589
  %v3968 = vmul.f32 %v3966, %v3590
  %s3969 = scalar_lea.vmem %s6, 144
  %v3970 = vld [vmem:[%s3969] sm:$0xff]
  %v3971 = vld [vmem:[%s3969 + $0x8] sm:$0xff]
  %v3976 = vcombine.low %v3889, %v3891
  %v3977 = vcombine.low %v3960, %v3962
  %v3980 = vmul.f32 %v3970, %v3976
  %v3981 = vmul.f32 %v3971, %v3977
  %v3982 = vadd.f32 %v3967, %v3980
  %v3983 = vadd.f32 %v3968, %v3981
  %v3984 = vmax.f32 %v3982, -1.0
  %v3985 = vmax.f32 %v3983, -1.0
  %v3986 = vmin.f32 %v3984, 1.0
  %v3987 = vmin.f32 %v3985, 1.0
  %3988 = vst [vmem:[%s7] sm:$0xff] %v3986
  %3989 = vst [vmem:[%s7 + $0x8] sm:$0xff] %v3987
  // Predicated region
  $region30: #{structure_ddim_sample.1} parent=0 // pred_check
    _
  $region31: #{structure_ddim_sample.1} parent=0 // pred_check_branch
    %3991 = sbr.rel (0) target = $region33
  $region32: #{structure_ddim_sample.1} parent=0 // pred_region
    _
  $region33: #{structure_ddim_sample.1} parent=0 // pred_fallthru
    _
  // Predicated region
  $region34: #{structure_ddim_sample.1} parent=0 // pred_check
    _
  $region35: #{structure_ddim_sample.1} parent=0 // pred_check_branch
    %3993 = sbr.rel (0) target = $region37
  $region36: #{structure_ddim_sample.1} parent=0 // pred_region
    _
  $region37: #{structure_ddim_sample.1} parent=0 // pred_fallthru
    _

</llo_original>
